<compile_context>
chip_gen: v7x
topology: tpu7x:2x2x1
jax: 0.10.0
libtpu: 0.0.40
codegen_flags: <defaults>
</compile_context>

<pallas_src>
import jax
import jax.numpy as jnp
from jax.experimental import pallas as pl
from jax.experimental.pallas import tpu as pltpu


# ---------------------------------------------------------------------------
# Fused kernel: conv1 (K-streamed) -> conv2 -> BN -> conv3 -> head
# ---------------------------------------------------------------------------
def _make_fused_kernel(B, OH1, OW1, OH2, OW2, K2, C, M1):
    S2 = 2  # conv2 / conv3 stride

    def kernel(a1_ref, w1_ref, b1_ref, w2_ref, b2_ref, bns_ref, bnb_ref,
               w3_ref, b3_ref, y_ref, we_ref, be_ref, wf1_ref, bf1_ref,
               wf2_ref, bf2_ref, o_ref, acc1_ref, c2_ref):
        k = pl.program_id(0)

        @pl.when(k == 0)
        def _():
            acc1_ref[...] = jnp.zeros_like(acc1_ref)

        # ---- conv1: accumulate one (M1, TK) x (TK, C) chunk per grid step ----
        acc1_ref[...] += jnp.dot(a1_ref[...], w1_ref[...],
                                 preferred_element_type=jnp.float32)

        @pl.when(k == pl.num_programs(0) - 1)
        def _():
            # conv1 epilogue: bias + ReLU; rows ordered (h1, w1, b).
            c1f = jnp.maximum(acc1_ref[...] + b1_ref[...], 0.0)   # (M1, C) f32

            # ---- conv2 as 16 roll-shifted full matmuls (no im2col copies) ----
            # For tap (di, dj) the operand row (h, w, b) must hold
            # c1[(h + di, w + dj, b)]; rolling the whole map by -(di*OW1+dj)*B
            # rows provides exactly that for every row we later consume (the
            # stride-2 output rows never wrap); garbage rows are ignored.
            acc2 = jnp.zeros((M1, C), jnp.float32)
            for di in range(K2):
                for dj in range(K2):
                    off = (di * OW1 + dj) * B
                    src = c1f if off == 0 else pltpu.roll(c1f, M1 - off, axis=0)
                    tap = di * K2 + dj
                    acc2 = acc2 + jnp.dot(
                        src.astype(jnp.bfloat16),
                        w2_ref[tap * C:(tap + 1) * C, :],
                        preferred_element_type=jnp.float32)
            c2 = jnp.maximum(acc2 + b2_ref[...], 0.0)
            c2 = c2 * bns_ref[...] + bnb_ref[...]        # eval-mode BN affine
            c2_ref[...] = c2.astype(jnp.bfloat16)

            # ---- conv3: 3x3 kernel covers the whole 3x3 map -> 9 accumulated
            #      tiny matmuls on the stride-2 rows (no a3 scratch/gather) ----
            out3 = jnp.zeros((B, C), jnp.float32)
            for t in range(OH2 * OW2):
                i2, j2 = t // OW2, t % OW2
                r = (S2 * i2 * OW1 + S2 * j2) * B
                out3 = out3 + jnp.dot(
                    c2_ref[r:r + B, :], w3_ref[t * C:(t + 1) * C, :],
                    preferred_element_type=jnp.float32)
            xflat = jnp.maximum(out3 + b3_ref[...], 0.0)          # (B, 64)

            # ---- head: sigmoid(encoder(y)); relu(fc1(x + enc)); fc2 ----
            ye = jax.nn.sigmoid(
                jnp.dot(y_ref[...], we_ref[...],
                        preferred_element_type=jnp.float32) + be_ref[...])
            h = xflat + ye
            h = jnp.maximum(
                jnp.dot(h, wf1_ref[...], preferred_element_type=jnp.float32)
                + bf1_ref[...], 0.0)
            o_ref[...] = (jnp.dot(h, wf2_ref[...],
                                  preferred_element_type=jnp.float32)
                          + bf2_ref[...])

    return kernel


# ---------------------------------------------------------------------------
# Parameters (deterministic, synthetic), pre-permuted for channel-last matmuls
# ---------------------------------------------------------------------------
def make_params(key, input_channel_num, num_actions, extra_size):
    ks = jax.random.split(key, 16)
    std = 0.05
    p = {}
    # nn.Embedding(9, 16) per input channel, stacked into one (C*9, 16) table.
    p["emb"] = std * jax.random.normal(ks[0], (input_channel_num * 9, 16),
                                       jnp.float32)
    # conv weights in PyTorch (C_out, C_in, kH, kW) layout.
    w1 = std * jax.random.normal(ks[4], (64, 64, 8, 8), jnp.float32)
    w2 = std * jax.random.normal(ks[5], (64, 64, 4, 4), jnp.float32)
    w3 = std * jax.random.normal(ks[6], (64, 64, 3, 3), jnp.float32)
    # conv1 patches are (ci, kh, kw)-major; conv2/conv3 blocks are per-tap (ci, co).
    p["w1c"] = w1.reshape(64, -1).T.astype(jnp.bfloat16)                      # (4096, 64)
    p["w2c"] = w2.transpose(2, 3, 1, 0).reshape(-1, 64).astype(jnp.bfloat16)  # (1024, 64)
    p["w3c"] = w3.transpose(2, 3, 1, 0).reshape(-1, 64).astype(jnp.bfloat16)  # (576, 64)
    p["b1c"] = (std * jax.random.normal(ks[7], (64,), jnp.float32)).reshape(1, 64)
    p["b2c"] = (std * jax.random.normal(ks[8], (64,), jnp.float32)).reshape(1, 64)
    p["b3c"] = (std * jax.random.normal(ks[9], (64,), jnp.float32)).reshape(1, 64)
    # BatchNorm2d(64) eval mode (default stats) folded to per-channel affine.
    # TODO(synk): training-mode (batch-statistics) BN is not implemented.
    gamma = jnp.ones((64,), jnp.float32)
    beta = jnp.zeros((64,), jnp.float32)
    r_mean = jnp.zeros((64,), jnp.float32)
    r_var = jnp.ones((64,), jnp.float32)
    bn_scale = gamma / jnp.sqrt(r_var + 1e-5)
    p["bn_scale"] = bn_scale.reshape(1, 64)
    p["bn_shift"] = (beta - r_mean * bn_scale).reshape(1, 64)
    # encoder / fc1 / fc2 stored as (in, out) for y @ W.
    p["we"] = std * jax.random.normal(ks[10], (extra_size, 64), jnp.float32)
    p["be"] = (std * jax.random.normal(ks[11], (64,), jnp.float32)).reshape(1, 64)
    p["wf1"] = std * jax.random.normal(ks[12], (64, 32), jnp.float32)
    p["bf1"] = (std * jax.random.normal(ks[13], (32,), jnp.float32)).reshape(1, 32)
    p["wf2"] = std * jax.random.normal(ks[14], (32, num_actions), jnp.float32)
    p["bf2"] = (std * jax.random.normal(ks[15], (num_actions,),
                                        jnp.float32)).reshape(1, num_actions)
    return p


# ---------------------------------------------------------------------------
# Forward pass (mirrors PacmanNet.forward)
# ---------------------------------------------------------------------------
def pacman_forward(params, x, y):
    B, Cin, H, W = x.shape
    C = 16 * Cin                                        # 64 feature channels

    # Conv-stack geometry; the `x + y` add requires it to collapse to 1x1.
    OH1, OW1 = (H - 8) // 4 + 1, (W - 8) // 4 + 1
    K2 = 4
    OH2, OW2 = (OH1 - K2) // 2 + 1, (OW1 - K2) // 2 + 1
    OH3, OW3 = (OH2 - 3) // 2 + 1, (OW2 - 3) // 2 + 1
    assert OH2 == 3 and OW2 == 3 and OH3 == 1 and OW3 == 1, (
        "PacmanNet requires H=W=36 so the conv stack reduces to 1x1 before x+y")

    # Embedding: one gather over the stacked table; the reshape below is the
    # exact torch `.view(B, 16, H, W)` memory reinterpret + channel concat.
    # Cast to bf16 immediately so every host-side intermediate is half size.
    idx = (x.astype(jnp.int32)
           + 9 * jnp.arange(Cin, dtype=jnp.int32)[None, :, None, None])
    e = jnp.take(params["emb"], idx.reshape(B, Cin, H * W), axis=0)  # (B,Cin,HW,16)
    h = e.astype(jnp.bfloat16).reshape(B, C, H, W)                   # (B, 64, H, W)

    # conv1 im2col on the host in bf16: rows ordered (h1, w1, b), cols (ci, di, dj).
    # TODO(synk): pulling this im2col into the kernel would cut a1's HBM bytes
    # another ~4x; host bf16 + K-streaming below is the cheap majority of that win.
    ih = 4 * jnp.arange(OH1)[:, None] + jnp.arange(8)[None, :]       # (OH1, 8)
    iw = 4 * jnp.arange(OW1)[:, None] + jnp.arange(8)[None, :]       # (OW1, 8)
    patches = h[:, :, ih[:, None, :, None], iw[None, :, None, :]]    # (B,C,OH1,OW1,8,8)
    M1 = OH1 * OW1 * B
    K1 = C * 8 * 8
    a1 = patches.transpose(2, 3, 0, 1, 4, 5).reshape(M1, K1)         # bf16 (128, 4096)

    num_actions = params["bf2"].shape[1]
    extra = y.shape[1]
    TK = 1024 if K1 % 1024 == 0 else K1
    grid = (K1 // TK,)

    kernel = _make_fused_kernel(B, OH1, OW1, OH2, OW2, K2, C, M1)

    def resident(shape):
        return pl.BlockSpec(shape, lambda k: (0,) * len(shape))

    grid_spec = pltpu.PrefetchScalarGridSpec(
        num_scalar_prefetch=0,
        grid=grid,
        in_specs=[
            pl.BlockSpec((M1, TK), lambda k: (0, k)),      # a1, streamed over K
            pl.BlockSpec((TK, C), lambda k: (k, 0)),       # w1c, streamed over K
            resident((1, C)),                              # b1
            resident((K2 * K2 * C, C)),                    # w2 tap blocks
            resident((1, C)),                              # b2
            resident((1, C)), resident((1, C)),            # bn scale / shift
            resident((OH2 * OW2 * C, C)),                  # w3 tap blocks
            resident((1, C)),                              # b3
            resident((B, extra)),                          # y
            resident((extra, C)), resident((1, C)),        # encoder
            resident((C, 32)), resident((1, 32)),          # fc1
            resident((32, num_actions)), resident((1, num_actions)),  # fc2
        ],
        out_specs=pl.BlockSpec((B, num_actions), lambda k: (0, 0)),
        scratch_shapes=[
            pltpu.VMEM((M1, C), jnp.float32),    # conv1 f32 accumulator
            pltpu.VMEM((M1, C), jnp.bfloat16),   # conv2 output (dense rows, bf16)
        ],
    )

    return pl.pallas_call(
        kernel,
        out_shape=jax.ShapeDtypeStruct((B, num_actions), jnp.float32),
        grid_spec=grid_spec,
        compiler_params=pltpu.CompilerParams(
            dimension_semantics=("arbitrary",)),
    )(a1, params["w1c"], params["b1c"], params["w2c"], params["b2c"],
      params["bn_scale"], params["bn_shift"], params["w3c"], params["b3c"],
      y, params["we"], params["be"], params["wf1"], params["bf1"],
      params["wf2"], params["bf2"])


if __name__ == "__main__":
    key = jax.random.PRNGKey(0)
    # H = W = 36 so the conv stack reduces to 1x1 (required by the `x + y` add).
    B, Cin, H, W = 2, 4, 36, 36
    extra_size, num_actions = 8, 5

    kx, ky, kp = jax.random.split(key, 3)
    x = jax.random.randint(kx, (B, Cin, H, W), 0, 9, dtype=jnp.int32)
    y = jax.random.normal(ky, (B, extra_size), jnp.float32)
    params = make_params(kp, Cin, num_actions, extra_size)

    fwd = jax.jit(pacman_forward)
    out = jax.block_until_ready(fwd(params, x, y))
    assert out.shape == (B, num_actions)
    assert out.dtype == jnp.float32
    print("KERNEL_OK")
</pallas_src>

<mosaic_0001>
module attributes {stable_mosaic.version = 11 : i64} {
  func.func @kernel(%arg0: i32, %arg1: memref<128x1024xbf16, #tpu.memory_space<vmem>>, %arg2: memref<1024x64xbf16, #tpu.memory_space<vmem>>, %arg3: memref<1x64xf32, #tpu.memory_space<vmem>>, %arg4: memref<1024x64xbf16, #tpu.memory_space<vmem>>, %arg5: memref<1x64xf32, #tpu.memory_space<vmem>>, %arg6: memref<1x64xf32, #tpu.memory_space<vmem>>, %arg7: memref<1x64xf32, #tpu.memory_space<vmem>>, %arg8: memref<576x64xbf16, #tpu.memory_space<vmem>>, %arg9: memref<1x64xf32, #tpu.memory_space<vmem>>, %arg10: memref<2x8xf32, #tpu.memory_space<vmem>>, %arg11: memref<8x64xf32, #tpu.memory_space<vmem>>, %arg12: memref<1x64xf32, #tpu.memory_space<vmem>>, %arg13: memref<64x32xf32, #tpu.memory_space<vmem>>, %arg14: memref<1x32xf32, #tpu.memory_space<vmem>>, %arg15: memref<32x5xf32, #tpu.memory_space<vmem>>, %arg16: memref<1x5xf32, #tpu.memory_space<vmem>>, %arg17: memref<2x5xf32, #tpu.memory_space<vmem>>, %arg18: memref<128x64xf32, #tpu.memory_space<vmem>>, %arg19: memref<128x64xbf16, #tpu.memory_space<vmem>>) attributes {dimension_semantics = [#tpu.dimension_semantics<arbitrary>], iteration_bounds = array<i64: 4>, scalar_prefetch = 0 : i64, scratch_operands = 2 : i64, tpu.core_type = #tpu.core_type<tc>, window_params = [{transform_indices = @transform_0, window_bounds = array<i64: 128, 1024>}, {transform_indices = @transform_1, window_bounds = array<i64: 1024, 64>}, {pipeline_mode = #tpu.pipeline_mode<synchronous>, transform_indices = @transform_2, window_bounds = array<i64: 1, 64>}, {pipeline_mode = #tpu.pipeline_mode<synchronous>, transform_indices = @transform_3, window_bounds = array<i64: 1024, 64>}, {pipeline_mode = #tpu.pipeline_mode<synchronous>, transform_indices = @transform_4, window_bounds = array<i64: 1, 64>}, {pipeline_mode = #tpu.pipeline_mode<synchronous>, transform_indices = @transform_5, window_bounds = array<i64: 1, 64>}, {pipeline_mode = #tpu.pipeline_mode<synchronous>, transform_indices = @transform_6, window_bounds = array<i64: 1, 64>}, {pipeline_mode = #tpu.pipeline_mode<synchronous>, transform_indices = @transform_7, window_bounds = array<i64: 576, 64>}, {pipeline_mode = #tpu.pipeline_mode<synchronous>, transform_indices = @transform_8, window_bounds = array<i64: 1, 64>}, {pipeline_mode = #tpu.pipeline_mode<synchronous>, transform_indices = @transform_9, window_bounds = array<i64: 2, 8>}, {pipeline_mode = #tpu.pipeline_mode<synchronous>, transform_indices = @transform_10, window_bounds = array<i64: 8, 64>}, {pipeline_mode = #tpu.pipeline_mode<synchronous>, transform_indices = @transform_11, window_bounds = array<i64: 1, 64>}, {pipeline_mode = #tpu.pipeline_mode<synchronous>, transform_indices = @transform_12, window_bounds = array<i64: 64, 32>}, {pipeline_mode = #tpu.pipeline_mode<synchronous>, transform_indices = @transform_13, window_bounds = array<i64: 1, 32>}, {pipeline_mode = #tpu.pipeline_mode<synchronous>, transform_indices = @transform_14, window_bounds = array<i64: 32, 5>}, {pipeline_mode = #tpu.pipeline_mode<synchronous>, transform_indices = @transform_15, window_bounds = array<i64: 1, 5>}, {pipeline_mode = #tpu.pipeline_mode<synchronous>, transform_indices = @transform_16, window_bounds = array<i64: 2, 5>}]} {
    %c0_i32 = arith.constant 0 : i32
    %0 = arith.cmpi eq, %arg0, %c0_i32 : i32
    %1 = arith.extui %0 : i1 to i32
    %c0_i32_0 = arith.constant 0 : i32
    %2 = arith.cmpi ne, %1, %c0_i32_0 : i32
    scf.if %2 {
      %cst_9 = arith.constant 0.000000e+00 : f32
      %12 = vector.broadcast %cst_9 : f32 to vector<128x64xf32>
      %c0_10 = arith.constant 0 : index
      %c0_11 = arith.constant 0 : index
      %13 = vector.load %arg18[%c0_10, %c0_11] : memref<128x64xf32, #tpu.memory_space<vmem>>, vector<128x64xf32>
      tpu.vector_store %arg18[%c0_10, %c0_11], %12 {strides = array<i32>} : memref<128x64xf32, #tpu.memory_space<vmem>>, vector<128x64xf32>,
    } else {
    }
    %c0 = arith.constant 0 : index
    %c0_1 = arith.constant 0 : index
    %3 = vector.load %arg18[%c0, %c0_1] : memref<128x64xf32, #tpu.memory_space<vmem>>, vector<128x64xf32>
    %c0_2 = arith.constant 0 : index
    %c0_3 = arith.constant 0 : index
    %4 = vector.load %arg1[%c0_2, %c0_3] : memref<128x1024xbf16, #tpu.memory_space<vmem>>, vector<128x1024xbf16>
    %c0_4 = arith.constant 0 : index
    %c0_5 = arith.constant 0 : index
    %5 = vector.load %arg2[%c0_4, %c0_5] : memref<1024x64xbf16, #tpu.memory_space<vmem>>, vector<1024x64xbf16>
    %cst = arith.constant dense<0.000000e+00> : vector<128x64xf32>
    %6 = tpu.matmul %4, %5, %cst {dimension_numbers = #tpu.dot_dimension_numbers<[1], [0], [0], [1], [0, 0, 1, 1], [], []>} : vector<128x1024xbf16>, vector<1024x64xbf16>, vector<128x64xf32> -> vector<128x64xf32>
    %7 = arith.addf %3, %6 : vector<128x64xf32>
    %c0_6 = arith.constant 0 : index
    %c0_7 = arith.constant 0 : index
    %8 = vector.load %arg18[%c0_6, %c0_7] : memref<128x64xf32, #tpu.memory_space<vmem>>, vector<128x64xf32>
    tpu.vector_store %arg18[%c0_6, %c0_7], %7 {strides = array<i32>} : memref<128x64xf32, #tpu.memory_space<vmem>>, vector<128x64xf32>,
    %c3_i32 = arith.constant 3 : i32
    %9 = arith.cmpi eq, %arg0, %c3_i32 : i32
    %10 = arith.extui %9 : i1 to i32
    %c0_i32_8 = arith.constant 0 : i32
    %11 = arith.cmpi ne, %10, %c0_i32_8 : i32
    scf.if %11 {
      %c0_9 = arith.constant 0 : index
      %c0_10 = arith.constant 0 : index
      %12 = vector.load %arg18[%c0_9, %c0_10] : memref<128x64xf32, #tpu.memory_space<vmem>>, vector<128x64xf32>
      %c0_11 = arith.constant 0 : index
      %c0_12 = arith.constant 0 : index
      %13 = vector.load %arg3[%c0_11, %c0_12] : memref<1x64xf32, #tpu.memory_space<vmem>>, vector<1x64xf32>
      %14 = vector.broadcast %13 : vector<1x64xf32> to vector<128x64xf32>
      %15 = arith.addf %12, %14 : vector<128x64xf32>
      %cst_13 = arith.constant 0.000000e+00 : f32
      %16 = vector.broadcast %cst_13 : f32 to vector<128x64xf32>
      %17 = arith.maximumf %15, %16 : vector<128x64xf32>
      %cst_14 = arith.constant 0.000000e+00 : f32
      %18 = vector.broadcast %cst_14 : f32 to vector<128x64xf32>
      %19 = arith.truncf %17 : vector<128x64xf32> to vector<128x64xbf16>
      %c0_15 = arith.constant 0 : index
      %c0_16 = arith.constant 0 : index
      %20 = vector.load %arg4[%c0_15, %c0_16] : memref<1024x64xbf16, #tpu.memory_space<vmem>>, vector<64x64xbf16>
      %cst_17 = arith.constant dense<0.000000e+00> : vector<128x64xf32>
      %21 = tpu.matmul %19, %20, %cst_17 {dimension_numbers = #tpu.dot_dimension_numbers<[1], [0], [0], [1], [0, 0, 1, 1], [], []>} : vector<128x64xbf16>, vector<64x64xbf16>, vector<128x64xf32> -> vector<128x64xf32>
      %22 = arith.addf %18, %21 : vector<128x64xf32>
      %c126_i32 = arith.constant 126 : i32
      %23 = tpu.dynamic_rotate %17 by %c126_i32 dim 0 : vector<128x64xf32>, i32 -> vector<128x64xf32>
      %24 = arith.truncf %23 : vector<128x64xf32> to vector<128x64xbf16>
      %c64 = arith.constant 64 : index
      %c0_18 = arith.constant 0 : index
      %25 = vector.load %arg4[%c64, %c0_18] : memref<1024x64xbf16, #tpu.memory_space<vmem>>, vector<64x64xbf16>
      %cst_19 = arith.constant dense<0.000000e+00> : vector<128x64xf32>
      %26 = tpu.matmul %24, %25, %cst_19 {dimension_numbers = #tpu.dot_dimension_numbers<[1], [0], [0], [1], [0, 0, 1, 1], [], []>} : vector<128x64xbf16>, vector<64x64xbf16>, vector<128x64xf32> -> vector<128x64xf32>
      %27 = arith.addf %22, %26 : vector<128x64xf32>
      %c124_i32 = arith.constant 124 : i32
      %28 = tpu.dynamic_rotate %17 by %c124_i32 dim 0 : vector<128x64xf32>, i32 -> vector<128x64xf32>
      %29 = arith.truncf %28 : vector<128x64xf32> to vector<128x64xbf16>
      %c128 = arith.constant 128 : index
      %c0_20 = arith.constant 0 : index
      %30 = vector.load %arg4[%c128, %c0_20] : memref<1024x64xbf16, #tpu.memory_space<vmem>>, vector<64x64xbf16>
      %cst_21 = arith.constant dense<0.000000e+00> : vector<128x64xf32>
      %31 = tpu.matmul %29, %30, %cst_21 {dimension_numbers = #tpu.dot_dimension_numbers<[1], [0], [0], [1], [0, 0, 1, 1], [], []>} : vector<128x64xbf16>, vector<64x64xbf16>, vector<128x64xf32> -> vector<128x64xf32>
      %32 = arith.addf %27, %31 : vector<128x64xf32>
      %c122_i32 = arith.constant 122 : i32
      %33 = tpu.dynamic_rotate %17 by %c122_i32 dim 0 : vector<128x64xf32>, i32 -> vector<128x64xf32>
      %34 = arith.truncf %33 : vector<128x64xf32> to vector<128x64xbf16>
      %c192 = arith.constant 192 : index
      %c0_22 = arith.constant 0 : index
      %35 = vector.load %arg4[%c192, %c0_22] : memref<1024x64xbf16, #tpu.memory_space<vmem>>, vector<64x64xbf16>
      %cst_23 = arith.constant dense<0.000000e+00> : vector<128x64xf32>
      %36 = tpu.matmul %34, %35, %cst_23 {dimension_numbers = #tpu.dot_dimension_numbers<[1], [0], [0], [1], [0, 0, 1, 1], [], []>} : vector<128x64xbf16>, vector<64x64xbf16>, vector<128x64xf32> -> vector<128x64xf32>
      %37 = arith.addf %32, %36 : vector<128x64xf32>
      %c112_i32 = arith.constant 112 : i32
      %38 = tpu.dynamic_rotate %17 by %c112_i32 dim 0 : vector<128x64xf32>, i32 -> vector<128x64xf32>
      %39 = arith.truncf %38 : vector<128x64xf32> to vector<128x64xbf16>
      %c256 = arith.constant 256 : index
      %c0_24 = arith.constant 0 : index
      %40 = vector.load %arg4[%c256, %c0_24] : memref<1024x64xbf16, #tpu.memory_space<vmem>>, vector<64x64xbf16>
      %cst_25 = arith.constant dense<0.000000e+00> : vector<128x64xf32>
      %41 = tpu.matmul %39, %40, %cst_25 {dimension_numbers = #tpu.dot_dimension_numbers<[1], [0], [0], [1], [0, 0, 1, 1], [], []>} : vector<128x64xbf16>, vector<64x64xbf16>, vector<128x64xf32> -> vector<128x64xf32>
      %42 = arith.addf %37, %41 : vector<128x64xf32>
      %c110_i32 = arith.constant 110 : i32
      %43 = tpu.dynamic_rotate %17 by %c110_i32 dim 0 : vector<128x64xf32>, i32 -> vector<128x64xf32>
      %44 = arith.truncf %43 : vector<128x64xf32> to vector<128x64xbf16>
      %c320 = arith.constant 320 : index
      %c0_26 = arith.constant 0 : index
      %45 = vector.load %arg4[%c320, %c0_26] : memref<1024x64xbf16, #tpu.memory_space<vmem>>, vector<64x64xbf16>
      %cst_27 = arith.constant dense<0.000000e+00> : vector<128x64xf32>
      %46 = tpu.matmul %44, %45, %cst_27 {dimension_numbers = #tpu.dot_dimension_numbers<[1], [0], [0], [1], [0, 0, 1, 1], [], []>} : vector<128x64xbf16>, vector<64x64xbf16>, vector<128x64xf32> -> vector<128x64xf32>
      %47 = arith.addf %42, %46 : vector<128x64xf32>
      %c108_i32 = arith.constant 108 : i32
      %48 = tpu.dynamic_rotate %17 by %c108_i32 dim 0 : vector<128x64xf32>, i32 -> vector<128x64xf32>
      %49 = arith.truncf %48 : vector<128x64xf32> to vector<128x64xbf16>
      %c384 = arith.constant 384 : index
      %c0_28 = arith.constant 0 : index
      %50 = vector.load %arg4[%c384, %c0_28] : memref<1024x64xbf16, #tpu.memory_space<vmem>>, vector<64x64xbf16>
      %cst_29 = arith.constant dense<0.000000e+00> : vector<128x64xf32>
      %51 = tpu.matmul %49, %50, %cst_29 {dimension_numbers = #tpu.dot_dimension_numbers<[1], [0], [0], [1], [0, 0, 1, 1], [], []>} : vector<128x64xbf16>, vector<64x64xbf16>, vector<128x64xf32> -> vector<128x64xf32>
      %52 = arith.addf %47, %51 : vector<128x64xf32>
      %c106_i32 = arith.constant 106 : i32
      %53 = tpu.dynamic_rotate %17 by %c106_i32 dim 0 : vector<128x64xf32>, i32 -> vector<128x64xf32>
      %54 = arith.truncf %53 : vector<128x64xf32> to vector<128x64xbf16>
      %c448 = arith.constant 448 : index
      %c0_30 = arith.constant 0 : index
      %55 = vector.load %arg4[%c448, %c0_30] : memref<1024x64xbf16, #tpu.memory_space<vmem>>, vector<64x64xbf16>
      %cst_31 = arith.constant dense<0.000000e+00> : vector<128x64xf32>
      %56 = tpu.matmul %54, %55, %cst_31 {dimension_numbers = #tpu.dot_dimension_numbers<[1], [0], [0], [1], [0, 0, 1, 1], [], []>} : vector<128x64xbf16>, vector<64x64xbf16>, vector<128x64xf32> -> vector<128x64xf32>
      %57 = arith.addf %52, %56 : vector<128x64xf32>
      %c96_i32 = arith.constant 96 : i32
      %58 = tpu.dynamic_rotate %17 by %c96_i32 dim 0 : vector<128x64xf32>, i32 -> vector<128x64xf32>
      %59 = arith.truncf %58 : vector<128x64xf32> to vector<128x64xbf16>
      %c512 = arith.constant 512 : index
      %c0_32 = arith.constant 0 : index
      %60 = vector.load %arg4[%c512, %c0_32] : memref<1024x64xbf16, #tpu.memory_space<vmem>>, vector<64x64xbf16>
      %cst_33 = arith.constant dense<0.000000e+00> : vector<128x64xf32>
      %61 = tpu.matmul %59, %60, %cst_33 {dimension_numbers = #tpu.dot_dimension_numbers<[1], [0], [0], [1], [0, 0, 1, 1], [], []>} : vector<128x64xbf16>, vector<64x64xbf16>, vector<128x64xf32> -> vector<128x64xf32>
      %62 = arith.addf %57, %61 : vector<128x64xf32>
      %c94_i32 = arith.constant 94 : i32
      %63 = tpu.dynamic_rotate %17 by %c94_i32 dim 0 : vector<128x64xf32>, i32 -> vector<128x64xf32>
      %64 = arith.truncf %63 : vector<128x64xf32> to vector<128x64xbf16>
      %c576 = arith.constant 576 : index
      %c0_34 = arith.constant 0 : index
      %65 = vector.load %arg4[%c576, %c0_34] : memref<1024x64xbf16, #tpu.memory_space<vmem>>, vector<64x64xbf16>
      %cst_35 = arith.constant dense<0.000000e+00> : vector<128x64xf32>
      %66 = tpu.matmul %64, %65, %cst_35 {dimension_numbers = #tpu.dot_dimension_numbers<[1], [0], [0], [1], [0, 0, 1, 1], [], []>} : vector<128x64xbf16>, vector<64x64xbf16>, vector<128x64xf32> -> vector<128x64xf32>
      %67 = arith.addf %62, %66 : vector<128x64xf32>
      %c92_i32 = arith.constant 92 : i32
      %68 = tpu.dynamic_rotate %17 by %c92_i32 dim 0 : vector<128x64xf32>, i32 -> vector<128x64xf32>
      %69 = arith.truncf %68 : vector<128x64xf32> to vector<128x64xbf16>
      %c640 = arith.constant 640 : index
      %c0_36 = arith.constant 0 : index
      %70 = vector.load %arg4[%c640, %c0_36] : memref<1024x64xbf16, #tpu.memory_space<vmem>>, vector<64x64xbf16>
      %cst_37 = arith.constant dense<0.000000e+00> : vector<128x64xf32>
      %71 = tpu.matmul %69, %70, %cst_37 {dimension_numbers = #tpu.dot_dimension_numbers<[1], [0], [0], [1], [0, 0, 1, 1], [], []>} : vector<128x64xbf16>, vector<64x64xbf16>, vector<128x64xf32> -> vector<128x64xf32>
      %72 = arith.addf %67, %71 : vector<128x64xf32>
      %c90_i32 = arith.constant 90 : i32
      %73 = tpu.dynamic_rotate %17 by %c90_i32 dim 0 : vector<128x64xf32>, i32 -> vector<128x64xf32>
      %74 = arith.truncf %73 : vector<128x64xf32> to vector<128x64xbf16>
      %c704 = arith.constant 704 : index
      %c0_38 = arith.constant 0 : index
      %75 = vector.load %arg4[%c704, %c0_38] : memref<1024x64xbf16, #tpu.memory_space<vmem>>, vector<64x64xbf16>
      %cst_39 = arith.constant dense<0.000000e+00> : vector<128x64xf32>
      %76 = tpu.matmul %74, %75, %cst_39 {dimension_numbers = #tpu.dot_dimension_numbers<[1], [0], [0], [1], [0, 0, 1, 1], [], []>} : vector<128x64xbf16>, vector<64x64xbf16>, vector<128x64xf32> -> vector<128x64xf32>
      %77 = arith.addf %72, %76 : vector<128x64xf32>
      %c80_i32 = arith.constant 80 : i32
      %78 = tpu.dynamic_rotate %17 by %c80_i32 dim 0 : vector<128x64xf32>, i32 -> vector<128x64xf32>
      %79 = arith.truncf %78 : vector<128x64xf32> to vector<128x64xbf16>
      %c768 = arith.constant 768 : index
      %c0_40 = arith.constant 0 : index
      %80 = vector.load %arg4[%c768, %c0_40] : memref<1024x64xbf16, #tpu.memory_space<vmem>>, vector<64x64xbf16>
      %cst_41 = arith.constant dense<0.000000e+00> : vector<128x64xf32>
      %81 = tpu.matmul %79, %80, %cst_41 {dimension_numbers = #tpu.dot_dimension_numbers<[1], [0], [0], [1], [0, 0, 1, 1], [], []>} : vector<128x64xbf16>, vector<64x64xbf16>, vector<128x64xf32> -> vector<128x64xf32>
      %82 = arith.addf %77, %81 : vector<128x64xf32>
      %c78_i32 = arith.constant 78 : i32
      %83 = tpu.dynamic_rotate %17 by %c78_i32 dim 0 : vector<128x64xf32>, i32 -> vector<128x64xf32>
      %84 = arith.truncf %83 : vector<128x64xf32> to vector<128x64xbf16>
      %c832 = arith.constant 832 : index
      %c0_42 = arith.constant 0 : index
      %85 = vector.load %arg4[%c832, %c0_42] : memref<1024x64xbf16, #tpu.memory_space<vmem>>, vector<64x64xbf16>
      %cst_43 = arith.constant dense<0.000000e+00> : vector<128x64xf32>
      %86 = tpu.matmul %84, %85, %cst_43 {dimension_numbers = #tpu.dot_dimension_numbers<[1], [0], [0], [1], [0, 0, 1, 1], [], []>} : vector<128x64xbf16>, vector<64x64xbf16>, vector<128x64xf32> -> vector<128x64xf32>
      %87 = arith.addf %82, %86 : vector<128x64xf32>
      %c76_i32 = arith.constant 76 : i32
      %88 = tpu.dynamic_rotate %17 by %c76_i32 dim 0 : vector<128x64xf32>, i32 -> vector<128x64xf32>
      %89 = arith.truncf %88 : vector<128x64xf32> to vector<128x64xbf16>
      %c896 = arith.constant 896 : index
      %c0_44 = arith.constant 0 : index
      %90 = vector.load %arg4[%c896, %c0_44] : memref<1024x64xbf16, #tpu.memory_space<vmem>>, vector<64x64xbf16>
      %cst_45 = arith.constant dense<0.000000e+00> : vector<128x64xf32>
      %91 = tpu.matmul %89, %90, %cst_45 {dimension_numbers = #tpu.dot_dimension_numbers<[1], [0], [0], [1], [0, 0, 1, 1], [], []>} : vector<128x64xbf16>, vector<64x64xbf16>, vector<128x64xf32> -> vector<128x64xf32>
      %92 = arith.addf %87, %91 : vector<128x64xf32>
      %c74_i32 = arith.constant 74 : i32
      %93 = tpu.dynamic_rotate %17 by %c74_i32 dim 0 : vector<128x64xf32>, i32 -> vector<128x64xf32>
      %94 = arith.truncf %93 : vector<128x64xf32> to vector<128x64xbf16>
      %c960 = arith.constant 960 : index
      %c0_46 = arith.constant 0 : index
      %95 = vector.load %arg4[%c960, %c0_46] : memref<1024x64xbf16, #tpu.memory_space<vmem>>, vector<64x64xbf16>
      %cst_47 = arith.constant dense<0.000000e+00> : vector<128x64xf32>
      %96 = tpu.matmul %94, %95, %cst_47 {dimension_numbers = #tpu.dot_dimension_numbers<[1], [0], [0], [1], [0, 0, 1, 1], [], []>} : vector<128x64xbf16>, vector<64x64xbf16>, vector<128x64xf32> -> vector<128x64xf32>
      %97 = arith.addf %92, %96 : vector<128x64xf32>
      %c0_48 = arith.constant 0 : index
      %c0_49 = arith.constant 0 : index
      %98 = vector.load %arg5[%c0_48, %c0_49] : memref<1x64xf32, #tpu.memory_space<vmem>>, vector<1x64xf32>
      %99 = vector.broadcast %98 : vector<1x64xf32> to vector<128x64xf32>
      %100 = arith.addf %97, %99 : vector<128x64xf32>
      %cst_50 = arith.constant 0.000000e+00 : f32
      %101 = vector.broadcast %cst_50 : f32 to vector<128x64xf32>
      %102 = arith.maximumf %100, %101 : vector<128x64xf32>
      %c0_51 = arith.constant 0 : index
      %c0_52 = arith.constant 0 : index
      %103 = vector.load %arg6[%c0_51, %c0_52] : memref<1x64xf32, #tpu.memory_space<vmem>>, vector<1x64xf32>
      %104 = vector.broadcast %103 : vector<1x64xf32> to vector<128x64xf32>
      %105 = arith.mulf %102, %104 : vector<128x64xf32>
      %c0_53 = arith.constant 0 : index
      %c0_54 = arith.constant 0 : index
      %106 = vector.load %arg7[%c0_53, %c0_54] : memref<1x64xf32, #tpu.memory_space<vmem>>, vector<1x64xf32>
      %107 = vector.broadcast %106 : vector<1x64xf32> to vector<128x64xf32>
      %108 = arith.addf %105, %107 : vector<128x64xf32>
      %109 = arith.truncf %108 : vector<128x64xf32> to vector<128x64xbf16>
      %c0_55 = arith.constant 0 : index
      %c0_56 = arith.constant 0 : index
      %110 = vector.load %arg19[%c0_55, %c0_56] : memref<128x64xbf16, #tpu.memory_space<vmem>>, vector<128x64xbf16>
      tpu.vector_store %arg19[%c0_55, %c0_56], %109 {strides = array<i32>} : memref<128x64xbf16, #tpu.memory_space<vmem>>, vector<128x64xbf16>,
      %cst_57 = arith.constant 0.000000e+00 : f32
      %111 = vector.broadcast %cst_57 : f32 to vector<2x64xf32>
      %c0_58 = arith.constant 0 : index
      %c0_59 = arith.constant 0 : index
      %112 = vector.load %arg19[%c0_58, %c0_59] : memref<128x64xbf16, #tpu.memory_space<vmem>>, vector<2x64xbf16>
      %c0_60 = arith.constant 0 : index
      %c0_61 = arith.constant 0 : index
      %113 = vector.load %arg8[%c0_60, %c0_61] : memref<576x64xbf16, #tpu.memory_space<vmem>>, vector<64x64xbf16>
      %cst_62 = arith.constant dense<0.000000e+00> : vector<2x64xf32>
      %114 = tpu.matmul %112, %113, %cst_62 {dimension_numbers = #tpu.dot_dimension_numbers<[1], [0], [0], [1], [0, 0, 1, 1], [], []>} : vector<2x64xbf16>, vector<64x64xbf16>, vector<2x64xf32> -> vector<2x64xf32>
      %115 = arith.addf %111, %114 : vector<2x64xf32>
      %c4 = arith.constant 4 : index
      %c0_63 = arith.constant 0 : index
      %116 = vector.load %arg19[%c4, %c0_63] : memref<128x64xbf16, #tpu.memory_space<vmem>>, vector<2x64xbf16>
      %c64_64 = arith.constant 64 : index
      %c0_65 = arith.constant 0 : index
      %117 = vector.load %arg8[%c64_64, %c0_65] : memref<576x64xbf16, #tpu.memory_space<vmem>>, vector<64x64xbf16>
      %cst_66 = arith.constant dense<0.000000e+00> : vector<2x64xf32>
      %118 = tpu.matmul %116, %117, %cst_66 {dimension_numbers = #tpu.dot_dimension_numbers<[1], [0], [0], [1], [0, 0, 1, 1], [], []>} : vector<2x64xbf16>, vector<64x64xbf16>, vector<2x64xf32> -> vector<2x64xf32>
      %119 = arith.addf %115, %118 : vector<2x64xf32>
      %c8 = arith.constant 8 : index
      %c0_67 = arith.constant 0 : index
      %120 = vector.load %arg19[%c8, %c0_67] : memref<128x64xbf16, #tpu.memory_space<vmem>>, vector<2x64xbf16>
      %c128_68 = arith.constant 128 : index
      %c0_69 = arith.constant 0 : index
      %121 = vector.load %arg8[%c128_68, %c0_69] : memref<576x64xbf16, #tpu.memory_space<vmem>>, vector<64x64xbf16>
      %cst_70 = arith.constant dense<0.000000e+00> : vector<2x64xf32>
      %122 = tpu.matmul %120, %121, %cst_70 {dimension_numbers = #tpu.dot_dimension_numbers<[1], [0], [0], [1], [0, 0, 1, 1], [], []>} : vector<2x64xbf16>, vector<64x64xbf16>, vector<2x64xf32> -> vector<2x64xf32>
      %123 = arith.addf %119, %122 : vector<2x64xf32>
      %c32 = arith.constant 32 : index
      %c0_71 = arith.constant 0 : index
      %124 = vector.load %arg19[%c32, %c0_71] : memref<128x64xbf16, #tpu.memory_space<vmem>>, vector<2x64xbf16>
      %c192_72 = arith.constant 192 : index
      %c0_73 = arith.constant 0 : index
      %125 = vector.load %arg8[%c192_72, %c0_73] : memref<576x64xbf16, #tpu.memory_space<vmem>>, vector<64x64xbf16>
      %cst_74 = arith.constant dense<0.000000e+00> : vector<2x64xf32>
      %126 = tpu.matmul %124, %125, %cst_74 {dimension_numbers = #tpu.dot_dimension_numbers<[1], [0], [0], [1], [0, 0, 1, 1], [], []>} : vector<2x64xbf16>, vector<64x64xbf16>, vector<2x64xf32> -> vector<2x64xf32>
      %127 = arith.addf %123, %126 : vector<2x64xf32>
      %c36 = arith.constant 36 : index
      %c0_75 = arith.constant 0 : index
      %128 = vector.load %arg19[%c36, %c0_75] : memref<128x64xbf16, #tpu.memory_space<vmem>>, vector<2x64xbf16>
      %c256_76 = arith.constant 256 : index
      %c0_77 = arith.constant 0 : index
      %129 = vector.load %arg8[%c256_76, %c0_77] : memref<576x64xbf16, #tpu.memory_space<vmem>>, vector<64x64xbf16>
      %cst_78 = arith.constant dense<0.000000e+00> : vector<2x64xf32>
      %130 = tpu.matmul %128, %129, %cst_78 {dimension_numbers = #tpu.dot_dimension_numbers<[1], [0], [0], [1], [0, 0, 1, 1], [], []>} : vector<2x64xbf16>, vector<64x64xbf16>, vector<2x64xf32> -> vector<2x64xf32>
      %131 = arith.addf %127, %130 : vector<2x64xf32>
      %c40 = arith.constant 40 : index
      %c0_79 = arith.constant 0 : index
      %132 = vector.load %arg19[%c40, %c0_79] : memref<128x64xbf16, #tpu.memory_space<vmem>>, vector<2x64xbf16>
      %c320_80 = arith.constant 320 : index
      %c0_81 = arith.constant 0 : index
      %133 = vector.load %arg8[%c320_80, %c0_81] : memref<576x64xbf16, #tpu.memory_space<vmem>>, vector<64x64xbf16>
      %cst_82 = arith.constant dense<0.000000e+00> : vector<2x64xf32>
      %134 = tpu.matmul %132, %133, %cst_82 {dimension_numbers = #tpu.dot_dimension_numbers<[1], [0], [0], [1], [0, 0, 1, 1], [], []>} : vector<2x64xbf16>, vector<64x64xbf16>, vector<2x64xf32> -> vector<2x64xf32>
      %135 = arith.addf %131, %134 : vector<2x64xf32>
      %c64_83 = arith.constant 64 : index
      %c0_84 = arith.constant 0 : index
      %136 = vector.load %arg19[%c64_83, %c0_84] : memref<128x64xbf16, #tpu.memory_space<vmem>>, vector<2x64xbf16>
      %c384_85 = arith.constant 384 : index
      %c0_86 = arith.constant 0 : index
      %137 = vector.load %arg8[%c384_85, %c0_86] : memref<576x64xbf16, #tpu.memory_space<vmem>>, vector<64x64xbf16>
      %cst_87 = arith.constant dense<0.000000e+00> : vector<2x64xf32>
      %138 = tpu.matmul %136, %137, %cst_87 {dimension_numbers = #tpu.dot_dimension_numbers<[1], [0], [0], [1], [0, 0, 1, 1], [], []>} : vector<2x64xbf16>, vector<64x64xbf16>, vector<2x64xf32> -> vector<2x64xf32>
      %139 = arith.addf %135, %138 : vector<2x64xf32>
      %c68 = arith.constant 68 : index
      %c0_88 = arith.constant 0 : index
      %140 = vector.load %arg19[%c68, %c0_88] : memref<128x64xbf16, #tpu.memory_space<vmem>>, vector<2x64xbf16>
      %c448_89 = arith.constant 448 : index
      %c0_90 = arith.constant 0 : index
      %141 = vector.load %arg8[%c448_89, %c0_90] : memref<576x64xbf16, #tpu.memory_space<vmem>>, vector<64x64xbf16>
      %cst_91 = arith.constant dense<0.000000e+00> : vector<2x64xf32>
      %142 = tpu.matmul %140, %141, %cst_91 {dimension_numbers = #tpu.dot_dimension_numbers<[1], [0], [0], [1], [0, 0, 1, 1], [], []>} : vector<2x64xbf16>, vector<64x64xbf16>, vector<2x64xf32> -> vector<2x64xf32>
      %143 = arith.addf %139, %142 : vector<2x64xf32>
      %c72 = arith.constant 72 : index
      %c0_92 = arith.constant 0 : index
      %144 = vector.load %arg19[%c72, %c0_92] : memref<128x64xbf16, #tpu.memory_space<vmem>>, vector<2x64xbf16>
      %c512_93 = arith.constant 512 : index
      %c0_94 = arith.constant 0 : index
      %145 = vector.load %arg8[%c512_93, %c0_94] : memref<576x64xbf16, #tpu.memory_space<vmem>>, vector<64x64xbf16>
      %cst_95 = arith.constant dense<0.000000e+00> : vector<2x64xf32>
      %146 = tpu.matmul %144, %145, %cst_95 {dimension_numbers = #tpu.dot_dimension_numbers<[1], [0], [0], [1], [0, 0, 1, 1], [], []>} : vector<2x64xbf16>, vector<64x64xbf16>, vector<2x64xf32> -> vector<2x64xf32>
      %147 = arith.addf %143, %146 : vector<2x64xf32>
      %c0_96 = arith.constant 0 : index
      %c0_97 = arith.constant 0 : index
      %148 = vector.load %arg9[%c0_96, %c0_97] : memref<1x64xf32, #tpu.memory_space<vmem>>, vector<1x64xf32>
      %149 = vector.broadcast %148 : vector<1x64xf32> to vector<2x64xf32>
      %150 = arith.addf %147, %149 : vector<2x64xf32>
      %cst_98 = arith.constant 0.000000e+00 : f32
      %151 = vector.broadcast %cst_98 : f32 to vector<2x64xf32>
      %152 = arith.maximumf %150, %151 : vector<2x64xf32>
      %c0_99 = arith.constant 0 : index
      %c0_100 = arith.constant 0 : index
      %153 = vector.load %arg10[%c0_99, %c0_100] : memref<2x8xf32, #tpu.memory_space<vmem>>, vector<2x8xf32>
      %c0_101 = arith.constant 0 : index
      %c0_102 = arith.constant 0 : index
      %154 = vector.load %arg11[%c0_101, %c0_102] : memref<8x64xf32, #tpu.memory_space<vmem>>, vector<8x64xf32>
      %cst_103 = arith.constant dense<0.000000e+00> : vector<2x64xf32>
      %155 = tpu.matmul %153, %154, %cst_103 {dimension_numbers = #tpu.dot_dimension_numbers<[1], [0], [0], [1], [0, 0, 1, 1], [], []>} : vector<2x8xf32>, vector<8x64xf32>, vector<2x64xf32> -> vector<2x64xf32>
      %c0_104 = arith.constant 0 : index
      %c0_105 = arith.constant 0 : index
      %156 = vector.load %arg12[%c0_104, %c0_105] : memref<1x64xf32, #tpu.memory_space<vmem>>, vector<1x64xf32>
      %157 = vector.broadcast %156 : vector<1x64xf32> to vector<2x64xf32>
      %158 = arith.addf %155, %157 : vector<2x64xf32>
      %159 = arith.negf %158 : vector<2x64xf32>
      %160 = math.exp %159 : vector<2x64xf32>
      %cst_106 = arith.constant 1.000000e+00 : f32
      %161 = vector.broadcast %cst_106 : f32 to vector<2x64xf32>
      %162 = arith.addf %161, %160 : vector<2x64xf32>
      %163 = arith.divf %161, %162 : vector<2x64xf32>
      %164 = arith.addf %152, %163 : vector<2x64xf32>
      %c0_107 = arith.constant 0 : index
      %c0_108 = arith.constant 0 : index
      %165 = vector.load %arg13[%c0_107, %c0_108] : memref<64x32xf32, #tpu.memory_space<vmem>>, vector<64x32xf32>
      %cst_109 = arith.constant dense<0.000000e+00> : vector<2x32xf32>
      %166 = tpu.matmul %164, %165, %cst_109 {dimension_numbers = #tpu.dot_dimension_numbers<[1], [0], [0], [1], [0, 0, 1, 1], [], []>} : vector<2x64xf32>, vector<64x32xf32>, vector<2x32xf32> -> vector<2x32xf32>
      %c0_110 = arith.constant 0 : index
      %c0_111 = arith.constant 0 : index
      %167 = vector.load %arg14[%c0_110, %c0_111] : memref<1x32xf32, #tpu.memory_space<vmem>>, vector<1x32xf32>
      %168 = vector.broadcast %167 : vector<1x32xf32> to vector<2x32xf32>
      %169 = arith.addf %166, %168 : vector<2x32xf32>
      %cst_112 = arith.constant 0.000000e+00 : f32
      %170 = vector.broadcast %cst_112 : f32 to vector<2x32xf32>
      %171 = arith.maximumf %169, %170 : vector<2x32xf32>
      %c0_113 = arith.constant 0 : index
      %c0_114 = arith.constant 0 : index
      %172 = vector.load %arg15[%c0_113, %c0_114] : memref<32x5xf32, #tpu.memory_space<vmem>>, vector<32x5xf32>
      %cst_115 = arith.constant dense<0.000000e+00> : vector<2x5xf32>
      %173 = tpu.matmul %171, %172, %cst_115 {dimension_numbers = #tpu.dot_dimension_numbers<[1], [0], [0], [1], [0, 0, 1, 1], [], []>} : vector<2x32xf32>, vector<32x5xf32>, vector<2x5xf32> -> vector<2x5xf32>
      %c0_116 = arith.constant 0 : index
      %c0_117 = arith.constant 0 : index
      %174 = vector.load %arg16[%c0_116, %c0_117] : memref<1x5xf32, #tpu.memory_space<vmem>>, vector<1x5xf32>
      %175 = vector.broadcast %174 : vector<1x5xf32> to vector<2x5xf32>
      %176 = arith.addf %173, %175 : vector<2x5xf32>
      %c0_118 = arith.constant 0 : index
      %c0_119 = arith.constant 0 : index
      %177 = vector.load %arg17[%c0_118, %c0_119] : memref<2x5xf32, #tpu.memory_space<vmem>>, vector<2x5xf32>
      tpu.vector_store %arg17[%c0_118, %c0_119], %176 {strides = array<i32>} : memref<2x5xf32, #tpu.memory_space<vmem>>, vector<2x5xf32>,
    } else {
    }
    return
  }
  func.func @transform_0(%arg0: i32) -> (i32, i32) {
    %c0_i32 = arith.constant 0 : i32
    %c0_i32_0 = arith.constant 0 : i32
    return %c0_i32, %arg0 : i32, i32
  }
  func.func @transform_1(%arg0: i32) -> (i32, i32) {
    %c0_i32 = arith.constant 0 : i32
    %c0_i32_0 = arith.constant 0 : i32
    return %arg0, %c0_i32 : i32, i32
  }
  func.func @transform_2(%arg0: i32) -> (i32, i32) {
    %c0_i32 = arith.constant 0 : i32
    %c0_i32_0 = arith.constant 0 : i32
    %c0_i32_1 = arith.constant 0 : i32
    return %c0_i32, %c0_i32_0 : i32, i32
  }
  func.func @transform_3(%arg0: i32) -> (i32, i32) {
    %c0_i32 = arith.constant 0 : i32
    %c0_i32_0 = arith.constant 0 : i32
    %c0_i32_1 = arith.constant 0 : i32
    return %c0_i32, %c0_i32_0 : i32, i32
  }
  func.func @transform_4(%arg0: i32) -> (i32, i32) {
    %c0_i32 = arith.constant 0 : i32
    %c0_i32_0 = arith.constant 0 : i32
    %c0_i32_1 = arith.constant 0 : i32
    return %c0_i32, %c0_i32_0 : i32, i32
  }
  func.func @transform_5(%arg0: i32) -> (i32, i32) {
    %c0_i32 = arith.constant 0 : i32
    %c0_i32_0 = arith.constant 0 : i32
    %c0_i32_1 = arith.constant 0 : i32
    return %c0_i32, %c0_i32_0 : i32, i32
  }
  func.func @transform_6(%arg0: i32) -> (i32, i32) {
    %c0_i32 = arith.constant 0 : i32
    %c0_i32_0 = arith.constant 0 : i32
    %c0_i32_1 = arith.constant 0 : i32
    return %c0_i32, %c0_i32_0 : i32, i32
  }
  func.func @transform_7(%arg0: i32) -> (i32, i32) {
    %c0_i32 = arith.constant 0 : i32
    %c0_i32_0 = arith.constant 0 : i32
    %c0_i32_1 = arith.constant 0 : i32
    return %c0_i32, %c0_i32_0 : i32, i32
  }
  func.func @transform_8(%arg0: i32) -> (i32, i32) {
    %c0_i32 = arith.constant 0 : i32
    %c0_i32_0 = arith.constant 0 : i32
    %c0_i32_1 = arith.constant 0 : i32
    return %c0_i32, %c0_i32_0 : i32, i32
  }
  func.func @transform_9(%arg0: i32) -> (i32, i32) {
    %c0_i32 = arith.constant 0 : i32
    %c0_i32_0 = arith.constant 0 : i32
    %c0_i32_1 = arith.constant 0 : i32
    return %c0_i32, %c0_i32_0 : i32, i32
  }
  func.func @transform_10(%arg0: i32) -> (i32, i32) {
    %c0_i32 = arith.constant 0 : i32
    %c0_i32_0 = arith.constant 0 : i32
    %c0_i32_1 = arith.constant 0 : i32
    return %c0_i32, %c0_i32_0 : i32, i32
  }
  func.func @transform_11(%arg0: i32) -> (i32, i32) {
    %c0_i32 = arith.constant 0 : i32
    %c0_i32_0 = arith.constant 0 : i32
    %c0_i32_1 = arith.constant 0 : i32
    return %c0_i32, %c0_i32_0 : i32, i32
  }
  func.func @transform_12(%arg0: i32) -> (i32, i32) {
    %c0_i32 = arith.constant 0 : i32
    %c0_i32_0 = arith.constant 0 : i32
    %c0_i32_1 = arith.constant 0 : i32
    return %c0_i32, %c0_i32_0 : i32, i32
  }
  func.func @transform_13(%arg0: i32) -> (i32, i32) {
    %c0_i32 = arith.constant 0 : i32
    %c0_i32_0 = arith.constant 0 : i32
    %c0_i32_1 = arith.constant 0 : i32
    return %c0_i32, %c0_i32_0 : i32, i32
  }
  func.func @transform_14(%arg0: i32) -> (i32, i32) {
    %c0_i32 = arith.constant 0 : i32
    %c0_i32_0 = arith.constant 0 : i32
    %c0_i32_1 = arith.constant 0 : i32
    return %c0_i32, %c0_i32_0 : i32, i32
  }
  func.func @transform_15(%arg0: i32) -> (i32, i32) {
    %c0_i32 = arith.constant 0 : i32
    %c0_i32_0 = arith.constant 0 : i32
    %c0_i32_1 = arith.constant 0 : i32
    return %c0_i32, %c0_i32_0 : i32, i32
  }
  func.func @transform_16(%arg0: i32) -> (i32, i32) {
    %c0_i32 = arith.constant 0 : i32
    %c0_i32_0 = arith.constant 0 : i32
    %c0_i32_1 = arith.constant 0 : i32
    return %c0_i32, %c0_i32_0 : i32, i32
  }
}

</mosaic_0001>

<llo_original>
// kernel: pacman_forward.1
$region0: #{pacman_forward.1}
  #allocation0 [shape = 'u32[]', space=smem, size = 0x4, offset = 0x4, fixed_abs, tag = 'smem constant byte address 0x4 - core index']
  #allocation1 [shape = 'u32[144,128]{1,0:T(1,128)}', space=vmem, size = 0x12000, scoped, tag = 'internal scratch']
  #allocation2 [shape = 'f32[128,64]{1,0:T(8,128)}', space=vmem, size = 0x10000, scoped, tag = 'scratch operand']
  #allocation3 [shape = 'bf16[128,64]{1,0:T(16,128)(2,1)}', space=vmem, size = 0x8000, scoped, tag = 'scratch operand']
  %s0 = inlined_call_operand.vmem [shape: bf16[128,4096], index: 0, kind: input, shape index: {}]
  %s1 = inlined_call_operand.vmem [shape: bf16[4096,64], index: 1, kind: input, shape index: {}]
  %s2 = inlined_call_operand.vmem [shape: f32[1,64], index: 2, kind: input, shape index: {}]
  %s3 = inlined_call_operand.vmem [shape: bf16[1024,64], index: 3, kind: input, shape index: {}]
  %s4 = inlined_call_operand.vmem [shape: f32[1,64], index: 4, kind: input, shape index: {}]
  %s5 = inlined_call_operand.vmem [shape: f32[1,64], index: 5, kind: input, shape index: {}]
  %s6 = inlined_call_operand.vmem [shape: f32[1,64], index: 6, kind: input, shape index: {}]
  %s7 = inlined_call_operand.vmem [shape: bf16[576,64], index: 7, kind: input, shape index: {}]
  %s8 = inlined_call_operand.vmem [shape: f32[1,64], index: 8, kind: input, shape index: {}]
  %s9 = inlined_call_operand.vmem [shape: f32[2,8], index: 9, kind: input, shape index: {}]
  %s10 = inlined_call_operand.vmem [shape: f32[8,64], index: 10, kind: input, shape index: {}]
  %s11 = inlined_call_operand.vmem [shape: f32[1,64], index: 11, kind: input, shape index: {}]
  %s12 = inlined_call_operand.vmem [shape: f32[64,32], index: 12, kind: input, shape index: {}]
  %s13 = inlined_call_operand.vmem [shape: f32[1,32], index: 13, kind: input, shape index: {}]
  %s14 = inlined_call_operand.vmem [shape: f32[32,5], index: 14, kind: input, shape index: {}]
  %s15 = inlined_call_operand.vmem [shape: f32[1,5], index: 15, kind: input, shape index: {}]
  %s16 = inlined_call_operand.hbm [shape: f32[2,5], index: 16, kind: output, shape index: {}]
  %s17 = sld [smem:[#allocation0]]
  $region128: #{pacman_forward.1} parent=0
    _
  %s19 = ssub.s32 1, %s17
  %s20 = scalar_select 0, %s19, %s17
  $region1: #{pacman_forward.1} parent=0
    #allocation4 [shape = 'u8[524288]{0}', space=vmem, size = 0x80000, scoped, tag = 'input window, operand 0']
    #allocation5 [shape = 'u8[1024]{0}', space=vmem, size = 0x400, scoped, tag = 'output window, operand 0, single buffered']
    #allocation6 [shape = 's32[2]{0}', space=sflag, size = 0x8, scoped, tag = 'scoped memory for pacman_forward.1']
    %21 = vsyncpa [#allocation6], 0
    loop: start=0, step=1, limit=6
    $region2: #{pacman_forward.1} parent=1 // loop_pre_header
      _
    $region3: #{pacman_forward.1} parent=1 // loop_header
      %s23 = sphi 0, %s27
      %p24 = scmp.ge.s32.totalorder %s23, 6
      %s33 = sphi 0, %s35
      %s36 = sphi 0, %s33
      %s37 = sphi 0, %s36
      %s53 = sphi 0, %s37
      %s59 = sphi 0, %s61
      %s62 = sphi 0, %s59
      %s63 = sphi 0, %s62
      %s79 = sphi 0, %s63
      %s83 = sphi 0, %s83
      %s85 = sphi 0, %s83
      %s86 = sphi 0, %s85
      %s100 = sphi 0, %s86
      %s104 = sphi 0, %s104
      %s106 = sphi 0, %s104
      %s107 = sphi 0, %s106
      %s121 = sphi 0, %s107
      %s125 = sphi 0, %s125
      %s127 = sphi 0, %s125
      %s128 = sphi 0, %s127
      %s142 = sphi 0, %s128
      %s146 = sphi 0, %s146
      %s148 = sphi 0, %s146
      %s149 = sphi 0, %s148
      %s163 = sphi 0, %s149
      %s167 = sphi 0, %s167
      %s169 = sphi 0, %s167
      %s170 = sphi 0, %s169
      %s184 = sphi 0, %s170
      %s188 = sphi 0, %s188
      %s190 = sphi 0, %s188
      %s191 = sphi 0, %s190
      %s205 = sphi 0, %s191
      %s209 = sphi 0, %s209
      %s211 = sphi 0, %s209
      %s212 = sphi 0, %s211
      %s226 = sphi 0, %s212
      %s230 = sphi 0, %s230
      %s232 = sphi 0, %s230
      %s233 = sphi 0, %s232
      %s247 = sphi 0, %s233
      %s251 = sphi 0, %s251
      %s253 = sphi 0, %s251
      %s254 = sphi 0, %s253
      %s268 = sphi 0, %s254
      %s272 = sphi 0, %s272
      %s274 = sphi 0, %s272
      %s275 = sphi 0, %s274
      %s289 = sphi 0, %s275
      %s293 = sphi 0, %s293
      %s295 = sphi 0, %s293
      %s296 = sphi 0, %s295
      %s310 = sphi 0, %s296
      %s314 = sphi 0, %s314
      %s316 = sphi 0, %s314
      %s317 = sphi 0, %s316
      %s331 = sphi 0, %s317
      %s335 = sphi 0, %s335
      %s337 = sphi 0, %s335
      %s338 = sphi 0, %s337
      %s352 = sphi 0, %s338
      %s356 = sphi 0, %s356
      %s358 = sphi 0, %s356
      %s359 = sphi 0, %s358
      %s373 = sphi 0, %s359
      %s377 = sphi 0, %s377
      %s379 = sphi 0, %s377
      %s380 = sphi 0, %s379
      %s394 = sphi 0, %s380
    $region4: #{pacman_forward.1} parent=1 // loop_header_branch
      %26 = sbr.rel (%p24) target = $region8
    $region5: #{pacman_forward.1} parent=1 // loop_body
      %s28 = ssub.s32 %s23, 1
      %s29 = ssub.s32 %s23, 2
      %s30 = sadd.s32 %s23, 1
      %s31 = ssub.s32 %s23, %s30
      %p32 = scmp.eq.s32.totalorder %s31, 0
      %s34 = sadd.s32 %s33, 1
      %s35 = scalar_select %p32, %s33, %s34
      %p38 = pneg %p32
      %p39 = scmp.eq.s32.totalorder %s23, 3
      %p40 = por %p38, %p39
      %p41 = scmp.ne.s32.totalorder %s33, %s36
      %p42 = scmp.eq.s32.totalorder %s23, 0
      %p43 = por %p41, %p42
      %p44 = scmp.ne.s32.totalorder %s33, %s36
      %p45 = scmp.eq.s32.totalorder %s28, 3
      %p46 = por %p44, %p45
      %p47 = scmp.ne.s32.totalorder %s36, %s37
      %p48 = scmp.eq.s32.totalorder %s28, 0
      %p49 = por %p47, %p48
      %p50 = scmp.ne.s32.totalorder %s36, %s37
      %p51 = scmp.eq.s32.totalorder %s29, 3
      %p52 = por %p50, %p51
      %p54 = scmp.ne.s32.totalorder %s37, %s53
      %p55 = scmp.eq.s32.totalorder %s29, 0
      %p56 = por %p54, %p55
      %s57 = ssub.s32 %s23, %s30
      %p58 = scmp.eq.s32.totalorder %s57, 0
      %s60 = sadd.s32 %s59, 1
      %s61 = scalar_select %p58, %s59, %s60
      %p64 = pneg %p58
      %p65 = scmp.eq.s32.totalorder %s23, 3
      %p66 = por %p64, %p65
      %p67 = scmp.ne.s32.totalorder %s59, %s62
      %p68 = scmp.eq.s32.totalorder %s23, 0
      %p69 = por %p67, %p68
      %p70 = scmp.ne.s32.totalorder %s59, %s62
      %p71 = scmp.eq.s32.totalorder %s28, 3
      %p72 = por %p70, %p71
      %p73 = scmp.ne.s32.totalorder %s62, %s63
      %p74 = scmp.eq.s32.totalorder %s28, 0
      %p75 = por %p73, %p74
      %p76 = scmp.ne.s32.totalorder %s62, %s63
      %p77 = scmp.eq.s32.totalorder %s29, 3
      %p78 = por %p76, %p77
      %p80 = scmp.ne.s32.totalorder %s63, %s79
      %p81 = scmp.eq.s32.totalorder %s29, 0
      %p82 = por %p80, %p81
      %s84 = sadd.s32 %s83, 1
      %p87 = scmp.eq.s32.totalorder %s23, 3
      %p88 = scmp.ne.s32.totalorder %s83, %s85
      %p89 = scmp.eq.s32.totalorder %s23, 0
      %p90 = por %p88, %p89
      %p91 = scmp.ne.s32.totalorder %s83, %s85
      %p92 = scmp.eq.s32.totalorder %s28, 3
      %p93 = por %p91, %p92
      %p94 = scmp.ne.s32.totalorder %s85, %s86
      %p95 = scmp.eq.s32.totalorder %s28, 0
      %p96 = por %p94, %p95
      %p97 = scmp.ne.s32.totalorder %s85, %s86
      %p98 = scmp.eq.s32.totalorder %s29, 3
      %p99 = por %p97, %p98
      %p101 = scmp.ne.s32.totalorder %s86, %s100
      %p102 = scmp.eq.s32.totalorder %s29, 0
      %p103 = por %p101, %p102
      %s105 = sadd.s32 %s104, 1
      %p108 = scmp.eq.s32.totalorder %s23, 3
      %p109 = scmp.ne.s32.totalorder %s104, %s106
      %p110 = scmp.eq.s32.totalorder %s23, 0
      %p111 = por %p109, %p110
      %p112 = scmp.ne.s32.totalorder %s104, %s106
      %p113 = scmp.eq.s32.totalorder %s28, 3
      %p114 = por %p112, %p113
      %p115 = scmp.ne.s32.totalorder %s106, %s107
      %p116 = scmp.eq.s32.totalorder %s28, 0
      %p117 = por %p115, %p116
      %p118 = scmp.ne.s32.totalorder %s106, %s107
      %p119 = scmp.eq.s32.totalorder %s29, 3
      %p120 = por %p118, %p119
      %p122 = scmp.ne.s32.totalorder %s107, %s121
      %p123 = scmp.eq.s32.totalorder %s29, 0
      %p124 = por %p122, %p123
      %s126 = sadd.s32 %s125, 1
      %p129 = scmp.eq.s32.totalorder %s23, 3
      %p130 = scmp.ne.s32.totalorder %s125, %s127
      %p131 = scmp.eq.s32.totalorder %s23, 0
      %p132 = por %p130, %p131
      %p133 = scmp.ne.s32.totalorder %s125, %s127
      %p134 = scmp.eq.s32.totalorder %s28, 3
      %p135 = por %p133, %p134
      %p136 = scmp.ne.s32.totalorder %s127, %s128
      %p137 = scmp.eq.s32.totalorder %s28, 0
      %p138 = por %p136, %p137
      %p139 = scmp.ne.s32.totalorder %s127, %s128
      %p140 = scmp.eq.s32.totalorder %s29, 3
      %p141 = por %p139, %p140
      %p143 = scmp.ne.s32.totalorder %s128, %s142
      %p144 = scmp.eq.s32.totalorder %s29, 0
      %p145 = por %p143, %p144
      %s147 = sadd.s32 %s146, 1
      %p150 = scmp.eq.s32.totalorder %s23, 3
      %p151 = scmp.ne.s32.totalorder %s146, %s148
      %p152 = scmp.eq.s32.totalorder %s23, 0
      %p153 = por %p151, %p152
      %p154 = scmp.ne.s32.totalorder %s146, %s148
      %p155 = scmp.eq.s32.totalorder %s28, 3
      %p156 = por %p154, %p155
      %p157 = scmp.ne.s32.totalorder %s148, %s149
      %p158 = scmp.eq.s32.totalorder %s28, 0
      %p159 = por %p157, %p158
      %p160 = scmp.ne.s32.totalorder %s148, %s149
      %p161 = scmp.eq.s32.totalorder %s29, 3
      %p162 = por %p160, %p161
      %p164 = scmp.ne.s32.totalorder %s149, %s163
      %p165 = scmp.eq.s32.totalorder %s29, 0
      %p166 = por %p164, %p165
      %s168 = sadd.s32 %s167, 1
      %p171 = scmp.eq.s32.totalorder %s23, 3
      %p172 = scmp.ne.s32.totalorder %s167, %s169
      %p173 = scmp.eq.s32.totalorder %s23, 0
      %p174 = por %p172, %p173
      %p175 = scmp.ne.s32.totalorder %s167, %s169
      %p176 = scmp.eq.s32.totalorder %s28, 3
      %p177 = por %p175, %p176
      %p178 = scmp.ne.s32.totalorder %s169, %s170
      %p179 = scmp.eq.s32.totalorder %s28, 0
      %p180 = por %p178, %p179
      %p181 = scmp.ne.s32.totalorder %s169, %s170
      %p182 = scmp.eq.s32.totalorder %s29, 3
      %p183 = por %p181, %p182
      %p185 = scmp.ne.s32.totalorder %s170, %s184
      %p186 = scmp.eq.s32.totalorder %s29, 0
      %p187 = por %p185, %p186
      %s189 = sadd.s32 %s188, 1
      %p192 = scmp.eq.s32.totalorder %s23, 3
      %p193 = scmp.ne.s32.totalorder %s188, %s190
      %p194 = scmp.eq.s32.totalorder %s23, 0
      %p195 = por %p193, %p194
      %p196 = scmp.ne.s32.totalorder %s188, %s190
      %p197 = scmp.eq.s32.totalorder %s28, 3
      %p198 = por %p196, %p197
      %p199 = scmp.ne.s32.totalorder %s190, %s191
      %p200 = scmp.eq.s32.totalorder %s28, 0
      %p201 = por %p199, %p200
      %p202 = scmp.ne.s32.totalorder %s190, %s191
      %p203 = scmp.eq.s32.totalorder %s29, 3
      %p204 = por %p202, %p203
      %p206 = scmp.ne.s32.totalorder %s191, %s205
      %p207 = scmp.eq.s32.totalorder %s29, 0
      %p208 = por %p206, %p207
      %s210 = sadd.s32 %s209, 1
      %p213 = scmp.eq.s32.totalorder %s23, 3
      %p214 = scmp.ne.s32.totalorder %s209, %s211
      %p215 = scmp.eq.s32.totalorder %s23, 0
      %p216 = por %p214, %p215
      %p217 = scmp.ne.s32.totalorder %s209, %s211
      %p218 = scmp.eq.s32.totalorder %s28, 3
      %p219 = por %p217, %p218
      %p220 = scmp.ne.s32.totalorder %s211, %s212
      %p221 = scmp.eq.s32.totalorder %s28, 0
      %p222 = por %p220, %p221
      %p223 = scmp.ne.s32.totalorder %s211, %s212
      %p224 = scmp.eq.s32.totalorder %s29, 3
      %p225 = por %p223, %p224
      %p227 = scmp.ne.s32.totalorder %s212, %s226
      %p228 = scmp.eq.s32.totalorder %s29, 0
      %p229 = por %p227, %p228
      %s231 = sadd.s32 %s230, 1
      %p234 = scmp.eq.s32.totalorder %s23, 3
      %p235 = scmp.ne.s32.totalorder %s230, %s232
      %p236 = scmp.eq.s32.totalorder %s23, 0
      %p237 = por %p235, %p236
      %p238 = scmp.ne.s32.totalorder %s230, %s232
      %p239 = scmp.eq.s32.totalorder %s28, 3
      %p240 = por %p238, %p239
      %p241 = scmp.ne.s32.totalorder %s232, %s233
      %p242 = scmp.eq.s32.totalorder %s28, 0
      %p243 = por %p241, %p242
      %p244 = scmp.ne.s32.totalorder %s232, %s233
      %p245 = scmp.eq.s32.totalorder %s29, 3
      %p246 = por %p244, %p245
      %p248 = scmp.ne.s32.totalorder %s233, %s247
      %p249 = scmp.eq.s32.totalorder %s29, 0
      %p250 = por %p248, %p249
      %s252 = sadd.s32 %s251, 1
      %p255 = scmp.eq.s32.totalorder %s23, 3
      %p256 = scmp.ne.s32.totalorder %s251, %s253
      %p257 = scmp.eq.s32.totalorder %s23, 0
      %p258 = por %p256, %p257
      %p259 = scmp.ne.s32.totalorder %s251, %s253
      %p260 = scmp.eq.s32.totalorder %s28, 3
      %p261 = por %p259, %p260
      %p262 = scmp.ne.s32.totalorder %s253, %s254
      %p263 = scmp.eq.s32.totalorder %s28, 0
      %p264 = por %p262, %p263
      %p265 = scmp.ne.s32.totalorder %s253, %s254
      %p266 = scmp.eq.s32.totalorder %s29, 3
      %p267 = por %p265, %p266
      %p269 = scmp.ne.s32.totalorder %s254, %s268
      %p270 = scmp.eq.s32.totalorder %s29, 0
      %p271 = por %p269, %p270
      %s273 = sadd.s32 %s272, 1
      %p276 = scmp.eq.s32.totalorder %s23, 3
      %p277 = scmp.ne.s32.totalorder %s272, %s274
      %p278 = scmp.eq.s32.totalorder %s23, 0
      %p279 = por %p277, %p278
      %p280 = scmp.ne.s32.totalorder %s272, %s274
      %p281 = scmp.eq.s32.totalorder %s28, 3
      %p282 = por %p280, %p281
      %p283 = scmp.ne.s32.totalorder %s274, %s275
      %p284 = scmp.eq.s32.totalorder %s28, 0
      %p285 = por %p283, %p284
      %p286 = scmp.ne.s32.totalorder %s274, %s275
      %p287 = scmp.eq.s32.totalorder %s29, 3
      %p288 = por %p286, %p287
      %p290 = scmp.ne.s32.totalorder %s275, %s289
      %p291 = scmp.eq.s32.totalorder %s29, 0
      %p292 = por %p290, %p291
      %s294 = sadd.s32 %s293, 1
      %p297 = scmp.eq.s32.totalorder %s23, 3
      %p298 = scmp.ne.s32.totalorder %s293, %s295
      %p299 = scmp.eq.s32.totalorder %s23, 0
      %p300 = por %p298, %p299
      %p301 = scmp.ne.s32.totalorder %s293, %s295
      %p302 = scmp.eq.s32.totalorder %s28, 3
      %p303 = por %p301, %p302
      %p304 = scmp.ne.s32.totalorder %s295, %s296
      %p305 = scmp.eq.s32.totalorder %s28, 0
      %p306 = por %p304, %p305
      %p307 = scmp.ne.s32.totalorder %s295, %s296
      %p308 = scmp.eq.s32.totalorder %s29, 3
      %p309 = por %p307, %p308
      %p311 = scmp.ne.s32.totalorder %s296, %s310
      %p312 = scmp.eq.s32.totalorder %s29, 0
      %p313 = por %p311, %p312
      %s315 = sadd.s32 %s314, 1
      %p318 = scmp.eq.s32.totalorder %s23, 3
      %p319 = scmp.ne.s32.totalorder %s314, %s316
      %p320 = scmp.eq.s32.totalorder %s23, 0
      %p321 = por %p319, %p320
      %p322 = scmp.ne.s32.totalorder %s314, %s316
      %p323 = scmp.eq.s32.totalorder %s28, 3
      %p324 = por %p322, %p323
      %p325 = scmp.ne.s32.totalorder %s316, %s317
      %p326 = scmp.eq.s32.totalorder %s28, 0
      %p327 = por %p325, %p326
      %p328 = scmp.ne.s32.totalorder %s316, %s317
      %p329 = scmp.eq.s32.totalorder %s29, 3
      %p330 = por %p328, %p329
      %p332 = scmp.ne.s32.totalorder %s317, %s331
      %p333 = scmp.eq.s32.totalorder %s29, 0
      %p334 = por %p332, %p333
      %s336 = sadd.s32 %s335, 1
      %p339 = scmp.eq.s32.totalorder %s23, 3
      %p340 = scmp.ne.s32.totalorder %s335, %s337
      %p341 = scmp.eq.s32.totalorder %s23, 0
      %p342 = por %p340, %p341
      %p343 = scmp.ne.s32.totalorder %s335, %s337
      %p344 = scmp.eq.s32.totalorder %s28, 3
      %p345 = por %p343, %p344
      %p346 = scmp.ne.s32.totalorder %s337, %s338
      %p347 = scmp.eq.s32.totalorder %s28, 0
      %p348 = por %p346, %p347
      %p349 = scmp.ne.s32.totalorder %s337, %s338
      %p350 = scmp.eq.s32.totalorder %s29, 3
      %p351 = por %p349, %p350
      %p353 = scmp.ne.s32.totalorder %s338, %s352
      %p354 = scmp.eq.s32.totalorder %s29, 0
      %p355 = por %p353, %p354
      %s357 = sadd.s32 %s356, 1
      %p360 = scmp.eq.s32.totalorder %s23, 3
      %p361 = scmp.ne.s32.totalorder %s356, %s358
      %p362 = scmp.eq.s32.totalorder %s23, 0
      %p363 = por %p361, %p362
      %p364 = scmp.ne.s32.totalorder %s356, %s358
      %p365 = scmp.eq.s32.totalorder %s28, 3
      %p366 = por %p364, %p365
      %p367 = scmp.ne.s32.totalorder %s358, %s359
      %p368 = scmp.eq.s32.totalorder %s28, 0
      %p369 = por %p367, %p368
      %p370 = scmp.ne.s32.totalorder %s358, %s359
      %p371 = scmp.eq.s32.totalorder %s29, 3
      %p372 = por %p370, %p371
      %p374 = scmp.ne.s32.totalorder %s359, %s373
      %p375 = scmp.eq.s32.totalorder %s29, 0
      %p376 = por %p374, %p375
      %s378 = sadd.s32 %s377, 1
      %p381 = scmp.eq.s32.totalorder %s23, 3
      %p382 = scmp.ne.s32.totalorder %s377, %s379
      %p383 = scmp.eq.s32.totalorder %s23, 0
      %p384 = por %p382, %p383
      %p385 = scmp.ne.s32.totalorder %s377, %s379
      %p386 = scmp.eq.s32.totalorder %s28, 3
      %p387 = por %p385, %p386
      %p388 = scmp.ne.s32.totalorder %s379, %s380
      %p389 = scmp.eq.s32.totalorder %s28, 0
      %p390 = por %p388, %p389
      %p391 = scmp.ne.s32.totalorder %s379, %s380
      %p392 = scmp.eq.s32.totalorder %s29, 3
      %p393 = por %p391, %p392
      %p395 = scmp.ne.s32.totalorder %s380, %s394
      %p396 = scmp.eq.s32.totalorder %s29, 0
      %p397 = por %p395, %p396
      %p398 = scmp.le.s32.totalorder 1, %s23
      %p399 = scmp.lt.s32.totalorder %s23, 5
      %p400 = pnand %p398, %p399
      %p401 = pneg %p400
      // Predicated region
      $region9: #{pacman_forward.1} parent=5 // pred_check
        _
      $region10: #{pacman_forward.1} parent=5 // pred_check_branch
        %403 = sbr.rel (%p400) target = $region12
      $region11: #{pacman_forward.1} parent=5 // pred_region
        %s404 = ssub.s32 %s23, 1
        // Predicated region
        $region13: #{pacman_forward.1} parent=11 // pred_check
          %p405 = pneg %p96
        $region14: #{pacman_forward.1} parent=11 // pred_check_branch
          %407 = sbr.rel (%p405) target = $region16
        $region15: #{pacman_forward.1} parent=11 // pred_region
          _
        $region16: #{pacman_forward.1} parent=11 // pred_fallthru
          _
        // Predicated region
        $region17: #{pacman_forward.1} parent=11 // pred_check
          %p408 = pneg %p117
        $region18: #{pacman_forward.1} parent=11 // pred_check_branch
          %410 = sbr.rel (%p408) target = $region20
        $region19: #{pacman_forward.1} parent=11 // pred_region
          _
        $region20: #{pacman_forward.1} parent=11 // pred_fallthru
          _
        // Predicated region
        $region21: #{pacman_forward.1} parent=11 // pred_check
          %p411 = pneg %p138
        $region22: #{pacman_forward.1} parent=11 // pred_check_branch
          %413 = sbr.rel (%p411) target = $region24
        $region23: #{pacman_forward.1} parent=11 // pred_region
          _
        $region24: #{pacman_forward.1} parent=11 // pred_fallthru
          _
        // Predicated region
        $region25: #{pacman_forward.1} parent=11 // pred_check
          %p414 = pneg %p159
        $region26: #{pacman_forward.1} parent=11 // pred_check_branch
          %416 = sbr.rel (%p414) target = $region28
        $region27: #{pacman_forward.1} parent=11 // pred_region
          _
        $region28: #{pacman_forward.1} parent=11 // pred_fallthru
          _
        // Predicated region
        $region29: #{pacman_forward.1} parent=11 // pred_check
          %p417 = pneg %p180
        $region30: #{pacman_forward.1} parent=11 // pred_check_branch
          %419 = sbr.rel (%p417) target = $region32
        $region31: #{pacman_forward.1} parent=11 // pred_region
          _
        $region32: #{pacman_forward.1} parent=11 // pred_fallthru
          _
        // Predicated region
        $region33: #{pacman_forward.1} parent=11 // pred_check
          %p420 = pneg %p201
        $region34: #{pacman_forward.1} parent=11 // pred_check_branch
          %422 = sbr.rel (%p420) target = $region36
        $region35: #{pacman_forward.1} parent=11 // pred_region
          _
        $region36: #{pacman_forward.1} parent=11 // pred_fallthru
          _
        // Predicated region
        $region37: #{pacman_forward.1} parent=11 // pred_check
          %p423 = pneg %p222
        $region38: #{pacman_forward.1} parent=11 // pred_check_branch
          %425 = sbr.rel (%p423) target = $region40
        $region39: #{pacman_forward.1} parent=11 // pred_region
          _
        $region40: #{pacman_forward.1} parent=11 // pred_fallthru
          _
        // Predicated region
        $region41: #{pacman_forward.1} parent=11 // pred_check
          %p426 = pneg %p243
        $region42: #{pacman_forward.1} parent=11 // pred_check_branch
          %428 = sbr.rel (%p426) target = $region44
        $region43: #{pacman_forward.1} parent=11 // pred_region
          _
        $region44: #{pacman_forward.1} parent=11 // pred_fallthru
          _
        // Predicated region
        $region45: #{pacman_forward.1} parent=11 // pred_check
          %p429 = pneg %p264
        $region46: #{pacman_forward.1} parent=11 // pred_check_branch
          %431 = sbr.rel (%p429) target = $region48
        $region47: #{pacman_forward.1} parent=11 // pred_region
          _
        $region48: #{pacman_forward.1} parent=11 // pred_fallthru
          _
        // Predicated region
        $region49: #{pacman_forward.1} parent=11 // pred_check
          %p432 = pneg %p285
        $region50: #{pacman_forward.1} parent=11 // pred_check_branch
          %434 = sbr.rel (%p432) target = $region52
        $region51: #{pacman_forward.1} parent=11 // pred_region
          _
        $region52: #{pacman_forward.1} parent=11 // pred_fallthru
          _
        // Predicated region
        $region53: #{pacman_forward.1} parent=11 // pred_check
          %p435 = pneg %p306
        $region54: #{pacman_forward.1} parent=11 // pred_check_branch
          %437 = sbr.rel (%p435) target = $region56
        $region55: #{pacman_forward.1} parent=11 // pred_region
          _
        $region56: #{pacman_forward.1} parent=11 // pred_fallthru
          _
        // Predicated region
        $region57: #{pacman_forward.1} parent=11 // pred_check
          %p438 = pneg %p327
        $region58: #{pacman_forward.1} parent=11 // pred_check_branch
          %440 = sbr.rel (%p438) target = $region60
        $region59: #{pacman_forward.1} parent=11 // pred_region
          _
        $region60: #{pacman_forward.1} parent=11 // pred_fallthru
          _
        // Predicated region
        $region61: #{pacman_forward.1} parent=11 // pred_check
          %p441 = pneg %p348
        $region62: #{pacman_forward.1} parent=11 // pred_check_branch
          %443 = sbr.rel (%p441) target = $region64
        $region63: #{pacman_forward.1} parent=11 // pred_region
          _
        $region64: #{pacman_forward.1} parent=11 // pred_fallthru
          _
        // Predicated region
        $region65: #{pacman_forward.1} parent=11 // pred_check
          %p444 = pneg %p369
        $region66: #{pacman_forward.1} parent=11 // pred_check_branch
          %446 = sbr.rel (%p444) target = $region68
        $region67: #{pacman_forward.1} parent=11 // pred_region
          _
        $region68: #{pacman_forward.1} parent=11 // pred_fallthru
          _
      $region12: #{pacman_forward.1} parent=5 // pred_fallthru
        _
      %p447 = scmp.lt.s32.totalorder %s23, 4
      // Predicated region
      $region69: #{pacman_forward.1} parent=5 // pred_check
        %p448 = pneg %p447
      $region70: #{pacman_forward.1} parent=5 // pred_check_branch
        %450 = sbr.rel (%p448) target = $region72
      $region71: #{pacman_forward.1} parent=5 // pred_region
        // Predicated region
        $region73: #{pacman_forward.1} parent=71 // pred_check
          %p451 = pneg %p43
        $region74: #{pacman_forward.1} parent=71 // pred_check_branch
          %453 = sbr.rel (%p451) target = $region76
        $region75: #{pacman_forward.1} parent=71 // pred_region
          %s454 = sand.u32 %s33, 1
          %s455 = sand.u32 %s33, 1
          %s456 = smul.addr %s455, 512
          %s457 = scalar_lea.vmem [#allocation4], %s456
          %s458 = smul.u32 8, %s23
          %s459 = smul.addr %s458, 4
          %s460 = scalar_lea.vmem %s0, %s459
          // Predicated region
          $region77: #{pacman_forward.1} parent=75 // pred_check
            _
          $region78: #{pacman_forward.1} parent=75 // pred_check_branch
            %462 = sbr.rel (0) target = $region80
          $region79: #{pacman_forward.1} parent=75 // pred_region
            // Predicated region
            $region81: #{pacman_forward.1} parent=79 // pred_check
              _
            $region82: #{pacman_forward.1} parent=79 // pred_check_branch
              %464 = sbr.rel (0) target = $region84
            $region83: #{pacman_forward.1} parent=79 // pred_region
              loop: start=0, step=1, limit=1
              $region85: #{pacman_forward.1} parent=83 // loop_pre_header
                _
              $region86: #{pacman_forward.1} parent=83 // loop_header
                %s466 = sphi 0, %s470
                %p467 = scmp.ge.s32.totalorder %s466, 1
                %s471 = sphi %s460, %s460
                %s472 = sphi %s457, %s457
              $region87: #{pacman_forward.1} parent=83 // loop_header_branch
                %469 = sbr.rel (%p467) target = $region91
              $region88: #{pacman_forward.1} parent=83 // loop_body
                %v473 = vld [vmem:[%s471] sm:$0xff]
                %474 = vst [vmem:[%s472] sm:$0xff] %v473
                %v475 = vld [vmem:[%s471 + $0x8] sm:$0xff]
                %476 = vst [vmem:[%s472 + $0x8] sm:$0xff] %v475
                %v477 = vld [vmem:[%s471 + $0x10] sm:$0xff]
                %478 = vst [vmem:[%s472 + $0x10] sm:$0xff] %v477
                %v479 = vld [vmem:[%s471 + $0x18] sm:$0xff]
                %480 = vst [vmem:[%s472 + $0x18] sm:$0xff] %v479
                %v481 = vld [vmem:[%s471 + $0x80] sm:$0xff]
                %482 = vst [vmem:[%s472 + $0x20] sm:$0xff] %v481
                %v483 = vld [vmem:[%s471 + $0x88] sm:$0xff]
                %484 = vst [vmem:[%s472 + $0x28] sm:$0xff] %v483
                %v485 = vld [vmem:[%s471 + $0x90] sm:$0xff]
                %486 = vst [vmem:[%s472 + $0x30] sm:$0xff] %v485
                %v487 = vld [vmem:[%s471 + $0x98] sm:$0xff]
                %488 = vst [vmem:[%s472 + $0x38] sm:$0xff] %v487
                %v489 = vld [vmem:[%s471 + $0x100] sm:$0xff]
                %490 = vst [vmem:[%s472 + $0x40] sm:$0xff] %v489
                %v491 = vld [vmem:[%s471 + $0x108] sm:$0xff]
                %492 = vst [vmem:[%s472 + $0x48] sm:$0xff] %v491
                %v493 = vld [vmem:[%s471 + $0x110] sm:$0xff]
                %494 = vst [vmem:[%s472 + $0x50] sm:$0xff] %v493
                %v495 = vld [vmem:[%s471 + $0x118] sm:$0xff]
                %496 = vst [vmem:[%s472 + $0x58] sm:$0xff] %v495
                %v497 = vld [vmem:[%s471 + $0x180] sm:$0xff]
                %498 = vst [vmem:[%s472 + $0x60] sm:$0xff] %v497
                %v499 = vld [vmem:[%s471 + $0x188] sm:$0xff]
                %500 = vst [vmem:[%s472 + $0x68] sm:$0xff] %v499
                %v501 = vld [vmem:[%s471 + $0x190] sm:$0xff]
                %502 = vst [vmem:[%s472 + $0x70] sm:$0xff] %v501
                %v503 = vld [vmem:[%s471 + $0x198] sm:$0xff]
                %504 = vst [vmem:[%s472 + $0x78] sm:$0xff] %v503
                %v505 = vld [vmem:[%s471 + $0x200] sm:$0xff]
                %506 = vst [vmem:[%s472 + $0x80] sm:$0xff] %v505
                %v507 = vld [vmem:[%s471 + $0x208] sm:$0xff]
                %508 = vst [vmem:[%s472 + $0x88] sm:$0xff] %v507
                %v509 = vld [vmem:[%s471 + $0x210] sm:$0xff]
                %510 = vst [vmem:[%s472 + $0x90] sm:$0xff] %v509
                %v511 = vld [vmem:[%s471 + $0x218] sm:$0xff]
                %512 = vst [vmem:[%s472 + $0x98] sm:$0xff] %v511
                %v513 = vld [vmem:[%s471 + $0x280] sm:$0xff]
                %514 = vst [vmem:[%s472 + $0xa0] sm:$0xff] %v513
                %v515 = vld [vmem:[%s471 + $0x288] sm:$0xff]
                %516 = vst [vmem:[%s472 + $0xa8] sm:$0xff] %v515
                %v517 = vld [vmem:[%s471 + $0x290] sm:$0xff]
                %518 = vst [vmem:[%s472 + $0xb0] sm:$0xff] %v517
                %v519 = vld [vmem:[%s471 + $0x298] sm:$0xff]
                %520 = vst [vmem:[%s472 + $0xb8] sm:$0xff] %v519
                %v521 = vld [vmem:[%s471 + $0x300] sm:$0xff]
                %522 = vst [vmem:[%s472 + $0xc0] sm:$0xff] %v521
                %v523 = vld [vmem:[%s471 + $0x308] sm:$0xff]
                %524 = vst [vmem:[%s472 + $0xc8] sm:$0xff] %v523
                %v525 = vld [vmem:[%s471 + $0x310] sm:$0xff]
                %526 = vst [vmem:[%s472 + $0xd0] sm:$0xff] %v525
                %v527 = vld [vmem:[%s471 + $0x318] sm:$0xff]
                %528 = vst [vmem:[%s472 + $0xd8] sm:$0xff] %v527
                %v529 = vld [vmem:[%s471 + $0x380] sm:$0xff]
                %530 = vst [vmem:[%s472 + $0xe0] sm:$0xff] %v529
                %v531 = vld [vmem:[%s471 + $0x388] sm:$0xff]
                %532 = vst [vmem:[%s472 + $0xe8] sm:$0xff] %v531
                %v533 = vld [vmem:[%s471 + $0x390] sm:$0xff]
                %534 = vst [vmem:[%s472 + $0xf0] sm:$0xff] %v533
                %v535 = vld [vmem:[%s471 + $0x398] sm:$0xff]
                %536 = vst [vmem:[%s472 + $0xf8] sm:$0xff] %v535
                %v537 = vld [vmem:[%s471 + $0x400] sm:$0xff]
                %538 = vst [vmem:[%s472 + $0x100] sm:$0xff] %v537
                %v539 = vld [vmem:[%s471 + $0x408] sm:$0xff]
                %540 = vst [vmem:[%s472 + $0x108] sm:$0xff] %v539
                %v541 = vld [vmem:[%s471 + $0x410] sm:$0xff]
                %542 = vst [vmem:[%s472 + $0x110] sm:$0xff] %v541
                %v543 = vld [vmem:[%s471 + $0x418] sm:$0xff]
                %544 = vst [vmem:[%s472 + $0x118] sm:$0xff] %v543
                %v545 = vld [vmem:[%s471 + $0x480] sm:$0xff]
                %546 = vst [vmem:[%s472 + $0x120] sm:$0xff] %v545
                %v547 = vld [vmem:[%s471 + $0x488] sm:$0xff]
                %548 = vst [vmem:[%s472 + $0x128] sm:$0xff] %v547
                %v549 = vld [vmem:[%s471 + $0x490] sm:$0xff]
                %550 = vst [vmem:[%s472 + $0x130] sm:$0xff] %v549
                %v551 = vld [vmem:[%s471 + $0x498] sm:$0xff]
                %552 = vst [vmem:[%s472 + $0x138] sm:$0xff] %v551
                %v553 = vld [vmem:[%s471 + $0x500] sm:$0xff]
                %554 = vst [vmem:[%s472 + $0x140] sm:$0xff] %v553
                %v555 = vld [vmem:[%s471 + $0x508] sm:$0xff]
                %556 = vst [vmem:[%s472 + $0x148] sm:$0xff] %v555
                %v557 = vld [vmem:[%s471 + $0x510] sm:$0xff]
                %558 = vst [vmem:[%s472 + $0x150] sm:$0xff] %v557
                %v559 = vld [vmem:[%s471 + $0x518] sm:$0xff]
                %560 = vst [vmem:[%s472 + $0x158] sm:$0xff] %v559
                %v561 = vld [vmem:[%s471 + $0x580] sm:$0xff]
                %562 = vst [vmem:[%s472 + $0x160] sm:$0xff] %v561
                %v563 = vld [vmem:[%s471 + $0x588] sm:$0xff]
                %564 = vst [vmem:[%s472 + $0x168] sm:$0xff] %v563
                %v565 = vld [vmem:[%s471 + $0x590] sm:$0xff]
                %566 = vst [vmem:[%s472 + $0x170] sm:$0xff] %v565
                %v567 = vld [vmem:[%s471 + $0x598] sm:$0xff]
                %568 = vst [vmem:[%s472 + $0x178] sm:$0xff] %v567
                %v569 = vld [vmem:[%s471 + $0x600] sm:$0xff]
                %570 = vst [vmem:[%s472 + $0x180] sm:$0xff] %v569
                %v571 = vld [vmem:[%s471 + $0x608] sm:$0xff]
                %572 = vst [vmem:[%s472 + $0x188] sm:$0xff] %v571
                %v573 = vld [vmem:[%s471 + $0x610] sm:$0xff]
                %574 = vst [vmem:[%s472 + $0x190] sm:$0xff] %v573
                %v575 = vld [vmem:[%s471 + $0x618] sm:$0xff]
                %576 = vst [vmem:[%s472 + $0x198] sm:$0xff] %v575
                %v577 = vld [vmem:[%s471 + $0x680] sm:$0xff]
                %578 = vst [vmem:[%s472 + $0x1a0] sm:$0xff] %v577
                %v579 = vld [vmem:[%s471 + $0x688] sm:$0xff]
                %580 = vst [vmem:[%s472 + $0x1a8] sm:$0xff] %v579
                %v581 = vld [vmem:[%s471 + $0x690] sm:$0xff]
                %582 = vst [vmem:[%s472 + $0x1b0] sm:$0xff] %v581
                %v583 = vld [vmem:[%s471 + $0x698] sm:$0xff]
                %584 = vst [vmem:[%s472 + $0x1b8] sm:$0xff] %v583
                %v585 = vld [vmem:[%s471 + $0x700] sm:$0xff]
                %586 = vst [vmem:[%s472 + $0x1c0] sm:$0xff] %v585
                %v587 = vld [vmem:[%s471 + $0x708] sm:$0xff]
                %588 = vst [vmem:[%s472 + $0x1c8] sm:$0xff] %v587
                %v589 = vld [vmem:[%s471 + $0x710] sm:$0xff]
                %590 = vst [vmem:[%s472 + $0x1d0] sm:$0xff] %v589
                %v591 = vld [vmem:[%s471 + $0x718] sm:$0xff]
                %592 = vst [vmem:[%s472 + $0x1d8] sm:$0xff] %v591
                %v593 = vld [vmem:[%s471 + $0x780] sm:$0xff]
                %594 = vst [vmem:[%s472 + $0x1e0] sm:$0xff] %v593
                %v595 = vld [vmem:[%s471 + $0x788] sm:$0xff]
                %596 = vst [vmem:[%s472 + $0x1e8] sm:$0xff] %v595
                %v597 = vld [vmem:[%s471 + $0x790] sm:$0xff]
                %598 = vst [vmem:[%s472 + $0x1f0] sm:$0xff] %v597
                %v599 = vld [vmem:[%s471 + $0x798] sm:$0xff]
                %600 = vst [vmem:[%s472 + $0x1f8] sm:$0xff] %v599
              $region89: #{pacman_forward.1} parent=83 // loop_footer
                %s470 = sadd.s32 1, %s466
              $region90: #{pacman_forward.1} parent=83 // loop_footer_branch
                %465 = sbr.rel target = $region86
              $region91: #{pacman_forward.1} parent=83 // loop_exit
                _
            $region84: #{pacman_forward.1} parent=79 // pred_fallthru
              _
            // Predicated region
            $region92: #{pacman_forward.1} parent=79 // pred_check
              _
            $region93: #{pacman_forward.1} parent=79 // pred_check_branch
              %602 = sbr.rel target = $region95
            $region94: #{pacman_forward.1} parent=79 // pred_region
              _
            $region95: #{pacman_forward.1} parent=79 // pred_fallthru
              _
          $region80: #{pacman_forward.1} parent=75 // pred_fallthru
            _
          %603 = vnop
        $region76: #{pacman_forward.1} parent=71 // pred_fallthru
          _
        // Predicated region
        $region96: #{pacman_forward.1} parent=71 // pred_check
          %p604 = pneg %p69
        $region97: #{pacman_forward.1} parent=71 // pred_check_branch
          %606 = sbr.rel (%p604) target = $region99
        $region98: #{pacman_forward.1} parent=71 // pred_region
          %s607 = smul.u32 128, %s23
          %p608 = scmp.lt.s32.totalorder %s607, 511
          %s609 = scalar_select %p608, %s607, 511
          %s610 = smul.addr %s609, 4
          %s611 = scalar_lea.vmem %s1, %s610
          %s612 = smul.u32 128, %s23
        $region99: #{pacman_forward.1} parent=71 // pred_fallthru
          _
      $region72: #{pacman_forward.1} parent=5 // pred_fallthru
        _
      %p613 = scmp.le.s32.totalorder 1, %s23
      %p614 = scmp.lt.s32.totalorder %s23, 5
      %p615 = pnand %p613, %p614
      %p616 = pneg %p615
      // Predicated region
      $region100: #{pacman_forward.1} parent=5 // pred_check
        _
      $region101: #{pacman_forward.1} parent=5 // pred_check_branch
        %618 = sbr.rel (%p615) target = $region103
      $region102: #{pacman_forward.1} parent=5 // pred_region
        %s619 = ssub.s32 %s23, 1
        %s620 = sand.u32 %s36, 1
        %s621 = sand.u32 %s36, 1
        %s622 = smul.addr %s621, 512
        %s623 = scalar_lea.vmem [#allocation4], %s622
        // Predicated region
        $region104: #{pacman_forward.1} parent=102 // pred_check
          %p624 = pneg %p49
        $region105: #{pacman_forward.1} parent=102 // pred_check_branch
          %626 = sbr.rel (%p624) target = $region107
        $region106: #{pacman_forward.1} parent=102 // pred_region
          _
        $region107: #{pacman_forward.1} parent=102 // pred_fallthru
          _
        %s627 = sand.u32 %s36, 1
        %s628 = sand.u32 %s36, 1
        %s629 = smul.addr %s628, 512
        %s630 = scalar_lea.vmem [#allocation4], %s629
        %p631 = pneg %p49
        %p632 = pneg %p46
        %s633 = smul.u32 128, %s28
        %p634 = scmp.lt.s32.totalorder %s633, 511
        %s635 = scalar_select %p634, %s633, 511
        %s636 = smul.addr %s635, 4
        %s637 = scalar_lea.vmem %s1, %s636
        %p638 = pneg %p75
        %p639 = pneg %p72
        %p640 = pneg %p96
        %p641 = pneg %p93
        %p642 = pneg %p117
        %p643 = pneg %p114
        %p644 = pneg %p138
        %p645 = pneg %p135
        %p646 = pneg %p159
        %p647 = pneg %p156
        %p648 = pneg %p180
        %p649 = pneg %p177
        %p650 = pneg %p201
        %p651 = pneg %p198
        %p652 = pneg %p222
        %p653 = pneg %p219
        %p654 = pneg %p243
        %p655 = pneg %p240
        %p656 = pneg %p264
        %p657 = pneg %p261
        %p658 = pneg %p285
        %p659 = pneg %p282
        %p660 = pneg %p306
        %p661 = pneg %p303
        %p662 = pneg %p327
        %p663 = pneg %p324
        %p664 = pneg %p348
        %p665 = pneg %p345
        %p666 = pneg %p369
        %p667 = pneg %p366
        %p668 = pneg %p390
        %p669 = pneg %p387
        %s670 = smul.u32 8, %s28
        %s671 = smul.u32 128, %s28
        %p672 = scmp.lt.s32.totalorder %s671, 511
        %s673 = scalar_select %p672, %s671, 511
        %s674 = smul.addr %s673, 4
        %s675 = scalar_lea.vmem %s1, %s674
        %s676 = smul.u32 128, %s28
        %p678 = scmp.eq.s32.totalorder %s28, 0
        // Predicated region
        $region108: #{pacman_forward.1} parent=102 // pred_check
          %p679 = pneg %p678
        $region109: #{pacman_forward.1} parent=102 // pred_check_branch
          %681 = sbr.rel (%p679) target = $region111
        $region110: #{pacman_forward.1} parent=102 // pred_region
          %vm682 = vcmask 523264
          %683 = vst.msk [vmem:[#allocation2] sm:$0xff] %vm682, 0.0
          %684 = vst.msk [vmem:[#allocation2 + $0x8] sm:$0xff] %vm682, 0.0
          %685 = vst.msk [vmem:[#allocation2 + $0x10] sm:$0xff] %vm682, 0.0
          %686 = vst.msk [vmem:[#allocation2 + $0x18] sm:$0xff] %vm682, 0.0
          %687 = vst.msk [vmem:[#allocation2 + $0x20] sm:$0xff] %vm682, 0.0
          %688 = vst.msk [vmem:[#allocation2 + $0x28] sm:$0xff] %vm682, 0.0
          %689 = vst.msk [vmem:[#allocation2 + $0x30] sm:$0xff] %vm682, 0.0
          %690 = vst.msk [vmem:[#allocation2 + $0x38] sm:$0xff] %vm682, 0.0
          %691 = vst.msk [vmem:[#allocation2 + $0x40] sm:$0xff] %vm682, 0.0
          %692 = vst.msk [vmem:[#allocation2 + $0x48] sm:$0xff] %vm682, 0.0
          %693 = vst.msk [vmem:[#allocation2 + $0x50] sm:$0xff] %vm682, 0.0
          %694 = vst.msk [vmem:[#allocation2 + $0x58] sm:$0xff] %vm682, 0.0
          %695 = vst.msk [vmem:[#allocation2 + $0x60] sm:$0xff] %vm682, 0.0
          %696 = vst.msk [vmem:[#allocation2 + $0x68] sm:$0xff] %vm682, 0.0
          %697 = vst.msk [vmem:[#allocation2 + $0x70] sm:$0xff] %vm682, 0.0
          %698 = vst.msk [vmem:[#allocation2 + $0x78] sm:$0xff] %vm682, 0.0
        $region111: #{pacman_forward.1} parent=102 // pred_fallthru
          _
        %v699 = vld [vmem:[#allocation2] sm:$0xff]
        %v700 = vld [vmem:[#allocation2 + $0x8] sm:$0xff]
        %v701 = vld [vmem:[#allocation2 + $0x10] sm:$0xff]
        %v702 = vld [vmem:[#allocation2 + $0x18] sm:$0xff]
        %v703 = vld [vmem:[#allocation2 + $0x20] sm:$0xff]
        %v704 = vld [vmem:[#allocation2 + $0x28] sm:$0xff]
        %v705 = vld [vmem:[#allocation2 + $0x30] sm:$0xff]
        %v706 = vld [vmem:[#allocation2 + $0x38] sm:$0xff]
        %v707 = vld [vmem:[#allocation2 + $0x40] sm:$0xff]
        %v708 = vld [vmem:[#allocation2 + $0x48] sm:$0xff]
        %v709 = vld [vmem:[#allocation2 + $0x50] sm:$0xff]
        %v710 = vld [vmem:[#allocation2 + $0x58] sm:$0xff]
        %v711 = vld [vmem:[#allocation2 + $0x60] sm:$0xff]
        %v712 = vld [vmem:[#allocation2 + $0x68] sm:$0xff]
        %v713 = vld [vmem:[#allocation2 + $0x70] sm:$0xff]
        %v714 = vld [vmem:[#allocation2 + $0x78] sm:$0xff]
        %v715 = vld [vmem:[%s623] sm:$0xff]
        %v716 = vld [vmem:[%s623 + $0x8] sm:$0xff]
        %v717 = vld [vmem:[%s623 + $0x10] sm:$0xff]
        %v718 = vld [vmem:[%s623 + $0x18] sm:$0xff]
        %v719 = vld [vmem:[%s623 + $0x20] sm:$0xff]
        %v720 = vld [vmem:[%s623 + $0x28] sm:$0xff]
        %v721 = vld [vmem:[%s623 + $0x30] sm:$0xff]
        %v722 = vld [vmem:[%s623 + $0x38] sm:$0xff]
        %v723 = vld [vmem:[%s623 + $0x40] sm:$0xff]
        %v724 = vld [vmem:[%s623 + $0x48] sm:$0xff]
        %v725 = vld [vmem:[%s623 + $0x50] sm:$0xff]
        %v726 = vld [vmem:[%s623 + $0x58] sm:$0xff]
        %v727 = vld [vmem:[%s623 + $0x60] sm:$0xff]
        %v728 = vld [vmem:[%s623 + $0x68] sm:$0xff]
        %v729 = vld [vmem:[%s623 + $0x70] sm:$0xff]
        %v730 = vld [vmem:[%s623 + $0x78] sm:$0xff]
        %v731 = vld [vmem:[%s623 + $0x80] sm:$0xff]
        %v732 = vld [vmem:[%s623 + $0x88] sm:$0xff]
        %v733 = vld [vmem:[%s623 + $0x90] sm:$0xff]
        %v734 = vld [vmem:[%s623 + $0x98] sm:$0xff]
        %v735 = vld [vmem:[%s623 + $0xa0] sm:$0xff]
        %v736 = vld [vmem:[%s623 + $0xa8] sm:$0xff]
        %v737 = vld [vmem:[%s623 + $0xb0] sm:$0xff]
        %v738 = vld [vmem:[%s623 + $0xb8] sm:$0xff]
        %v739 = vld [vmem:[%s623 + $0xc0] sm:$0xff]
        %v740 = vld [vmem:[%s623 + $0xc8] sm:$0xff]
        %v741 = vld [vmem:[%s623 + $0xd0] sm:$0xff]
        %v742 = vld [vmem:[%s623 + $0xd8] sm:$0xff]
        %v743 = vld [vmem:[%s623 + $0xe0] sm:$0xff]
        %v744 = vld [vmem:[%s623 + $0xe8] sm:$0xff]
        %v745 = vld [vmem:[%s623 + $0xf0] sm:$0xff]
        %v746 = vld [vmem:[%s623 + $0xf8] sm:$0xff]
        %v747 = vld [vmem:[%s623 + $0x100] sm:$0xff]
        %v748 = vld [vmem:[%s623 + $0x108] sm:$0xff]
        %v749 = vld [vmem:[%s623 + $0x110] sm:$0xff]
        %v750 = vld [vmem:[%s623 + $0x118] sm:$0xff]
        %v751 = vld [vmem:[%s623 + $0x120] sm:$0xff]
        %v752 = vld [vmem:[%s623 + $0x128] sm:$0xff]
        %v753 = vld [vmem:[%s623 + $0x130] sm:$0xff]
        %v754 = vld [vmem:[%s623 + $0x138] sm:$0xff]
        %v755 = vld [vmem:[%s623 + $0x140] sm:$0xff]
        %v756 = vld [vmem:[%s623 + $0x148] sm:$0xff]
        %v757 = vld [vmem:[%s623 + $0x150] sm:$0xff]
        %v758 = vld [vmem:[%s623 + $0x158] sm:$0xff]
        %v759 = vld [vmem:[%s623 + $0x160] sm:$0xff]
        %v760 = vld [vmem:[%s623 + $0x168] sm:$0xff]
        %v761 = vld [vmem:[%s623 + $0x170] sm:$0xff]
        %v762 = vld [vmem:[%s623 + $0x178] sm:$0xff]
        %v763 = vld [vmem:[%s623 + $0x180] sm:$0xff]
        %v764 = vld [vmem:[%s623 + $0x188] sm:$0xff]
        %v765 = vld [vmem:[%s623 + $0x190] sm:$0xff]
        %v766 = vld [vmem:[%s623 + $0x198] sm:$0xff]
        %v767 = vld [vmem:[%s623 + $0x1a0] sm:$0xff]
        %v768 = vld [vmem:[%s623 + $0x1a8] sm:$0xff]
        %v769 = vld [vmem:[%s623 + $0x1b0] sm:$0xff]
        %v770 = vld [vmem:[%s623 + $0x1b8] sm:$0xff]
        %v771 = vld [vmem:[%s623 + $0x1c0] sm:$0xff]
        %v772 = vld [vmem:[%s623 + $0x1c8] sm:$0xff]
        %v773 = vld [vmem:[%s623 + $0x1d0] sm:$0xff]
        %v774 = vld [vmem:[%s623 + $0x1d8] sm:$0xff]
        %v775 = vld [vmem:[%s623 + $0x1e0] sm:$0xff]
        %v776 = vld [vmem:[%s623 + $0x1e8] sm:$0xff]
        %v777 = vld [vmem:[%s623 + $0x1f0] sm:$0xff]
        %v778 = vld [vmem:[%s623 + $0x1f8] sm:$0xff]
        %v779 = vld [vmem:[%s675] sm:$0xf]
        %v780 = vld [vmem:[%s675 + $0x4] sm:$0xf]
        %v781 = vld [vmem:[%s675 + $0x8] sm:$0xf]
        %v782 = vld [vmem:[%s675 + $0xc] sm:$0xf]
        %v783 = vld [vmem:[%s675 + $0x10] sm:$0xf]
        %v784 = vld [vmem:[%s675 + $0x14] sm:$0xf]
        %v785 = vld [vmem:[%s675 + $0x18] sm:$0xf]
        %v786 = vld [vmem:[%s675 + $0x1c] sm:$0xf]
        %v787 = vld [vmem:[%s675 + $0x20] sm:$0xf]
        %v788 = vld [vmem:[%s675 + $0x24] sm:$0xf]
        %v789 = vld [vmem:[%s675 + $0x28] sm:$0xf]
        %v790 = vld [vmem:[%s675 + $0x2c] sm:$0xf]
        %v791 = vld [vmem:[%s675 + $0x30] sm:$0xf]
        %v792 = vld [vmem:[%s675 + $0x34] sm:$0xf]
        %v793 = vld [vmem:[%s675 + $0x38] sm:$0xf]
        %v794 = vld [vmem:[%s675 + $0x3c] sm:$0xf]
        %v795 = vld [vmem:[%s675 + $0x40] sm:$0xf]
        %v796 = vld [vmem:[%s675 + $0x44] sm:$0xf]
        %v797 = vld [vmem:[%s675 + $0x48] sm:$0xf]
        %v798 = vld [vmem:[%s675 + $0x4c] sm:$0xf]
        %v799 = vld [vmem:[%s675 + $0x50] sm:$0xf]
        %v800 = vld [vmem:[%s675 + $0x54] sm:$0xf]
        %v801 = vld [vmem:[%s675 + $0x58] sm:$0xf]
        %v802 = vld [vmem:[%s675 + $0x5c] sm:$0xf]
        %v803 = vld [vmem:[%s675 + $0x60] sm:$0xf]
        %v804 = vld [vmem:[%s675 + $0x64] sm:$0xf]
        %v805 = vld [vmem:[%s675 + $0x68] sm:$0xf]
        %v806 = vld [vmem:[%s675 + $0x6c] sm:$0xf]
        %v807 = vld [vmem:[%s675 + $0x70] sm:$0xf]
        %v808 = vld [vmem:[%s675 + $0x74] sm:$0xf]
        %v809 = vld [vmem:[%s675 + $0x78] sm:$0xf]
        %v810 = vld [vmem:[%s675 + $0x7c] sm:$0xf]
        %v811 = vld [vmem:[%s675 + $0x80] sm:$0xf]
        %v812 = vld [vmem:[%s675 + $0x84] sm:$0xf]
        %v813 = vld [vmem:[%s675 + $0x88] sm:$0xf]
        %v814 = vld [vmem:[%s675 + $0x8c] sm:$0xf]
        %v815 = vld [vmem:[%s675 + $0x90] sm:$0xf]
        %v816 = vld [vmem:[%s675 + $0x94] sm:$0xf]
        %v817 = vld [vmem:[%s675 + $0x98] sm:$0xf]
        %v818 = vld [vmem:[%s675 + $0x9c] sm:$0xf]
        %v819 = vld [vmem:[%s675 + $0xa0] sm:$0xf]
        %v820 = vld [vmem:[%s675 + $0xa4] sm:$0xf]
        %v821 = vld [vmem:[%s675 + $0xa8] sm:$0xf]
        %v822 = vld [vmem:[%s675 + $0xac] sm:$0xf]
        %v823 = vld [vmem:[%s675 + $0xb0] sm:$0xf]
        %v824 = vld [vmem:[%s675 + $0xb4] sm:$0xf]
        %v825 = vld [vmem:[%s675 + $0xb8] sm:$0xf]
        %v826 = vld [vmem:[%s675 + $0xbc] sm:$0xf]
        %v827 = vld [vmem:[%s675 + $0xc0] sm:$0xf]
        %v828 = vld [vmem:[%s675 + $0xc4] sm:$0xf]
        %v829 = vld [vmem:[%s675 + $0xc8] sm:$0xf]
        %v830 = vld [vmem:[%s675 + $0xcc] sm:$0xf]
        %v831 = vld [vmem:[%s675 + $0xd0] sm:$0xf]
        %v832 = vld [vmem:[%s675 + $0xd4] sm:$0xf]
        %v833 = vld [vmem:[%s675 + $0xd8] sm:$0xf]
        %v834 = vld [vmem:[%s675 + $0xdc] sm:$0xf]
        %v835 = vld [vmem:[%s675 + $0xe0] sm:$0xf]
        %v836 = vld [vmem:[%s675 + $0xe4] sm:$0xf]
        %v837 = vld [vmem:[%s675 + $0xe8] sm:$0xf]
        %v838 = vld [vmem:[%s675 + $0xec] sm:$0xf]
        %v839 = vld [vmem:[%s675 + $0xf0] sm:$0xf]
        %v840 = vld [vmem:[%s675 + $0xf4] sm:$0xf]
        %v841 = vld [vmem:[%s675 + $0xf8] sm:$0xf]
        %v842 = vld [vmem:[%s675 + $0xfc] sm:$0xf]
        %v843 = vld [vmem:[%s675 + $0x100] sm:$0xf]
        %v844 = vld [vmem:[%s675 + $0x104] sm:$0xf]
        %v845 = vld [vmem:[%s675 + $0x108] sm:$0xf]
        %v846 = vld [vmem:[%s675 + $0x10c] sm:$0xf]
        %v847 = vld [vmem:[%s675 + $0x110] sm:$0xf]
        %v848 = vld [vmem:[%s675 + $0x114] sm:$0xf]
        %v849 = vld [vmem:[%s675 + $0x118] sm:$0xf]
        %v850 = vld [vmem:[%s675 + $0x11c] sm:$0xf]
        %v851 = vld [vmem:[%s675 + $0x120] sm:$0xf]
        %v852 = vld [vmem:[%s675 + $0x124] sm:$0xf]
        %v853 = vld [vmem:[%s675 + $0x128] sm:$0xf]
        %v854 = vld [vmem:[%s675 + $0x12c] sm:$0xf]
        %v855 = vld [vmem:[%s675 + $0x130] sm:$0xf]
        %v856 = vld [vmem:[%s675 + $0x134] sm:$0xf]
        %v857 = vld [vmem:[%s675 + $0x138] sm:$0xf]
        %v858 = vld [vmem:[%s675 + $0x13c] sm:$0xf]
        %v859 = vld [vmem:[%s675 + $0x140] sm:$0xf]
        %v860 = vld [vmem:[%s675 + $0x144] sm:$0xf]
        %v861 = vld [vmem:[%s675 + $0x148] sm:$0xf]
        %v862 = vld [vmem:[%s675 + $0x14c] sm:$0xf]
        %v863 = vld [vmem:[%s675 + $0x150] sm:$0xf]
        %v864 = vld [vmem:[%s675 + $0x154] sm:$0xf]
        %v865 = vld [vmem:[%s675 + $0x158] sm:$0xf]
        %v866 = vld [vmem:[%s675 + $0x15c] sm:$0xf]
        %v867 = vld [vmem:[%s675 + $0x160] sm:$0xf]
        %v868 = vld [vmem:[%s675 + $0x164] sm:$0xf]
        %v869 = vld [vmem:[%s675 + $0x168] sm:$0xf]
        %v870 = vld [vmem:[%s675 + $0x16c] sm:$0xf]
        %v871 = vld [vmem:[%s675 + $0x170] sm:$0xf]
        %v872 = vld [vmem:[%s675 + $0x174] sm:$0xf]
        %v873 = vld [vmem:[%s675 + $0x178] sm:$0xf]
        %v874 = vld [vmem:[%s675 + $0x17c] sm:$0xf]
        %v875 = vld [vmem:[%s675 + $0x180] sm:$0xf]
        %v876 = vld [vmem:[%s675 + $0x184] sm:$0xf]
        %v877 = vld [vmem:[%s675 + $0x188] sm:$0xf]
        %v878 = vld [vmem:[%s675 + $0x18c] sm:$0xf]
        %v879 = vld [vmem:[%s675 + $0x190] sm:$0xf]
        %v880 = vld [vmem:[%s675 + $0x194] sm:$0xf]
        %v881 = vld [vmem:[%s675 + $0x198] sm:$0xf]
        %v882 = vld [vmem:[%s675 + $0x19c] sm:$0xf]
        %v883 = vld [vmem:[%s675 + $0x1a0] sm:$0xf]
        %v884 = vld [vmem:[%s675 + $0x1a4] sm:$0xf]
        %v885 = vld [vmem:[%s675 + $0x1a8] sm:$0xf]
        %v886 = vld [vmem:[%s675 + $0x1ac] sm:$0xf]
        %v887 = vld [vmem:[%s675 + $0x1b0] sm:$0xf]
        %v888 = vld [vmem:[%s675 + $0x1b4] sm:$0xf]
        %v889 = vld [vmem:[%s675 + $0x1b8] sm:$0xf]
        %v890 = vld [vmem:[%s675 + $0x1bc] sm:$0xf]
        %v891 = vld [vmem:[%s675 + $0x1c0] sm:$0xf]
        %v892 = vld [vmem:[%s675 + $0x1c4] sm:$0xf]
        %v893 = vld [vmem:[%s675 + $0x1c8] sm:$0xf]
        %v894 = vld [vmem:[%s675 + $0x1cc] sm:$0xf]
        %v895 = vld [vmem:[%s675 + $0x1d0] sm:$0xf]
        %v896 = vld [vmem:[%s675 + $0x1d4] sm:$0xf]
        %v897 = vld [vmem:[%s675 + $0x1d8] sm:$0xf]
        %v898 = vld [vmem:[%s675 + $0x1dc] sm:$0xf]
        %v899 = vld [vmem:[%s675 + $0x1e0] sm:$0xf]
        %v900 = vld [vmem:[%s675 + $0x1e4] sm:$0xf]
        %v901 = vld [vmem:[%s675 + $0x1e8] sm:$0xf]
        %v902 = vld [vmem:[%s675 + $0x1ec] sm:$0xf]
        %v903 = vld [vmem:[%s675 + $0x1f0] sm:$0xf]
        %v904 = vld [vmem:[%s675 + $0x1f4] sm:$0xf]
        %v905 = vld [vmem:[%s675 + $0x1f8] sm:$0xf]
        %v906 = vld [vmem:[%s675 + $0x1fc] sm:$0xf]
        %v971 = vunpack.c.l.b16 %v715
        %v972 = vunpack.c.h.b16 %v715
        %v973 = vunpack.c.l.b16 %v716
        %v974 = vunpack.c.h.b16 %v716
        %v975 = vunpack.c.l.b16 %v717
        %v976 = vunpack.c.h.b16 %v717
        %v977 = vunpack.c.l.b16 %v718
        %v978 = vunpack.c.h.b16 %v718
        %v979 = vunpack.c.l.b16 %v719
        %v980 = vunpack.c.h.b16 %v719
        %v981 = vunpack.c.l.b16 %v720
        %v982 = vunpack.c.h.b16 %v720
        %v983 = vunpack.c.l.b16 %v721
        %v984 = vunpack.c.h.b16 %v721
        %v985 = vunpack.c.l.b16 %v722
        %v986 = vunpack.c.h.b16 %v722
        %v987 = vunpack.c.l.b16 %v723
        %v988 = vunpack.c.h.b16 %v723
        %v989 = vunpack.c.l.b16 %v724
        %v990 = vunpack.c.h.b16 %v724
        %v991 = vunpack.c.l.b16 %v725
        %v992 = vunpack.c.h.b16 %v725
        %v993 = vunpack.c.l.b16 %v726
        %v994 = vunpack.c.h.b16 %v726
        %v995 = vunpack.c.l.b16 %v727
        %v996 = vunpack.c.h.b16 %v727
        %v997 = vunpack.c.l.b16 %v728
        %v998 = vunpack.c.h.b16 %v728
        %v999 = vunpack.c.l.b16 %v729
        %v1000 = vunpack.c.h.b16 %v729
        %v1001 = vunpack.c.l.b16 %v730
        %v1002 = vunpack.c.h.b16 %v730
        %v1003 = vunpack.c.l.b16 %v731
        %v1004 = vunpack.c.h.b16 %v731
        %v1005 = vunpack.c.l.b16 %v732
        %v1006 = vunpack.c.h.b16 %v732
        %v1007 = vunpack.c.l.b16 %v733
        %v1008 = vunpack.c.h.b16 %v733
        %v1009 = vunpack.c.l.b16 %v734
        %v1010 = vunpack.c.h.b16 %v734
        %v1011 = vunpack.c.l.b16 %v735
        %v1012 = vunpack.c.h.b16 %v735
        %v1013 = vunpack.c.l.b16 %v736
        %v1014 = vunpack.c.h.b16 %v736
        %v1015 = vunpack.c.l.b16 %v737
        %v1016 = vunpack.c.h.b16 %v737
        %v1017 = vunpack.c.l.b16 %v738
        %v1018 = vunpack.c.h.b16 %v738
        %v1019 = vunpack.c.l.b16 %v739
        %v1020 = vunpack.c.h.b16 %v739
        %v1021 = vunpack.c.l.b16 %v740
        %v1022 = vunpack.c.h.b16 %v740
        %v1023 = vunpack.c.l.b16 %v741
        %v1024 = vunpack.c.h.b16 %v741
        %v1025 = vunpack.c.l.b16 %v742
        %v1026 = vunpack.c.h.b16 %v742
        %v1027 = vunpack.c.l.b16 %v743
        %v1028 = vunpack.c.h.b16 %v743
        %v1029 = vunpack.c.l.b16 %v744
        %v1030 = vunpack.c.h.b16 %v744
        %v1031 = vunpack.c.l.b16 %v745
        %v1032 = vunpack.c.h.b16 %v745
        %v1033 = vunpack.c.l.b16 %v746
        %v1034 = vunpack.c.h.b16 %v746
        %v1035 = vunpack.c.l.b16 %v747
        %v1036 = vunpack.c.h.b16 %v747
        %v1037 = vunpack.c.l.b16 %v748
        %v1038 = vunpack.c.h.b16 %v748
        %v1039 = vunpack.c.l.b16 %v749
        %v1040 = vunpack.c.h.b16 %v749
        %v1041 = vunpack.c.l.b16 %v750
        %v1042 = vunpack.c.h.b16 %v750
        %v1043 = vunpack.c.l.b16 %v751
        %v1044 = vunpack.c.h.b16 %v751
        %v1045 = vunpack.c.l.b16 %v752
        %v1046 = vunpack.c.h.b16 %v752
        %v1047 = vunpack.c.l.b16 %v753
        %v1048 = vunpack.c.h.b16 %v753
        %v1049 = vunpack.c.l.b16 %v754
        %v1050 = vunpack.c.h.b16 %v754
        %v1051 = vunpack.c.l.b16 %v755
        %v1052 = vunpack.c.h.b16 %v755
        %v1053 = vunpack.c.l.b16 %v756
        %v1054 = vunpack.c.h.b16 %v756
        %v1055 = vunpack.c.l.b16 %v757
        %v1056 = vunpack.c.h.b16 %v757
        %v1057 = vunpack.c.l.b16 %v758
        %v1058 = vunpack.c.h.b16 %v758
        %v1059 = vunpack.c.l.b16 %v759
        %v1060 = vunpack.c.h.b16 %v759
        %v1061 = vunpack.c.l.b16 %v760
        %v1062 = vunpack.c.h.b16 %v760
        %v1063 = vunpack.c.l.b16 %v761
        %v1064 = vunpack.c.h.b16 %v761
        %v1065 = vunpack.c.l.b16 %v762
        %v1066 = vunpack.c.h.b16 %v762
        %v1067 = vunpack.c.l.b16 %v763
        %v1068 = vunpack.c.h.b16 %v763
        %v1069 = vunpack.c.l.b16 %v764
        %v1070 = vunpack.c.h.b16 %v764
        %v1071 = vunpack.c.l.b16 %v765
        %v1072 = vunpack.c.h.b16 %v765
        %v1073 = vunpack.c.l.b16 %v766
        %v1074 = vunpack.c.h.b16 %v766
        %v1075 = vunpack.c.l.b16 %v767
        %v1076 = vunpack.c.h.b16 %v767
        %v1077 = vunpack.c.l.b16 %v768
        %v1078 = vunpack.c.h.b16 %v768
        %v1079 = vunpack.c.l.b16 %v769
        %v1080 = vunpack.c.h.b16 %v769
        %v1081 = vunpack.c.l.b16 %v770
        %v1082 = vunpack.c.h.b16 %v770
        %v1083 = vunpack.c.l.b16 %v771
        %v1084 = vunpack.c.h.b16 %v771
        %v1085 = vunpack.c.l.b16 %v772
        %v1086 = vunpack.c.h.b16 %v772
        %v1087 = vunpack.c.l.b16 %v773
        %v1088 = vunpack.c.h.b16 %v773
        %v1089 = vunpack.c.l.b16 %v774
        %v1090 = vunpack.c.h.b16 %v774
        %v1091 = vunpack.c.l.b16 %v775
        %v1092 = vunpack.c.h.b16 %v775
        %v1093 = vunpack.c.l.b16 %v776
        %v1094 = vunpack.c.h.b16 %v776
        %v1095 = vunpack.c.l.b16 %v777
        %v1096 = vunpack.c.h.b16 %v777
        %v1097 = vunpack.c.l.b16 %v778
        %v1098 = vunpack.c.h.b16 %v778
        %v1099 = vpack.c.b16 %v979, %v971
        %v1100 = vpack.c.b16 %v980, %v972
        %v1101 = vpack.c.b16 %v981, %v973
        %v1102 = vpack.c.b16 %v982, %v974
        %v1103 = vpack.c.b16 %v983, %v975
        %v1104 = vpack.c.b16 %v984, %v976
        %v1105 = vpack.c.b16 %v985, %v977
        %v1106 = vpack.c.b16 %v986, %v978
        %v1107 = vpack.c.b16 %v995, %v987
        %v1108 = vpack.c.b16 %v996, %v988
        %v1109 = vpack.c.b16 %v997, %v989
        %v1110 = vpack.c.b16 %v998, %v990
        %v1111 = vpack.c.b16 %v999, %v991
        %v1112 = vpack.c.b16 %v1000, %v992
        %v1113 = vpack.c.b16 %v1001, %v993
        %v1114 = vpack.c.b16 %v1002, %v994
        %v1115 = vpack.c.b16 %v1011, %v1003
        %v1116 = vpack.c.b16 %v1012, %v1004
        %v1117 = vpack.c.b16 %v1013, %v1005
        %v1118 = vpack.c.b16 %v1014, %v1006
        %v1119 = vpack.c.b16 %v1015, %v1007
        %v1120 = vpack.c.b16 %v1016, %v1008
        %v1121 = vpack.c.b16 %v1017, %v1009
        %v1122 = vpack.c.b16 %v1018, %v1010
        %v1123 = vpack.c.b16 %v1027, %v1019
        %v1124 = vpack.c.b16 %v1028, %v1020
        %v1125 = vpack.c.b16 %v1029, %v1021
        %v1126 = vpack.c.b16 %v1030, %v1022
        %v1127 = vpack.c.b16 %v1031, %v1023
        %v1128 = vpack.c.b16 %v1032, %v1024
        %v1129 = vpack.c.b16 %v1033, %v1025
        %v1130 = vpack.c.b16 %v1034, %v1026
        %v1131 = vpack.c.b16 %v1043, %v1035
        %v1132 = vpack.c.b16 %v1044, %v1036
        %v1133 = vpack.c.b16 %v1045, %v1037
        %v1134 = vpack.c.b16 %v1046, %v1038
        %v1135 = vpack.c.b16 %v1047, %v1039
        %v1136 = vpack.c.b16 %v1048, %v1040
        %v1137 = vpack.c.b16 %v1049, %v1041
        %v1138 = vpack.c.b16 %v1050, %v1042
        %v1139 = vpack.c.b16 %v1059, %v1051
        %v1140 = vpack.c.b16 %v1060, %v1052
        %v1141 = vpack.c.b16 %v1061, %v1053
        %v1142 = vpack.c.b16 %v1062, %v1054
        %v1143 = vpack.c.b16 %v1063, %v1055
        %v1144 = vpack.c.b16 %v1064, %v1056
        %v1145 = vpack.c.b16 %v1065, %v1057
        %v1146 = vpack.c.b16 %v1066, %v1058
        %v1147 = vpack.c.b16 %v1075, %v1067
        %v1148 = vpack.c.b16 %v1076, %v1068
        %v1149 = vpack.c.b16 %v1077, %v1069
        %v1150 = vpack.c.b16 %v1078, %v1070
        %v1151 = vpack.c.b16 %v1079, %v1071
        %v1152 = vpack.c.b16 %v1080, %v1072
        %v1153 = vpack.c.b16 %v1081, %v1073
        %v1154 = vpack.c.b16 %v1082, %v1074
        %v1155 = vpack.c.b16 %v1091, %v1083
        %v1156 = vpack.c.b16 %v1092, %v1084
        %v1157 = vpack.c.b16 %v1093, %v1085
        %v1158 = vpack.c.b16 %v1094, %v1086
        %v1159 = vpack.c.b16 %v1095, %v1087
        %v1160 = vpack.c.b16 %v1096, %v1088
        %v1161 = vpack.c.b16 %v1097, %v1089
        %v1162 = vpack.c.b16 %v1098, %v1090
        %v1355 = vunpack.c.l.b16 %v779
        %v1356 = vunpack.c.l.b16 %v780
        %v1357 = vunpack.c.l.b16 %v781
        %v1358 = vunpack.c.l.b16 %v782
        %v1359 = vunpack.c.l.b16 %v783
        %v1360 = vunpack.c.l.b16 %v784
        %v1361 = vunpack.c.l.b16 %v785
        %v1362 = vunpack.c.l.b16 %v786
        %v1363 = vunpack.c.l.b16 %v787
        %v1364 = vunpack.c.l.b16 %v788
        %v1365 = vunpack.c.l.b16 %v789
        %v1366 = vunpack.c.l.b16 %v790
        %v1367 = vunpack.c.l.b16 %v791
        %v1368 = vunpack.c.l.b16 %v792
        %v1369 = vunpack.c.l.b16 %v793
        %v1370 = vunpack.c.l.b16 %v794
        %v1371 = vunpack.c.l.b16 %v795
        %v1372 = vunpack.c.l.b16 %v796
        %v1373 = vunpack.c.l.b16 %v797
        %v1374 = vunpack.c.l.b16 %v798
        %v1375 = vunpack.c.l.b16 %v799
        %v1376 = vunpack.c.l.b16 %v800
        %v1377 = vunpack.c.l.b16 %v801
        %v1378 = vunpack.c.l.b16 %v802
        %v1379 = vunpack.c.l.b16 %v803
        %v1380 = vunpack.c.l.b16 %v804
        %v1381 = vunpack.c.l.b16 %v805
        %v1382 = vunpack.c.l.b16 %v806
        %v1383 = vunpack.c.l.b16 %v807
        %v1384 = vunpack.c.l.b16 %v808
        %v1385 = vunpack.c.l.b16 %v809
        %v1386 = vunpack.c.l.b16 %v810
        %v1387 = vunpack.c.l.b16 %v811
        %v1388 = vunpack.c.l.b16 %v812
        %v1389 = vunpack.c.l.b16 %v813
        %v1390 = vunpack.c.l.b16 %v814
        %v1391 = vunpack.c.l.b16 %v815
        %v1392 = vunpack.c.l.b16 %v816
        %v1393 = vunpack.c.l.b16 %v817
        %v1394 = vunpack.c.l.b16 %v818
        %v1395 = vunpack.c.l.b16 %v819
        %v1396 = vunpack.c.l.b16 %v820
        %v1397 = vunpack.c.l.b16 %v821
        %v1398 = vunpack.c.l.b16 %v822
        %v1399 = vunpack.c.l.b16 %v823
        %v1400 = vunpack.c.l.b16 %v824
        %v1401 = vunpack.c.l.b16 %v825
        %v1402 = vunpack.c.l.b16 %v826
        %v1403 = vunpack.c.l.b16 %v827
        %v1404 = vunpack.c.l.b16 %v828
        %v1405 = vunpack.c.l.b16 %v829
        %v1406 = vunpack.c.l.b16 %v830
        %v1407 = vunpack.c.l.b16 %v831
        %v1408 = vunpack.c.l.b16 %v832
        %v1409 = vunpack.c.l.b16 %v833
        %v1410 = vunpack.c.l.b16 %v834
        %v1411 = vunpack.c.l.b16 %v835
        %v1412 = vunpack.c.l.b16 %v836
        %v1413 = vunpack.c.l.b16 %v837
        %v1414 = vunpack.c.l.b16 %v838
        %v1415 = vunpack.c.l.b16 %v839
        %v1416 = vunpack.c.l.b16 %v840
        %v1417 = vunpack.c.l.b16 %v841
        %v1418 = vunpack.c.l.b16 %v842
        %v1419 = vunpack.c.l.b16 %v843
        %v1420 = vunpack.c.l.b16 %v844
        %v1421 = vunpack.c.l.b16 %v845
        %v1422 = vunpack.c.l.b16 %v846
        %v1423 = vunpack.c.l.b16 %v847
        %v1424 = vunpack.c.l.b16 %v848
        %v1425 = vunpack.c.l.b16 %v849
        %v1426 = vunpack.c.l.b16 %v850
        %v1427 = vunpack.c.l.b16 %v851
        %v1428 = vunpack.c.l.b16 %v852
        %v1429 = vunpack.c.l.b16 %v853
        %v1430 = vunpack.c.l.b16 %v854
        %v1431 = vunpack.c.l.b16 %v855
        %v1432 = vunpack.c.l.b16 %v856
        %v1433 = vunpack.c.l.b16 %v857
        %v1434 = vunpack.c.l.b16 %v858
        %v1435 = vunpack.c.l.b16 %v859
        %v1436 = vunpack.c.l.b16 %v860
        %v1437 = vunpack.c.l.b16 %v861
        %v1438 = vunpack.c.l.b16 %v862
        %v1439 = vunpack.c.l.b16 %v863
        %v1440 = vunpack.c.l.b16 %v864
        %v1441 = vunpack.c.l.b16 %v865
        %v1442 = vunpack.c.l.b16 %v866
        %v1443 = vunpack.c.l.b16 %v867
        %v1444 = vunpack.c.l.b16 %v868
        %v1445 = vunpack.c.l.b16 %v869
        %v1446 = vunpack.c.l.b16 %v870
        %v1447 = vunpack.c.l.b16 %v871
        %v1448 = vunpack.c.l.b16 %v872
        %v1449 = vunpack.c.l.b16 %v873
        %v1450 = vunpack.c.l.b16 %v874
        %v1451 = vunpack.c.l.b16 %v875
        %v1452 = vunpack.c.l.b16 %v876
        %v1453 = vunpack.c.l.b16 %v877
        %v1454 = vunpack.c.l.b16 %v878
        %v1455 = vunpack.c.l.b16 %v879
        %v1456 = vunpack.c.l.b16 %v880
        %v1457 = vunpack.c.l.b16 %v881
        %v1458 = vunpack.c.l.b16 %v882
        %v1459 = vunpack.c.l.b16 %v883
        %v1460 = vunpack.c.l.b16 %v884
        %v1461 = vunpack.c.l.b16 %v885
        %v1462 = vunpack.c.l.b16 %v886
        %v1463 = vunpack.c.l.b16 %v887
        %v1464 = vunpack.c.l.b16 %v888
        %v1465 = vunpack.c.l.b16 %v889
        %v1466 = vunpack.c.l.b16 %v890
        %v1467 = vunpack.c.l.b16 %v891
        %v1468 = vunpack.c.l.b16 %v892
        %v1469 = vunpack.c.l.b16 %v893
        %v1470 = vunpack.c.l.b16 %v894
        %v1471 = vunpack.c.l.b16 %v895
        %v1472 = vunpack.c.l.b16 %v896
        %v1473 = vunpack.c.l.b16 %v897
        %v1474 = vunpack.c.l.b16 %v898
        %v1475 = vunpack.c.l.b16 %v899
        %v1476 = vunpack.c.l.b16 %v900
        %v1477 = vunpack.c.l.b16 %v901
        %v1478 = vunpack.c.l.b16 %v902
        %v1479 = vunpack.c.l.b16 %v903
        %v1480 = vunpack.c.l.b16 %v904
        %v1481 = vunpack.c.l.b16 %v905
        %v1482 = vunpack.c.l.b16 %v906
        %v1483 = vpack.c.b16 %v1356, %v1355
        %v1484 = vpack.c.b16 %v1358, %v1357
        %v1485 = vpack.c.b16 %v1360, %v1359
        %v1486 = vpack.c.b16 %v1362, %v1361
        %v1487 = vpack.c.b16 %v1364, %v1363
        %v1488 = vpack.c.b16 %v1366, %v1365
        %v1489 = vpack.c.b16 %v1368, %v1367
        %v1490 = vpack.c.b16 %v1370, %v1369
        %v1491 = vpack.c.b16 %v1372, %v1371
        %v1492 = vpack.c.b16 %v1374, %v1373
        %v1493 = vpack.c.b16 %v1376, %v1375
        %v1494 = vpack.c.b16 %v1378, %v1377
        %v1495 = vpack.c.b16 %v1380, %v1379
        %v1496 = vpack.c.b16 %v1382, %v1381
        %v1497 = vpack.c.b16 %v1384, %v1383
        %v1498 = vpack.c.b16 %v1386, %v1385
        %v1499 = vpack.c.b16 %v1388, %v1387
        %v1500 = vpack.c.b16 %v1390, %v1389
        %v1501 = vpack.c.b16 %v1392, %v1391
        %v1502 = vpack.c.b16 %v1394, %v1393
        %v1503 = vpack.c.b16 %v1396, %v1395
        %v1504 = vpack.c.b16 %v1398, %v1397
        %v1505 = vpack.c.b16 %v1400, %v1399
        %v1506 = vpack.c.b16 %v1402, %v1401
        %v1507 = vpack.c.b16 %v1404, %v1403
        %v1508 = vpack.c.b16 %v1406, %v1405
        %v1509 = vpack.c.b16 %v1408, %v1407
        %v1510 = vpack.c.b16 %v1410, %v1409
        %v1511 = vpack.c.b16 %v1412, %v1411
        %v1512 = vpack.c.b16 %v1414, %v1413
        %v1513 = vpack.c.b16 %v1416, %v1415
        %v1514 = vpack.c.b16 %v1418, %v1417
        %v1515 = vpack.c.b16 %v1420, %v1419
        %v1516 = vpack.c.b16 %v1422, %v1421
        %v1517 = vpack.c.b16 %v1424, %v1423
        %v1518 = vpack.c.b16 %v1426, %v1425
        %v1519 = vpack.c.b16 %v1428, %v1427
        %v1520 = vpack.c.b16 %v1430, %v1429
        %v1521 = vpack.c.b16 %v1432, %v1431
        %v1522 = vpack.c.b16 %v1434, %v1433
        %v1523 = vpack.c.b16 %v1436, %v1435
        %v1524 = vpack.c.b16 %v1438, %v1437
        %v1525 = vpack.c.b16 %v1440, %v1439
        %v1526 = vpack.c.b16 %v1442, %v1441
        %v1527 = vpack.c.b16 %v1444, %v1443
        %v1528 = vpack.c.b16 %v1446, %v1445
        %v1529 = vpack.c.b16 %v1448, %v1447
        %v1530 = vpack.c.b16 %v1450, %v1449
        %v1531 = vpack.c.b16 %v1452, %v1451
        %v1532 = vpack.c.b16 %v1454, %v1453
        %v1533 = vpack.c.b16 %v1456, %v1455
        %v1534 = vpack.c.b16 %v1458, %v1457
        %v1535 = vpack.c.b16 %v1460, %v1459
        %v1536 = vpack.c.b16 %v1462, %v1461
        %v1537 = vpack.c.b16 %v1464, %v1463
        %v1538 = vpack.c.b16 %v1466, %v1465
        %v1539 = vpack.c.b16 %v1468, %v1467
        %v1540 = vpack.c.b16 %v1470, %v1469
        %v1541 = vpack.c.b16 %v1472, %v1471
        %v1542 = vpack.c.b16 %v1474, %v1473
        %v1543 = vpack.c.b16 %v1476, %v1475
        %v1544 = vpack.c.b16 %v1478, %v1477
        %v1545 = vpack.c.b16 %v1480, %v1479
        %v1546 = vpack.c.b16 %v1482, %v1481
        %1611 = vmatprep.subr.bf16.mxu0 0
        %1612 = vmatpush1.bf16.msra.mxu0 %v1483
        %1613 = vmatprep.subr.bf16.mxu0 0
        %1614 = vmatpush1.bf16.msra.mxu0 %v1484
        %1615 = vmatprep.subr.bf16.mxu0 0
        %1616 = vmatpush1.bf16.msra.mxu0 %v1485
        %1617 = vmatprep.subr.bf16.mxu0 0
        %1618 = vmatpush1.bf16.msra.mxu0 %v1486
        %1619 = vmatprep.subr.bf16.mxu0 0
        %1620 = vmatpush1.bf16.msra.mxu0 %v1487
        %1621 = vmatprep.subr.bf16.mxu0 0
        %1622 = vmatpush1.bf16.msra.mxu0 %v1488
        %1623 = vmatprep.subr.bf16.mxu0 0
        %1624 = vmatpush1.bf16.msra.mxu0 %v1489
        %1625 = vmatprep.subr.bf16.mxu0 0
        %1626 = vmatpush1.bf16.msra.mxu0 %v1490
        %1627 = vmatprep.subr.bf16.mxu0 0
        %1628 = vmatpush1.bf16.msra.mxu0 %v1491
        %1629 = vmatprep.subr.bf16.mxu0 0
        %1630 = vmatpush1.bf16.msra.mxu0 %v1492
        %1631 = vmatprep.subr.bf16.mxu0 0
        %1632 = vmatpush1.bf16.msra.mxu0 %v1493
        %1633 = vmatprep.subr.bf16.mxu0 0
        %1634 = vmatpush1.bf16.msra.mxu0 %v1494
        %1635 = vmatprep.subr.bf16.mxu0 0
        %1636 = vmatpush1.bf16.msra.mxu0 %v1495
        %1637 = vmatprep.subr.bf16.mxu0 0
        %1638 = vmatpush1.bf16.msra.mxu0 %v1496
        %1639 = vmatprep.subr.bf16.mxu0 0
        %1640 = vmatpush1.bf16.msra.mxu0 %v1497
        %1641 = vmatprep.subr.bf16.mxu0 0
        %1642 = vmatpush1.bf16.msra.mxu0 %v1498
        %1643 = vmatprep.mubr.bf16.mxu0 %v1100
        %1644 = vmatmul.mubr.bf16.gmra.mrb[0].mxu0 %v1099
        %v1645 = vpop.f32.mrb[0].mxu0
        %v1646 = vadd.f32 0.0, %v1645
        %v1647 = vpop.f32.mrb[0].mxu0
        %v1648 = vpop.f32.mrb[0].mxu0
        %v1649 = vadd.f32 0.0, %v1648
        %v1650 = vpop.f32.mrb[0].mxu0
        %1651 = vmatprep.mubr.bf16.mxu0 %v1108
        %1652 = vmatmul.mubr.bf16.gmra.mrb[0].mxu0 %v1107
        %v1653 = vpop.f32.mrb[0].mxu0
        %v1654 = vadd.f32 0.0, %v1653
        %v1655 = vpop.f32.mrb[0].mxu0
        %v1656 = vpop.f32.mrb[0].mxu0
        %v1657 = vadd.f32 0.0, %v1656
        %v1658 = vpop.f32.mrb[0].mxu0
        %1659 = vmatprep.mubr.bf16.mxu0 %v1116
        %1660 = vmatmul.mubr.bf16.gmra.mrb[0].mxu0 %v1115
        %v1661 = vpop.f32.mrb[0].mxu0
        %v1662 = vadd.f32 0.0, %v1661
        %v1663 = vpop.f32.mrb[0].mxu0
        %v1664 = vpop.f32.mrb[0].mxu0
        %v1665 = vadd.f32 0.0, %v1664
        %v1666 = vpop.f32.mrb[0].mxu0
        %1667 = vmatprep.mubr.bf16.mxu0 %v1124
        %1668 = vmatmul.mubr.bf16.gmra.mrb[0].mxu0 %v1123
        %v1669 = vpop.f32.mrb[0].mxu0
        %v1670 = vadd.f32 0.0, %v1669
        %v1671 = vpop.f32.mrb[0].mxu0
        %v1672 = vpop.f32.mrb[0].mxu0
        %v1673 = vadd.f32 0.0, %v1672
        %v1674 = vpop.f32.mrb[0].mxu0
        %1675 = vmatprep.mubr.bf16.mxu0 %v1132
        %1676 = vmatmul.mubr.bf16.gmra.mrb[0].mxu0 %v1131
        %v1677 = vpop.f32.mrb[0].mxu0
        %v1678 = vadd.f32 0.0, %v1677
        %v1679 = vpop.f32.mrb[0].mxu0
        %v1680 = vpop.f32.mrb[0].mxu0
        %v1681 = vadd.f32 0.0, %v1680
        %v1682 = vpop.f32.mrb[0].mxu0
        %1683 = vmatprep.mubr.bf16.mxu0 %v1140
        %1684 = vmatmul.mubr.bf16.gmra.mrb[0].mxu0 %v1139
        %v1685 = vpop.f32.mrb[0].mxu0
        %v1686 = vadd.f32 0.0, %v1685
        %v1687 = vpop.f32.mrb[0].mxu0
        %v1688 = vpop.f32.mrb[0].mxu0
        %v1689 = vadd.f32 0.0, %v1688
        %v1690 = vpop.f32.mrb[0].mxu0
        %1691 = vmatprep.mubr.bf16.mxu0 %v1148
        %1692 = vmatmul.mubr.bf16.gmra.mrb[0].mxu0 %v1147
        %v1693 = vpop.f32.mrb[0].mxu0
        %v1694 = vadd.f32 0.0, %v1693
        %v1695 = vpop.f32.mrb[0].mxu0
        %v1696 = vpop.f32.mrb[0].mxu0
        %v1697 = vadd.f32 0.0, %v1696
        %v1698 = vpop.f32.mrb[0].mxu0
        %1699 = vmatprep.mubr.bf16.mxu0 %v1156
        %1700 = vmatmul.mubr.bf16.gmra.mrb[0].mxu0 %v1155
        %v1701 = vpop.f32.mrb[0].mxu0
        %v1702 = vadd.f32 0.0, %v1701
        %v1703 = vpop.f32.mrb[0].mxu0
        %v1704 = vpop.f32.mrb[0].mxu0
        %v1705 = vadd.f32 0.0, %v1704
        %v1706 = vpop.f32.mrb[0].mxu0
        %1707 = vdwg.mxu0
        %1708 = vmatprep.subr.bf16.mxu0 0
        %1709 = vmatpush1.bf16.msra.mxu0 %v1499
        %1710 = vmatprep.subr.bf16.mxu0 0
        %1711 = vmatpush1.bf16.msra.mxu0 %v1500
        %1712 = vmatprep.subr.bf16.mxu0 0
        %1713 = vmatpush1.bf16.msra.mxu0 %v1501
        %1714 = vmatprep.subr.bf16.mxu0 0
        %1715 = vmatpush1.bf16.msra.mxu0 %v1502
        %1716 = vmatprep.subr.bf16.mxu0 0
        %1717 = vmatpush1.bf16.msra.mxu0 %v1503
        %1718 = vmatprep.subr.bf16.mxu0 0
        %1719 = vmatpush1.bf16.msra.mxu0 %v1504
        %1720 = vmatprep.subr.bf16.mxu0 0
        %1721 = vmatpush1.bf16.msra.mxu0 %v1505
        %1722 = vmatprep.subr.bf16.mxu0 0
        %1723 = vmatpush1.bf16.msra.mxu0 %v1506
        %1724 = vmatprep.subr.bf16.mxu0 0
        %1725 = vmatpush1.bf16.msra.mxu0 %v1507
        %1726 = vmatprep.subr.bf16.mxu0 0
        %1727 = vmatpush1.bf16.msra.mxu0 %v1508
        %1728 = vmatprep.subr.bf16.mxu0 0
        %1729 = vmatpush1.bf16.msra.mxu0 %v1509
        %1730 = vmatprep.subr.bf16.mxu0 0
        %1731 = vmatpush1.bf16.msra.mxu0 %v1510
        %1732 = vmatprep.subr.bf16.mxu0 0
        %1733 = vmatpush1.bf16.msra.mxu0 %v1511
        %1734 = vmatprep.subr.bf16.mxu0 0
        %1735 = vmatpush1.bf16.msra.mxu0 %v1512
        %1736 = vmatprep.subr.bf16.mxu0 0
        %1737 = vmatpush1.bf16.msra.mxu0 %v1513
        %1738 = vmatprep.subr.bf16.mxu0 0
        %1739 = vmatpush1.bf16.msra.mxu0 %v1514
        %1740 = vmatprep.mubr.bf16.mxu0 %v1102
        %1741 = vmatmul.mubr.bf16.gmra.mrb[0].mxu0 %v1101
        %v1742 = vpop.f32.mrb[0].mxu0
        %v1743 = vadd.f32 %v1646, %v1742
        %v1744 = vpop.f32.mrb[0].mxu0
        %v1745 = vpop.f32.mrb[0].mxu0
        %v1746 = vadd.f32 %v1649, %v1745
        %v1747 = vpop.f32.mrb[0].mxu0
        %1748 = vmatprep.mubr.bf16.mxu0 %v1110
        %1749 = vmatmul.mubr.bf16.gmra.mrb[0].mxu0 %v1109
        %v1750 = vpop.f32.mrb[0].mxu0
        %v1751 = vadd.f32 %v1654, %v1750
        %v1752 = vpop.f32.mrb[0].mxu0
        %v1753 = vpop.f32.mrb[0].mxu0
        %v1754 = vadd.f32 %v1657, %v1753
        %v1755 = vpop.f32.mrb[0].mxu0
        %1756 = vmatprep.mubr.bf16.mxu0 %v1118
        %1757 = vmatmul.mubr.bf16.gmra.mrb[0].mxu0 %v1117
        %v1758 = vpop.f32.mrb[0].mxu0
        %v1759 = vadd.f32 %v1662, %v1758
        %v1760 = vpop.f32.mrb[0].mxu0
        %v1761 = vpop.f32.mrb[0].mxu0
        %v1762 = vadd.f32 %v1665, %v1761
        %v1763 = vpop.f32.mrb[0].mxu0
        %1764 = vmatprep.mubr.bf16.mxu0 %v1126
        %1765 = vmatmul.mubr.bf16.gmra.mrb[0].mxu0 %v1125
        %v1766 = vpop.f32.mrb[0].mxu0
        %v1767 = vadd.f32 %v1670, %v1766
        %v1768 = vpop.f32.mrb[0].mxu0
        %v1769 = vpop.f32.mrb[0].mxu0
        %v1770 = vadd.f32 %v1673, %v1769
        %v1771 = vpop.f32.mrb[0].mxu0
        %1772 = vmatprep.mubr.bf16.mxu0 %v1134
        %1773 = vmatmul.mubr.bf16.gmra.mrb[0].mxu0 %v1133
        %v1774 = vpop.f32.mrb[0].mxu0
        %v1775 = vadd.f32 %v1678, %v1774
        %v1776 = vpop.f32.mrb[0].mxu0
        %v1777 = vpop.f32.mrb[0].mxu0
        %v1778 = vadd.f32 %v1681, %v1777
        %v1779 = vpop.f32.mrb[0].mxu0
        %1780 = vmatprep.mubr.bf16.mxu0 %v1142
        %1781 = vmatmul.mubr.bf16.gmra.mrb[0].mxu0 %v1141
        %v1782 = vpop.f32.mrb[0].mxu0
        %v1783 = vadd.f32 %v1686, %v1782
        %v1784 = vpop.f32.mrb[0].mxu0
        %v1785 = vpop.f32.mrb[0].mxu0
        %v1786 = vadd.f32 %v1689, %v1785
        %v1787 = vpop.f32.mrb[0].mxu0
        %1788 = vmatprep.mubr.bf16.mxu0 %v1150
        %1789 = vmatmul.mubr.bf16.gmra.mrb[0].mxu0 %v1149
        %v1790 = vpop.f32.mrb[0].mxu0
        %v1791 = vadd.f32 %v1694, %v1790
        %v1792 = vpop.f32.mrb[0].mxu0
        %v1793 = vpop.f32.mrb[0].mxu0
        %v1794 = vadd.f32 %v1697, %v1793
        %v1795 = vpop.f32.mrb[0].mxu0
        %1796 = vmatprep.mubr.bf16.mxu0 %v1158
        %1797 = vmatmul.mubr.bf16.gmra.mrb[0].mxu0 %v1157
        %v1798 = vpop.f32.mrb[0].mxu0
        %v1799 = vadd.f32 %v1702, %v1798
        %v1800 = vpop.f32.mrb[0].mxu0
        %v1801 = vpop.f32.mrb[0].mxu0
        %v1802 = vadd.f32 %v1705, %v1801
        %v1803 = vpop.f32.mrb[0].mxu0
        %1804 = vdwg.mxu0
        %1805 = vmatprep.subr.bf16.mxu0 0
        %1806 = vmatpush1.bf16.msra.mxu0 %v1515
        %1807 = vmatprep.subr.bf16.mxu0 0
        %1808 = vmatpush1.bf16.msra.mxu0 %v1516
        %1809 = vmatprep.subr.bf16.mxu0 0
        %1810 = vmatpush1.bf16.msra.mxu0 %v1517
        %1811 = vmatprep.subr.bf16.mxu0 0
        %1812 = vmatpush1.bf16.msra.mxu0 %v1518
        %1813 = vmatprep.subr.bf16.mxu0 0
        %1814 = vmatpush1.bf16.msra.mxu0 %v1519
        %1815 = vmatprep.subr.bf16.mxu0 0
        %1816 = vmatpush1.bf16.msra.mxu0 %v1520
        %1817 = vmatprep.subr.bf16.mxu0 0
        %1818 = vmatpush1.bf16.msra.mxu0 %v1521
        %1819 = vmatprep.subr.bf16.mxu0 0
        %1820 = vmatpush1.bf16.msra.mxu0 %v1522
        %1821 = vmatprep.subr.bf16.mxu0 0
        %1822 = vmatpush1.bf16.msra.mxu0 %v1523
        %1823 = vmatprep.subr.bf16.mxu0 0
        %1824 = vmatpush1.bf16.msra.mxu0 %v1524
        %1825 = vmatprep.subr.bf16.mxu0 0
        %1826 = vmatpush1.bf16.msra.mxu0 %v1525
        %1827 = vmatprep.subr.bf16.mxu0 0
        %1828 = vmatpush1.bf16.msra.mxu0 %v1526
        %1829 = vmatprep.subr.bf16.mxu0 0
        %1830 = vmatpush1.bf16.msra.mxu0 %v1527
        %1831 = vmatprep.subr.bf16.mxu0 0
        %1832 = vmatpush1.bf16.msra.mxu0 %v1528
        %1833 = vmatprep.subr.bf16.mxu0 0
        %1834 = vmatpush1.bf16.msra.mxu0 %v1529
        %1835 = vmatprep.subr.bf16.mxu0 0
        %1836 = vmatpush1.bf16.msra.mxu0 %v1530
        %1837 = vmatprep.mubr.bf16.mxu0 %v1104
        %1838 = vmatmul.mubr.bf16.gmra.mrb[0].mxu0 %v1103
        %v1839 = vpop.f32.mrb[0].mxu0
        %v1840 = vadd.f32 %v1743, %v1839
        %v1841 = vpop.f32.mrb[0].mxu0
        %v1842 = vpop.f32.mrb[0].mxu0
        %v1843 = vadd.f32 %v1746, %v1842
        %v1844 = vpop.f32.mrb[0].mxu0
        %1845 = vmatprep.mubr.bf16.mxu0 %v1112
        %1846 = vmatmul.mubr.bf16.gmra.mrb[0].mxu0 %v1111
        %v1847 = vpop.f32.mrb[0].mxu0
        %v1848 = vadd.f32 %v1751, %v1847
        %v1849 = vpop.f32.mrb[0].mxu0
        %v1850 = vpop.f32.mrb[0].mxu0
        %v1851 = vadd.f32 %v1754, %v1850
        %v1852 = vpop.f32.mrb[0].mxu0
        %1853 = vmatprep.mubr.bf16.mxu0 %v1120
        %1854 = vmatmul.mubr.bf16.gmra.mrb[0].mxu0 %v1119
        %v1855 = vpop.f32.mrb[0].mxu0
        %v1856 = vadd.f32 %v1759, %v1855
        %v1857 = vpop.f32.mrb[0].mxu0
        %v1858 = vpop.f32.mrb[0].mxu0
        %v1859 = vadd.f32 %v1762, %v1858
        %v1860 = vpop.f32.mrb[0].mxu0
        %1861 = vmatprep.mubr.bf16.mxu0 %v1128
        %1862 = vmatmul.mubr.bf16.gmra.mrb[0].mxu0 %v1127
        %v1863 = vpop.f32.mrb[0].mxu0
        %v1864 = vadd.f32 %v1767, %v1863
        %v1865 = vpop.f32.mrb[0].mxu0
        %v1866 = vpop.f32.mrb[0].mxu0
        %v1867 = vadd.f32 %v1770, %v1866
        %v1868 = vpop.f32.mrb[0].mxu0
        %1869 = vmatprep.mubr.bf16.mxu0 %v1136
        %1870 = vmatmul.mubr.bf16.gmra.mrb[0].mxu0 %v1135
        %v1871 = vpop.f32.mrb[0].mxu0
        %v1872 = vadd.f32 %v1775, %v1871
        %v1873 = vpop.f32.mrb[0].mxu0
        %v1874 = vpop.f32.mrb[0].mxu0
        %v1875 = vadd.f32 %v1778, %v1874
        %v1876 = vpop.f32.mrb[0].mxu0
        %1877 = vmatprep.mubr.bf16.mxu0 %v1144
        %1878 = vmatmul.mubr.bf16.gmra.mrb[0].mxu0 %v1143
        %v1879 = vpop.f32.mrb[0].mxu0
        %v1880 = vadd.f32 %v1783, %v1879
        %v1881 = vpop.f32.mrb[0].mxu0
        %v1882 = vpop.f32.mrb[0].mxu0
        %v1883 = vadd.f32 %v1786, %v1882
        %v1884 = vpop.f32.mrb[0].mxu0
        %1885 = vmatprep.mubr.bf16.mxu0 %v1152
        %1886 = vmatmul.mubr.bf16.gmra.mrb[0].mxu0 %v1151
        %v1887 = vpop.f32.mrb[0].mxu0
        %v1888 = vadd.f32 %v1791, %v1887
        %v1889 = vpop.f32.mrb[0].mxu0
        %v1890 = vpop.f32.mrb[0].mxu0
        %v1891 = vadd.f32 %v1794, %v1890
        %v1892 = vpop.f32.mrb[0].mxu0
        %1893 = vmatprep.mubr.bf16.mxu0 %v1160
        %1894 = vmatmul.mubr.bf16.gmra.mrb[0].mxu0 %v1159
        %v1895 = vpop.f32.mrb[0].mxu0
        %v1896 = vadd.f32 %v1799, %v1895
        %v1897 = vpop.f32.mrb[0].mxu0
        %v1898 = vpop.f32.mrb[0].mxu0
        %v1899 = vadd.f32 %v1802, %v1898
        %v1900 = vpop.f32.mrb[0].mxu0
        %1901 = vdwg.mxu0
        %1902 = vmatprep.subr.bf16.mxu0 0
        %1903 = vmatpush1.bf16.msra.mxu0 %v1531
        %1904 = vmatprep.subr.bf16.mxu0 0
        %1905 = vmatpush1.bf16.msra.mxu0 %v1532
        %1906 = vmatprep.subr.bf16.mxu0 0
        %1907 = vmatpush1.bf16.msra.mxu0 %v1533
        %1908 = vmatprep.subr.bf16.mxu0 0
        %1909 = vmatpush1.bf16.msra.mxu0 %v1534
        %1910 = vmatprep.subr.bf16.mxu0 0
        %1911 = vmatpush1.bf16.msra.mxu0 %v1535
        %1912 = vmatprep.subr.bf16.mxu0 0
        %1913 = vmatpush1.bf16.msra.mxu0 %v1536
        %1914 = vmatprep.subr.bf16.mxu0 0
        %1915 = vmatpush1.bf16.msra.mxu0 %v1537
        %1916 = vmatprep.subr.bf16.mxu0 0
        %1917 = vmatpush1.bf16.msra.mxu0 %v1538
        %1918 = vmatprep.subr.bf16.mxu0 0
        %1919 = vmatpush1.bf16.msra.mxu0 %v1539
        %1920 = vmatprep.subr.bf16.mxu0 0
        %1921 = vmatpush1.bf16.msra.mxu0 %v1540
        %1922 = vmatprep.subr.bf16.mxu0 0
        %1923 = vmatpush1.bf16.msra.mxu0 %v1541
        %1924 = vmatprep.subr.bf16.mxu0 0
        %1925 = vmatpush1.bf16.msra.mxu0 %v1542
        %1926 = vmatprep.subr.bf16.mxu0 0
        %1927 = vmatpush1.bf16.msra.mxu0 %v1543
        %1928 = vmatprep.subr.bf16.mxu0 0
        %1929 = vmatpush1.bf16.msra.mxu0 %v1544
        %1930 = vmatprep.subr.bf16.mxu0 0
        %1931 = vmatpush1.bf16.msra.mxu0 %v1545
        %1932 = vmatprep.subr.bf16.mxu0 0
        %1933 = vmatpush1.bf16.msra.mxu0 %v1546
        %1934 = vmatprep.mubr.bf16.mxu0 %v1106
        %1935 = vmatmul.mubr.bf16.gmra.mrb[0].mxu0 %v1105
        %v1936 = vpop.f32.mrb[0].mxu0
        %v1937 = vadd.f32 %v1840, %v1936
        %v1938 = vpop.f32.mrb[0].mxu0
        %v1939 = vpop.f32.mrb[0].mxu0
        %v1940 = vadd.f32 %v1843, %v1939
        %v1941 = vpop.f32.mrb[0].mxu0
        %1942 = vmatprep.mubr.bf16.mxu0 %v1114
        %1943 = vmatmul.mubr.bf16.gmra.mrb[0].mxu0 %v1113
        %v1944 = vpop.f32.mrb[0].mxu0
        %v1945 = vadd.f32 %v1848, %v1944
        %v1946 = vpop.f32.mrb[0].mxu0
        %v1947 = vpop.f32.mrb[0].mxu0
        %v1948 = vadd.f32 %v1851, %v1947
        %v1949 = vpop.f32.mrb[0].mxu0
        %1950 = vmatprep.mubr.bf16.mxu0 %v1122
        %1951 = vmatmul.mubr.bf16.gmra.mrb[0].mxu0 %v1121
        %v1952 = vpop.f32.mrb[0].mxu0
        %v1953 = vadd.f32 %v1856, %v1952
        %v1954 = vpop.f32.mrb[0].mxu0
        %v1955 = vpop.f32.mrb[0].mxu0
        %v1956 = vadd.f32 %v1859, %v1955
        %v1957 = vpop.f32.mrb[0].mxu0
        %1958 = vmatprep.mubr.bf16.mxu0 %v1130
        %1959 = vmatmul.mubr.bf16.gmra.mrb[0].mxu0 %v1129
        %v1960 = vpop.f32.mrb[0].mxu0
        %v1961 = vadd.f32 %v1864, %v1960
        %v1962 = vpop.f32.mrb[0].mxu0
        %v1963 = vpop.f32.mrb[0].mxu0
        %v1964 = vadd.f32 %v1867, %v1963
        %v1965 = vpop.f32.mrb[0].mxu0
        %1966 = vmatprep.mubr.bf16.mxu0 %v1138
        %1967 = vmatmul.mubr.bf16.gmra.mrb[0].mxu0 %v1137
        %v1968 = vpop.f32.mrb[0].mxu0
        %v1969 = vadd.f32 %v1872, %v1968
        %v1970 = vpop.f32.mrb[0].mxu0
        %v1971 = vpop.f32.mrb[0].mxu0
        %v1972 = vadd.f32 %v1875, %v1971
        %v1973 = vpop.f32.mrb[0].mxu0
        %1974 = vmatprep.mubr.bf16.mxu0 %v1146
        %1975 = vmatmul.mubr.bf16.gmra.mrb[0].mxu0 %v1145
        %v1976 = vpop.f32.mrb[0].mxu0
        %v1977 = vadd.f32 %v1880, %v1976
        %v1978 = vpop.f32.mrb[0].mxu0
        %v1979 = vpop.f32.mrb[0].mxu0
        %v1980 = vadd.f32 %v1883, %v1979
        %v1981 = vpop.f32.mrb[0].mxu0
        %1982 = vmatprep.mubr.bf16.mxu0 %v1154
        %1983 = vmatmul.mubr.bf16.gmra.mrb[0].mxu0 %v1153
        %v1984 = vpop.f32.mrb[0].mxu0
        %v1985 = vadd.f32 %v1888, %v1984
        %v1986 = vpop.f32.mrb[0].mxu0
        %v1987 = vpop.f32.mrb[0].mxu0
        %v1988 = vadd.f32 %v1891, %v1987
        %v1989 = vpop.f32.mrb[0].mxu0
        %1990 = vmatprep.mubr.bf16.mxu0 %v1162
        %1991 = vmatmul.mubr.bf16.gmra.mrb[0].mxu0 %v1161
        %v1992 = vpop.f32.mrb[0].mxu0
        %v1993 = vadd.f32 %v1896, %v1992
        %v1994 = vpop.f32.mrb[0].mxu0
        %v1995 = vpop.f32.mrb[0].mxu0
        %v1996 = vadd.f32 %v1899, %v1995
        %v1997 = vpop.f32.mrb[0].mxu0
        %1998 = vdwg.mxu0
        %v1999 = vadd.f32 %v699, %v1937
        %v2000 = vadd.f32 %v700, %v1940
        %v2001 = vadd.f32 %v701, %v1945
        %v2002 = vadd.f32 %v702, %v1948
        %v2003 = vadd.f32 %v703, %v1953
        %v2004 = vadd.f32 %v704, %v1956
        %v2005 = vadd.f32 %v705, %v1961
        %v2006 = vadd.f32 %v706, %v1964
        %v2007 = vadd.f32 %v707, %v1969
        %v2008 = vadd.f32 %v708, %v1972
        %v2009 = vadd.f32 %v709, %v1977
        %v2010 = vadd.f32 %v710, %v1980
        %v2011 = vadd.f32 %v711, %v1985
        %v2012 = vadd.f32 %v712, %v1988
        %v2013 = vadd.f32 %v713, %v1993
        %v2014 = vadd.f32 %v714, %v1996
        %vm2015 = vcmask 523264
        %2016 = vst.msk [vmem:[#allocation2] sm:$0xff] %vm2015, %v1999
        %2017 = vst.msk [vmem:[#allocation2 + $0x8] sm:$0xff] %vm2015, %v2000
        %2018 = vst.msk [vmem:[#allocation2 + $0x10] sm:$0xff] %vm2015, %v2001
        %2019 = vst.msk [vmem:[#allocation2 + $0x18] sm:$0xff] %vm2015, %v2002
        %2020 = vst.msk [vmem:[#allocation2 + $0x20] sm:$0xff] %vm2015, %v2003
        %2021 = vst.msk [vmem:[#allocation2 + $0x28] sm:$0xff] %vm2015, %v2004
        %2022 = vst.msk [vmem:[#allocation2 + $0x30] sm:$0xff] %vm2015, %v2005
        %2023 = vst.msk [vmem:[#allocation2 + $0x38] sm:$0xff] %vm2015, %v2006
        %2024 = vst.msk [vmem:[#allocation2 + $0x40] sm:$0xff] %vm2015, %v2007
        %2025 = vst.msk [vmem:[#allocation2 + $0x48] sm:$0xff] %vm2015, %v2008
        %2026 = vst.msk [vmem:[#allocation2 + $0x50] sm:$0xff] %vm2015, %v2009
        %2027 = vst.msk [vmem:[#allocation2 + $0x58] sm:$0xff] %vm2015, %v2010
        %2028 = vst.msk [vmem:[#allocation2 + $0x60] sm:$0xff] %vm2015, %v2011
        %2029 = vst.msk [vmem:[#allocation2 + $0x68] sm:$0xff] %vm2015, %v2012
        %2030 = vst.msk [vmem:[#allocation2 + $0x70] sm:$0xff] %vm2015, %v2013
        %2031 = vst.msk [vmem:[#allocation2 + $0x78] sm:$0xff] %vm2015, %v2014
        %p2032 = scmp.eq.s32.totalorder %s28, 3
        // Predicated region
        $region112: #{pacman_forward.1} parent=102 // pred_check
          %p2033 = pneg %p2032
        $region113: #{pacman_forward.1} parent=102 // pred_check_branch
          %2035 = sbr.rel (%p2033) target = $region115
        $region114: #{pacman_forward.1} parent=102 // pred_region
          %v2036 = vld [vmem:[#allocation2] sm:$0xff]
          %v2037 = vld [vmem:[#allocation2 + $0x8] sm:$0xff]
          %v2038 = vld [vmem:[#allocation2 + $0x10] sm:$0xff]
          %v2039 = vld [vmem:[#allocation2 + $0x18] sm:$0xff]
          %v2040 = vld [vmem:[#allocation2 + $0x20] sm:$0xff]
          %v2041 = vld [vmem:[#allocation2 + $0x28] sm:$0xff]
          %v2042 = vld [vmem:[#allocation2 + $0x30] sm:$0xff]
          %v2043 = vld [vmem:[#allocation2 + $0x38] sm:$0xff]
          %v2044 = vld [vmem:[#allocation2 + $0x40] sm:$0xff]
          %v2045 = vld [vmem:[#allocation2 + $0x48] sm:$0xff]
          %v2046 = vld [vmem:[#allocation2 + $0x50] sm:$0xff]
          %v2047 = vld [vmem:[#allocation2 + $0x58] sm:$0xff]
          %v2048 = vld [vmem:[#allocation2 + $0x60] sm:$0xff]
          %v2049 = vld [vmem:[#allocation2 + $0x68] sm:$0xff]
          %v2050 = vld [vmem:[#allocation2 + $0x70] sm:$0xff]
          %v2051 = vld [vmem:[#allocation2 + $0x78] sm:$0xff]
          %v2052 = vld [vmem:[%s2] sm:$0x1]
          %v2054 = vlaneseq
          %v2055 = vshrl.u32 %v2054, 7
          %v2056 = vsub.s32 0, %v2055
          %v2057 = vrot.slane %v2052, %v2056
          %v2059 = vadd.f32 %v2036, %v2057
          %v2060 = vadd.f32 %v2037, %v2057
          %v2061 = vadd.f32 %v2038, %v2057
          %v2062 = vadd.f32 %v2039, %v2057
          %v2063 = vadd.f32 %v2040, %v2057
          %v2064 = vadd.f32 %v2041, %v2057
          %v2065 = vadd.f32 %v2042, %v2057
          %v2066 = vadd.f32 %v2043, %v2057
          %v2067 = vadd.f32 %v2044, %v2057
          %v2068 = vadd.f32 %v2045, %v2057
          %v2069 = vadd.f32 %v2046, %v2057
          %v2070 = vadd.f32 %v2047, %v2057
          %v2071 = vadd.f32 %v2048, %v2057
          %v2072 = vadd.f32 %v2049, %v2057
          %v2073 = vadd.f32 %v2050, %v2057
          %v2074 = vadd.f32 %v2051, %v2057
          %v2075 = vmax.f32 %v2059, 0.0
          %v2076 = vmax.f32 %v2060, 0.0
          %v2077 = vmax.f32 %v2061, 0.0
          %v2078 = vmax.f32 %v2062, 0.0
          %v2079 = vmax.f32 %v2063, 0.0
          %v2080 = vmax.f32 %v2064, 0.0
          %v2081 = vmax.f32 %v2065, 0.0
          %v2082 = vmax.f32 %v2066, 0.0
          %v2083 = vmax.f32 %v2067, 0.0
          %v2084 = vmax.f32 %v2068, 0.0
          %v2085 = vmax.f32 %v2069, 0.0
          %v2086 = vmax.f32 %v2070, 0.0
          %v2087 = vmax.f32 %v2071, 0.0
          %v2088 = vmax.f32 %v2072, 0.0
          %v2089 = vmax.f32 %v2073, 0.0
          %v2090 = vmax.f32 %v2074, 0.0
          %v2091 = vpack.c.bf16 %v2076, %v2075
          %v2092 = vpack.c.bf16 %v2078, %v2077
          %v2093 = vpack.c.bf16 %v2080, %v2079
          %v2094 = vpack.c.bf16 %v2082, %v2081
          %v2095 = vpack.c.bf16 %v2084, %v2083
          %v2096 = vpack.c.bf16 %v2086, %v2085
          %v2097 = vpack.c.bf16 %v2088, %v2087
          %v2098 = vpack.c.bf16 %v2090, %v2089
          %v2099 = vld [vmem:[%s3] sm:$0xf]
          %v2100 = vld [vmem:[%s3 + $0x4] sm:$0xf]
          %v2101 = vld [vmem:[%s3 + $0x8] sm:$0xf]
          %v2102 = vld [vmem:[%s3 + $0xc] sm:$0xf]
          %v2103 = vld [vmem:[%s3 + $0x10] sm:$0xf]
          %v2104 = vld [vmem:[%s3 + $0x14] sm:$0xf]
          %v2105 = vld [vmem:[%s3 + $0x18] sm:$0xf]
          %v2106 = vld [vmem:[%s3 + $0x1c] sm:$0xf]
          %v2107 = vrot.slane %v2075, 2
          %v2108 = vrot.slane %v2076, 2
          %v2109 = vrot.slane %v2077, 2
          %v2110 = vrot.slane %v2078, 2
          %v2111 = vrot.slane %v2079, 2
          %v2112 = vrot.slane %v2080, 2
          %v2113 = vrot.slane %v2081, 2
          %v2114 = vrot.slane %v2082, 2
          %v2115 = vrot.slane %v2083, 2
          %v2116 = vrot.slane %v2084, 2
          %v2117 = vrot.slane %v2085, 2
          %v2118 = vrot.slane %v2086, 2
          %v2119 = vrot.slane %v2087, 2
          %v2120 = vrot.slane %v2088, 2
          %v2121 = vrot.slane %v2089, 2
          %v2122 = vrot.slane %v2090, 2
          %v2123 = vlaneseq
          %v2124 = vshrl.u32 %v2123, 7
          %vm2125 = vcmp.lt.s32.totalorder %v2124, 6
          %v2126 = vsel %vm2125, %v2121, %v2122
          %v2127 = vsel %vm2125, %v2120, %v2121
          %v2128 = vsel %vm2125, %v2119, %v2120
          %v2129 = vsel %vm2125, %v2118, %v2119
          %v2130 = vsel %vm2125, %v2117, %v2118
          %v2131 = vsel %vm2125, %v2116, %v2117
          %v2132 = vsel %vm2125, %v2115, %v2116
          %v2133 = vsel %vm2125, %v2114, %v2115
          %v2134 = vsel %vm2125, %v2113, %v2114
          %v2135 = vsel %vm2125, %v2112, %v2113
          %v2136 = vsel %vm2125, %v2111, %v2112
          %v2137 = vsel %vm2125, %v2110, %v2111
          %v2138 = vsel %vm2125, %v2109, %v2110
          %v2139 = vsel %vm2125, %v2108, %v2109
          %v2140 = vsel %vm2125, %v2107, %v2108
          %v2141 = vsel %vm2125, %v2122, %v2107
          %v2142 = vpack.c.bf16 %v2139, %v2140
          %v2143 = vpack.c.bf16 %v2137, %v2138
          %v2144 = vpack.c.bf16 %v2135, %v2136
          %v2145 = vpack.c.bf16 %v2133, %v2134
          %v2146 = vpack.c.bf16 %v2131, %v2132
          %v2147 = vpack.c.bf16 %v2129, %v2130
          %v2148 = vpack.c.bf16 %v2127, %v2128
          %v2149 = vpack.c.bf16 %v2141, %v2126
          %v2150 = vld [vmem:[%s3 + $0x20] sm:$0xf]
          %v2151 = vld [vmem:[%s3 + $0x24] sm:$0xf]
          %v2152 = vld [vmem:[%s3 + $0x28] sm:$0xf]
          %v2153 = vld [vmem:[%s3 + $0x2c] sm:$0xf]
          %v2154 = vld [vmem:[%s3 + $0x30] sm:$0xf]
          %v2155 = vld [vmem:[%s3 + $0x34] sm:$0xf]
          %v2156 = vld [vmem:[%s3 + $0x38] sm:$0xf]
          %v2157 = vld [vmem:[%s3 + $0x3c] sm:$0xf]
          %v2166 = vunpack.c.l.b16 %v2150
          %v2167 = vunpack.c.l.b16 %v2151
          %v2168 = vunpack.c.l.b16 %v2152
          %v2169 = vunpack.c.l.b16 %v2153
          %v2170 = vunpack.c.l.b16 %v2154
          %v2171 = vunpack.c.l.b16 %v2155
          %v2172 = vunpack.c.l.b16 %v2156
          %v2173 = vunpack.c.l.b16 %v2157
          %v2174 = vpack.c.b16 %v2167, %v2166
          %v2175 = vpack.c.b16 %v2169, %v2168
          %v2176 = vpack.c.b16 %v2171, %v2170
          %v2177 = vpack.c.b16 %v2173, %v2172
          %v2183 = vsel %vm2015, %v2142, 0
          %v2186 = vsel %vm2015, %v2143, 0
          %v2189 = vsel %vm2015, %v2144, 0
          %v2192 = vsel %vm2015, %v2145, 0
          %v2195 = vsel %vm2015, %v2146, 0
          %v2198 = vsel %vm2015, %v2147, 0
          %v2201 = vsel %vm2015, %v2148, 0
          %v2204 = vsel %vm2015, %v2149, 0
          %2206 = vmatprep.subr.bf16.mxu0 0
          %2207 = vmatpush1.bf16.msra.mxu0 %v2174
          %2208 = vmatprep.subr.bf16.mxu0 0
          %2209 = vmatpush1.bf16.msra.mxu0 %v2175
          %2210 = vmatprep.subr.bf16.mxu0 0
          %2211 = vmatpush1.bf16.msra.mxu0 %v2176
          %2212 = vmatprep.subr.bf16.mxu0 0
          %2213 = vmatpush1.bf16.msra.mxu0 %v2177
          %2214 = vmatprep.subr.bf16.mxu0 0
          %2215 = vmatpush1.bf16.msra.mxu0 0
          %2216 = vmatprep.subr.bf16.mxu0 0
          %2217 = vmatpush1.bf16.msra.mxu0 0
          %2218 = vmatprep.subr.bf16.mxu0 0
          %2219 = vmatpush1.bf16.msra.mxu0 0
          %2220 = vmatprep.subr.bf16.mxu0 0
          %2221 = vmatpush1.bf16.msra.mxu0 0
          %2222 = vmatprep.subr.bf16.mxu0 0
          %2223 = vmatpush1.bf16.msra.mxu0 0
          %2224 = vmatprep.subr.bf16.mxu0 0
          %2225 = vmatpush1.bf16.msra.mxu0 0
          %2226 = vmatprep.subr.bf16.mxu0 0
          %2227 = vmatpush1.bf16.msra.mxu0 0
          %2228 = vmatprep.subr.bf16.mxu0 0
          %2229 = vmatpush1.bf16.msra.mxu0 0
          %2230 = vmatprep.subr.bf16.mxu0 0
          %2231 = vmatpush1.bf16.msra.mxu0 0
          %2232 = vmatprep.subr.bf16.mxu0 0
          %2233 = vmatpush1.bf16.msra.mxu0 0
          %2234 = vmatprep.subr.bf16.mxu0 0
          %2235 = vmatpush1.bf16.msra.mxu0 0
          %2236 = vmatprep.subr.bf16.mxu0 0
          %2237 = vmatpush1.bf16.msra.mxu0 0
          %2238 = vmatprep.mubr.bf16.mxu0 0
          %2239 = vmatmul.mubr.bf16.gmra.mrb[0].mxu0 %v2183
          %v2240 = vpop.f32.mrb[0].mxu0
          %v2241 = vadd.f32 0.0, %v2240
          %v2242 = vpop.f32.mrb[0].mxu0
          %v2243 = vpop.f32.mrb[0].mxu0
          %v2244 = vadd.f32 0.0, %v2243
          %v2245 = vpop.f32.mrb[0].mxu0
          %2246 = vmatprep.mubr.bf16.mxu0 0
          %2247 = vmatmul.mubr.bf16.gmra.mrb[0].mxu0 %v2186
          %v2248 = vpop.f32.mrb[0].mxu0
          %v2249 = vadd.f32 0.0, %v2248
          %v2250 = vpop.f32.mrb[0].mxu0
          %v2251 = vpop.f32.mrb[0].mxu0
          %v2252 = vadd.f32 0.0, %v2251
          %v2253 = vpop.f32.mrb[0].mxu0
          %2254 = vmatprep.mubr.bf16.mxu0 0
          %2255 = vmatmul.mubr.bf16.gmra.mrb[0].mxu0 %v2189
          %v2256 = vpop.f32.mrb[0].mxu0
          %v2257 = vadd.f32 0.0, %v2256
          %v2258 = vpop.f32.mrb[0].mxu0
          %v2259 = vpop.f32.mrb[0].mxu0
          %v2260 = vadd.f32 0.0, %v2259
          %v2261 = vpop.f32.mrb[0].mxu0
          %2262 = vmatprep.mubr.bf16.mxu0 0
          %2263 = vmatmul.mubr.bf16.gmra.mrb[0].mxu0 %v2192
          %v2264 = vpop.f32.mrb[0].mxu0
          %v2265 = vadd.f32 0.0, %v2264
          %v2266 = vpop.f32.mrb[0].mxu0
          %v2267 = vpop.f32.mrb[0].mxu0
          %v2268 = vadd.f32 0.0, %v2267
          %v2269 = vpop.f32.mrb[0].mxu0
          %2270 = vmatprep.mubr.bf16.mxu0 0
          %2271 = vmatmul.mubr.bf16.gmra.mrb[0].mxu0 %v2195
          %v2272 = vpop.f32.mrb[0].mxu0
          %v2273 = vadd.f32 0.0, %v2272
          %v2274 = vpop.f32.mrb[0].mxu0
          %v2275 = vpop.f32.mrb[0].mxu0
          %v2276 = vadd.f32 0.0, %v2275
          %v2277 = vpop.f32.mrb[0].mxu0
          %2278 = vmatprep.mubr.bf16.mxu0 0
          %2279 = vmatmul.mubr.bf16.gmra.mrb[0].mxu0 %v2198
          %v2280 = vpop.f32.mrb[0].mxu0
          %v2281 = vadd.f32 0.0, %v2280
          %v2282 = vpop.f32.mrb[0].mxu0
          %v2283 = vpop.f32.mrb[0].mxu0
          %v2284 = vadd.f32 0.0, %v2283
          %v2285 = vpop.f32.mrb[0].mxu0
          %2286 = vmatprep.mubr.bf16.mxu0 0
          %2287 = vmatmul.mubr.bf16.gmra.mrb[0].mxu0 %v2201
          %v2288 = vpop.f32.mrb[0].mxu0
          %v2289 = vadd.f32 0.0, %v2288
          %v2290 = vpop.f32.mrb[0].mxu0
          %v2291 = vpop.f32.mrb[0].mxu0
          %v2292 = vadd.f32 0.0, %v2291
          %v2293 = vpop.f32.mrb[0].mxu0
          %2294 = vmatprep.mubr.bf16.mxu0 0
          %2295 = vmatmul.mubr.bf16.gmra.mrb[0].mxu0 %v2204
          %v2296 = vpop.f32.mrb[0].mxu0
          %v2297 = vadd.f32 0.0, %v2296
          %v2298 = vpop.f32.mrb[0].mxu0
          %v2299 = vpop.f32.mrb[0].mxu0
          %v2300 = vadd.f32 0.0, %v2299
          %v2301 = vpop.f32.mrb[0].mxu0
          %2302 = vdwg.mxu0
          %v2311 = vunpack.c.l.b16 %v2099
          %v2312 = vunpack.c.l.b16 %v2100
          %v2313 = vunpack.c.l.b16 %v2101
          %v2314 = vunpack.c.l.b16 %v2102
          %v2315 = vunpack.c.l.b16 %v2103
          %v2316 = vunpack.c.l.b16 %v2104
          %v2317 = vunpack.c.l.b16 %v2105
          %v2318 = vunpack.c.l.b16 %v2106
          %v2319 = vpack.c.b16 %v2312, %v2311
          %v2320 = vpack.c.b16 %v2314, %v2313
          %v2321 = vpack.c.b16 %v2316, %v2315
          %v2322 = vpack.c.b16 %v2318, %v2317
          %v2328 = vsel %vm2015, %v2091, 0
          %v2331 = vsel %vm2015, %v2092, 0
          %v2334 = vsel %vm2015, %v2093, 0
          %v2337 = vsel %vm2015, %v2094, 0
          %v2340 = vsel %vm2015, %v2095, 0
          %v2343 = vsel %vm2015, %v2096, 0
          %v2346 = vsel %vm2015, %v2097, 0
          %v2349 = vsel %vm2015, %v2098, 0
          %2351 = vmatprep.subr.bf16.mxu0 0
          %2352 = vmatpush1.bf16.msra.mxu0 %v2319
          %2353 = vmatprep.subr.bf16.mxu0 0
          %2354 = vmatpush1.bf16.msra.mxu0 %v2320
          %2355 = vmatprep.subr.bf16.mxu0 0
          %2356 = vmatpush1.bf16.msra.mxu0 %v2321
          %2357 = vmatprep.subr.bf16.mxu0 0
          %2358 = vmatpush1.bf16.msra.mxu0 %v2322
          %2359 = vmatprep.subr.bf16.mxu0 0
          %2360 = vmatpush1.bf16.msra.mxu0 0
          %2361 = vmatprep.subr.bf16.mxu0 0
          %2362 = vmatpush1.bf16.msra.mxu0 0
          %2363 = vmatprep.subr.bf16.mxu0 0
          %2364 = vmatpush1.bf16.msra.mxu0 0
          %2365 = vmatprep.subr.bf16.mxu0 0
          %2366 = vmatpush1.bf16.msra.mxu0 0
          %2367 = vmatprep.subr.bf16.mxu0 0
          %2368 = vmatpush1.bf16.msra.mxu0 0
          %2369 = vmatprep.subr.bf16.mxu0 0
          %2370 = vmatpush1.bf16.msra.mxu0 0
          %2371 = vmatprep.subr.bf16.mxu0 0
          %2372 = vmatpush1.bf16.msra.mxu0 0
          %2373 = vmatprep.subr.bf16.mxu0 0
          %2374 = vmatpush1.bf16.msra.mxu0 0
          %2375 = vmatprep.subr.bf16.mxu0 0
          %2376 = vmatpush1.bf16.msra.mxu0 0
          %2377 = vmatprep.subr.bf16.mxu0 0
          %2378 = vmatpush1.bf16.msra.mxu0 0
          %2379 = vmatprep.subr.bf16.mxu0 0
          %2380 = vmatpush1.bf16.msra.mxu0 0
          %2381 = vmatprep.subr.bf16.mxu0 0
          %2382 = vmatpush1.bf16.msra.mxu0 0
          %2383 = vmatprep.mubr.bf16.mxu0 0
          %2384 = vmatmul.mubr.bf16.gmra.mrb[0].mxu0 %v2328
          %v2385 = vpop.f32.mrb[0].mxu0
          %v2386 = vadd.f32 %v2241, %v2385
          %v2387 = vpop.f32.mrb[0].mxu0
          %v2388 = vpop.f32.mrb[0].mxu0
          %v2389 = vadd.f32 %v2244, %v2388
          %v2390 = vpop.f32.mrb[0].mxu0
          %2391 = vmatprep.mubr.bf16.mxu0 0
          %2392 = vmatmul.mubr.bf16.gmra.mrb[0].mxu0 %v2331
          %v2393 = vpop.f32.mrb[0].mxu0
          %v2394 = vadd.f32 %v2249, %v2393
          %v2395 = vpop.f32.mrb[0].mxu0
          %v2396 = vpop.f32.mrb[0].mxu0
          %v2397 = vadd.f32 %v2252, %v2396
          %v2398 = vpop.f32.mrb[0].mxu0
          %2399 = vmatprep.mubr.bf16.mxu0 0
          %2400 = vmatmul.mubr.bf16.gmra.mrb[0].mxu0 %v2334
          %v2401 = vpop.f32.mrb[0].mxu0
          %v2402 = vadd.f32 %v2257, %v2401
          %v2403 = vpop.f32.mrb[0].mxu0
          %v2404 = vpop.f32.mrb[0].mxu0
          %v2405 = vadd.f32 %v2260, %v2404
          %v2406 = vpop.f32.mrb[0].mxu0
          %2407 = vmatprep.mubr.bf16.mxu0 0
          %2408 = vmatmul.mubr.bf16.gmra.mrb[0].mxu0 %v2337
          %v2409 = vpop.f32.mrb[0].mxu0
          %v2410 = vadd.f32 %v2265, %v2409
          %v2411 = vpop.f32.mrb[0].mxu0
          %v2412 = vpop.f32.mrb[0].mxu0
          %v2413 = vadd.f32 %v2268, %v2412
          %v2414 = vpop.f32.mrb[0].mxu0
          %2415 = vmatprep.mubr.bf16.mxu0 0
          %2416 = vmatmul.mubr.bf16.gmra.mrb[0].mxu0 %v2340
          %v2417 = vpop.f32.mrb[0].mxu0
          %v2418 = vadd.f32 %v2273, %v2417
          %v2419 = vpop.f32.mrb[0].mxu0
          %v2420 = vpop.f32.mrb[0].mxu0
          %v2421 = vadd.f32 %v2276, %v2420
          %v2422 = vpop.f32.mrb[0].mxu0
          %2423 = vmatprep.mubr.bf16.mxu0 0
          %2424 = vmatmul.mubr.bf16.gmra.mrb[0].mxu0 %v2343
          %v2425 = vpop.f32.mrb[0].mxu0
          %v2426 = vadd.f32 %v2281, %v2425
          %v2427 = vpop.f32.mrb[0].mxu0
          %v2428 = vpop.f32.mrb[0].mxu0
          %v2429 = vadd.f32 %v2284, %v2428
          %v2430 = vpop.f32.mrb[0].mxu0
          %2431 = vmatprep.mubr.bf16.mxu0 0
          %2432 = vmatmul.mubr.bf16.gmra.mrb[0].mxu0 %v2346
          %v2433 = vpop.f32.mrb[0].mxu0
          %v2434 = vadd.f32 %v2289, %v2433
          %v2435 = vpop.f32.mrb[0].mxu0
          %v2436 = vpop.f32.mrb[0].mxu0
          %v2437 = vadd.f32 %v2292, %v2436
          %v2438 = vpop.f32.mrb[0].mxu0
          %2439 = vmatprep.mubr.bf16.mxu0 0
          %2440 = vmatmul.mubr.bf16.gmra.mrb[0].mxu0 %v2349
          %v2441 = vpop.f32.mrb[0].mxu0
          %v2442 = vadd.f32 %v2297, %v2441
          %v2443 = vpop.f32.mrb[0].mxu0
          %v2444 = vpop.f32.mrb[0].mxu0
          %v2445 = vadd.f32 %v2300, %v2444
          %v2446 = vpop.f32.mrb[0].mxu0
          %2447 = vdwg.mxu0
          %v2448 = vrot.slane %v2075, 4
          %v2449 = vrot.slane %v2076, 4
          %v2450 = vrot.slane %v2077, 4
          %v2451 = vrot.slane %v2078, 4
          %v2452 = vrot.slane %v2079, 4
          %v2453 = vrot.slane %v2080, 4
          %v2454 = vrot.slane %v2081, 4
          %v2455 = vrot.slane %v2082, 4
          %v2456 = vrot.slane %v2083, 4
          %v2457 = vrot.slane %v2084, 4
          %v2458 = vrot.slane %v2085, 4
          %v2459 = vrot.slane %v2086, 4
          %v2460 = vrot.slane %v2087, 4
          %v2461 = vrot.slane %v2088, 4
          %v2462 = vrot.slane %v2089, 4
          %v2463 = vrot.slane %v2090, 4
          %vm2464 = vcmp.lt.s32.totalorder %v2124, 4
          %v2465 = vsel %vm2464, %v2462, %v2463
          %v2466 = vsel %vm2464, %v2461, %v2462
          %v2467 = vsel %vm2464, %v2460, %v2461
          %v2468 = vsel %vm2464, %v2459, %v2460
          %v2469 = vsel %vm2464, %v2458, %v2459
          %v2470 = vsel %vm2464, %v2457, %v2458
          %v2471 = vsel %vm2464, %v2456, %v2457
          %v2472 = vsel %vm2464, %v2455, %v2456
          %v2473 = vsel %vm2464, %v2454, %v2455
          %v2474 = vsel %vm2464, %v2453, %v2454
          %v2475 = vsel %vm2464, %v2452, %v2453
          %v2476 = vsel %vm2464, %v2451, %v2452
          %v2477 = vsel %vm2464, %v2450, %v2451
          %v2478 = vsel %vm2464, %v2449, %v2450
          %v2479 = vsel %vm2464, %v2448, %v2449
          %v2480 = vsel %vm2464, %v2463, %v2448
          %v2481 = vpack.c.bf16 %v2478, %v2479
          %v2482 = vpack.c.bf16 %v2476, %v2477
          %v2483 = vpack.c.bf16 %v2474, %v2475
          %v2484 = vpack.c.bf16 %v2472, %v2473
          %v2485 = vpack.c.bf16 %v2470, %v2471
          %v2486 = vpack.c.bf16 %v2468, %v2469
          %v2487 = vpack.c.bf16 %v2466, %v2467
          %v2488 = vpack.c.bf16 %v2480, %v2465
          %v2489 = vld [vmem:[%s3 + $0x40] sm:$0xf]
          %v2490 = vld [vmem:[%s3 + $0x44] sm:$0xf]
          %v2491 = vld [vmem:[%s3 + $0x48] sm:$0xf]
          %v2492 = vld [vmem:[%s3 + $0x4c] sm:$0xf]
          %v2493 = vld [vmem:[%s3 + $0x50] sm:$0xf]
          %v2494 = vld [vmem:[%s3 + $0x54] sm:$0xf]
          %v2495 = vld [vmem:[%s3 + $0x58] sm:$0xf]
          %v2496 = vld [vmem:[%s3 + $0x5c] sm:$0xf]
          %v2505 = vunpack.c.l.b16 %v2489
          %v2506 = vunpack.c.l.b16 %v2490
          %v2507 = vunpack.c.l.b16 %v2491
          %v2508 = vunpack.c.l.b16 %v2492
          %v2509 = vunpack.c.l.b16 %v2493
          %v2510 = vunpack.c.l.b16 %v2494
          %v2511 = vunpack.c.l.b16 %v2495
          %v2512 = vunpack.c.l.b16 %v2496
          %v2513 = vpack.c.b16 %v2506, %v2505
          %v2514 = vpack.c.b16 %v2508, %v2507
          %v2515 = vpack.c.b16 %v2510, %v2509
          %v2516 = vpack.c.b16 %v2512, %v2511
          %v2522 = vsel %vm2015, %v2481, 0
          %v2525 = vsel %vm2015, %v2482, 0
          %v2528 = vsel %vm2015, %v2483, 0
          %v2531 = vsel %vm2015, %v2484, 0
          %v2534 = vsel %vm2015, %v2485, 0
          %v2537 = vsel %vm2015, %v2486, 0
          %v2540 = vsel %vm2015, %v2487, 0
          %v2543 = vsel %vm2015, %v2488, 0
          %2545 = vmatprep.subr.bf16.mxu0 0
          %2546 = vmatpush1.bf16.msra.mxu0 %v2513
          %2547 = vmatprep.subr.bf16.mxu0 0
          %2548 = vmatpush1.bf16.msra.mxu0 %v2514
          %2549 = vmatprep.subr.bf16.mxu0 0
          %2550 = vmatpush1.bf16.msra.mxu0 %v2515
          %2551 = vmatprep.subr.bf16.mxu0 0
          %2552 = vmatpush1.bf16.msra.mxu0 %v2516
          %2553 = vmatprep.subr.bf16.mxu0 0
          %2554 = vmatpush1.bf16.msra.mxu0 0
          %2555 = vmatprep.subr.bf16.mxu0 0
          %2556 = vmatpush1.bf16.msra.mxu0 0
          %2557 = vmatprep.subr.bf16.mxu0 0
          %2558 = vmatpush1.bf16.msra.mxu0 0
          %2559 = vmatprep.subr.bf16.mxu0 0
          %2560 = vmatpush1.bf16.msra.mxu0 0
          %2561 = vmatprep.subr.bf16.mxu0 0
          %2562 = vmatpush1.bf16.msra.mxu0 0
          %2563 = vmatprep.subr.bf16.mxu0 0
          %2564 = vmatpush1.bf16.msra.mxu0 0
          %2565 = vmatprep.subr.bf16.mxu0 0
          %2566 = vmatpush1.bf16.msra.mxu0 0
          %2567 = vmatprep.subr.bf16.mxu0 0
          %2568 = vmatpush1.bf16.msra.mxu0 0
          %2569 = vmatprep.subr.bf16.mxu0 0
          %2570 = vmatpush1.bf16.msra.mxu0 0
          %2571 = vmatprep.subr.bf16.mxu0 0
          %2572 = vmatpush1.bf16.msra.mxu0 0
          %2573 = vmatprep.subr.bf16.mxu0 0
          %2574 = vmatpush1.bf16.msra.mxu0 0
          %2575 = vmatprep.subr.bf16.mxu0 0
          %2576 = vmatpush1.bf16.msra.mxu0 0
          %2577 = vmatprep.mubr.bf16.mxu0 0
          %2578 = vmatmul.mubr.bf16.gmra.mrb[0].mxu0 %v2522
          %v2579 = vpop.f32.mrb[0].mxu0
          %v2580 = vadd.f32 0.0, %v2579
          %v2581 = vpop.f32.mrb[0].mxu0
          %v2582 = vpop.f32.mrb[0].mxu0
          %v2583 = vadd.f32 0.0, %v2582
          %v2584 = vpop.f32.mrb[0].mxu0
          %2585 = vmatprep.mubr.bf16.mxu0 0
          %2586 = vmatmul.mubr.bf16.gmra.mrb[0].mxu0 %v2525
          %v2587 = vpop.f32.mrb[0].mxu0
          %v2588 = vadd.f32 0.0, %v2587
          %v2589 = vpop.f32.mrb[0].mxu0
          %v2590 = vpop.f32.mrb[0].mxu0
          %v2591 = vadd.f32 0.0, %v2590
          %v2592 = vpop.f32.mrb[0].mxu0
          %2593 = vmatprep.mubr.bf16.mxu0 0
          %2594 = vmatmul.mubr.bf16.gmra.mrb[0].mxu0 %v2528
          %v2595 = vpop.f32.mrb[0].mxu0
          %v2596 = vadd.f32 0.0, %v2595
          %v2597 = vpop.f32.mrb[0].mxu0
          %v2598 = vpop.f32.mrb[0].mxu0
          %v2599 = vadd.f32 0.0, %v2598
          %v2600 = vpop.f32.mrb[0].mxu0
          %2601 = vmatprep.mubr.bf16.mxu0 0
          %2602 = vmatmul.mubr.bf16.gmra.mrb[0].mxu0 %v2531
          %v2603 = vpop.f32.mrb[0].mxu0
          %v2604 = vadd.f32 0.0, %v2603
          %v2605 = vpop.f32.mrb[0].mxu0
          %v2606 = vpop.f32.mrb[0].mxu0
          %v2607 = vadd.f32 0.0, %v2606
          %v2608 = vpop.f32.mrb[0].mxu0
          %2609 = vmatprep.mubr.bf16.mxu0 0
          %2610 = vmatmul.mubr.bf16.gmra.mrb[0].mxu0 %v2534
          %v2611 = vpop.f32.mrb[0].mxu0
          %v2612 = vadd.f32 0.0, %v2611
          %v2613 = vpop.f32.mrb[0].mxu0
          %v2614 = vpop.f32.mrb[0].mxu0
          %v2615 = vadd.f32 0.0, %v2614
          %v2616 = vpop.f32.mrb[0].mxu0
          %2617 = vmatprep.mubr.bf16.mxu0 0
          %2618 = vmatmul.mubr.bf16.gmra.mrb[0].mxu0 %v2537
          %v2619 = vpop.f32.mrb[0].mxu0
          %v2620 = vadd.f32 0.0, %v2619
          %v2621 = vpop.f32.mrb[0].mxu0
          %v2622 = vpop.f32.mrb[0].mxu0
          %v2623 = vadd.f32 0.0, %v2622
          %v2624 = vpop.f32.mrb[0].mxu0
          %2625 = vmatprep.mubr.bf16.mxu0 0
          %2626 = vmatmul.mubr.bf16.gmra.mrb[0].mxu0 %v2540
          %v2627 = vpop.f32.mrb[0].mxu0
          %v2628 = vadd.f32 0.0, %v2627
          %v2629 = vpop.f32.mrb[0].mxu0
          %v2630 = vpop.f32.mrb[0].mxu0
          %v2631 = vadd.f32 0.0, %v2630
          %v2632 = vpop.f32.mrb[0].mxu0
          %2633 = vmatprep.mubr.bf16.mxu0 0
          %2634 = vmatmul.mubr.bf16.gmra.mrb[0].mxu0 %v2543
          %v2635 = vpop.f32.mrb[0].mxu0
          %v2636 = vadd.f32 0.0, %v2635
          %v2637 = vpop.f32.mrb[0].mxu0
          %v2638 = vpop.f32.mrb[0].mxu0
          %v2639 = vadd.f32 0.0, %v2638
          %v2640 = vpop.f32.mrb[0].mxu0
          %2641 = vdwg.mxu0
          %v2642 = vadd.f32 %v2386, %v2580
          %v2643 = vadd.f32 %v2389, %v2583
          %v2644 = vadd.f32 %v2394, %v2588
          %v2645 = vadd.f32 %v2397, %v2591
          %v2646 = vadd.f32 %v2402, %v2596
          %v2647 = vadd.f32 %v2405, %v2599
          %v2648 = vadd.f32 %v2410, %v2604
          %v2649 = vadd.f32 %v2413, %v2607
          %v2650 = vadd.f32 %v2418, %v2612
          %v2651 = vadd.f32 %v2421, %v2615
          %v2652 = vadd.f32 %v2426, %v2620
          %v2653 = vadd.f32 %v2429, %v2623
          %v2654 = vadd.f32 %v2434, %v2628
          %v2655 = vadd.f32 %v2437, %v2631
          %v2656 = vadd.f32 %v2442, %v2636
          %v2657 = vadd.f32 %v2445, %v2639
          %v2658 = vrot.slane %v2075, 6
          %v2659 = vrot.slane %v2076, 6
          %v2660 = vrot.slane %v2077, 6
          %v2661 = vrot.slane %v2078, 6
          %v2662 = vrot.slane %v2079, 6
          %v2663 = vrot.slane %v2080, 6
          %v2664 = vrot.slane %v2081, 6
          %v2665 = vrot.slane %v2082, 6
          %v2666 = vrot.slane %v2083, 6
          %v2667 = vrot.slane %v2084, 6
          %v2668 = vrot.slane %v2085, 6
          %v2669 = vrot.slane %v2086, 6
          %v2670 = vrot.slane %v2087, 6
          %v2671 = vrot.slane %v2088, 6
          %v2672 = vrot.slane %v2089, 6
          %v2673 = vrot.slane %v2090, 6
          %vm2674 = vcmp.lt.s32.totalorder %v2124, 2
          %v2675 = vsel %vm2674, %v2672, %v2673
          %v2676 = vsel %vm2674, %v2671, %v2672
          %v2677 = vsel %vm2674, %v2670, %v2671
          %v2678 = vsel %vm2674, %v2669, %v2670
          %v2679 = vsel %vm2674, %v2668, %v2669
          %v2680 = vsel %vm2674, %v2667, %v2668
          %v2681 = vsel %vm2674, %v2666, %v2667
          %v2682 = vsel %vm2674, %v2665, %v2666
          %v2683 = vsel %vm2674, %v2664, %v2665
          %v2684 = vsel %vm2674, %v2663, %v2664
          %v2685 = vsel %vm2674, %v2662, %v2663
          %v2686 = vsel %vm2674, %v2661, %v2662
          %v2687 = vsel %vm2674, %v2660, %v2661
          %v2688 = vsel %vm2674, %v2659, %v2660
          %v2689 = vsel %vm2674, %v2658, %v2659
          %v2690 = vsel %vm2674, %v2673, %v2658
          %v2691 = vpack.c.bf16 %v2688, %v2689
          %v2692 = vpack.c.bf16 %v2686, %v2687
          %v2693 = vpack.c.bf16 %v2684, %v2685
          %v2694 = vpack.c.bf16 %v2682, %v2683
          %v2695 = vpack.c.bf16 %v2680, %v2681
          %v2696 = vpack.c.bf16 %v2678, %v2679
          %v2697 = vpack.c.bf16 %v2676, %v2677
          %v2698 = vpack.c.bf16 %v2690, %v2675
          %v2699 = vld [vmem:[%s3 + $0x60] sm:$0xf]
          %v2700 = vld [vmem:[%s3 + $0x64] sm:$0xf]
          %v2701 = vld [vmem:[%s3 + $0x68] sm:$0xf]
          %v2702 = vld [vmem:[%s3 + $0x6c] sm:$0xf]
          %v2703 = vld [vmem:[%s3 + $0x70] sm:$0xf]
          %v2704 = vld [vmem:[%s3 + $0x74] sm:$0xf]
          %v2705 = vld [vmem:[%s3 + $0x78] sm:$0xf]
          %v2706 = vld [vmem:[%s3 + $0x7c] sm:$0xf]
          %v2715 = vunpack.c.l.b16 %v2699
          %v2716 = vunpack.c.l.b16 %v2700
          %v2717 = vunpack.c.l.b16 %v2701
          %v2718 = vunpack.c.l.b16 %v2702
          %v2719 = vunpack.c.l.b16 %v2703
          %v2720 = vunpack.c.l.b16 %v2704
          %v2721 = vunpack.c.l.b16 %v2705
          %v2722 = vunpack.c.l.b16 %v2706
          %v2723 = vpack.c.b16 %v2716, %v2715
          %v2724 = vpack.c.b16 %v2718, %v2717
          %v2725 = vpack.c.b16 %v2720, %v2719
          %v2726 = vpack.c.b16 %v2722, %v2721
          %v2732 = vsel %vm2015, %v2691, 0
          %v2735 = vsel %vm2015, %v2692, 0
          %v2738 = vsel %vm2015, %v2693, 0
          %v2741 = vsel %vm2015, %v2694, 0
          %v2744 = vsel %vm2015, %v2695, 0
          %v2747 = vsel %vm2015, %v2696, 0
          %v2750 = vsel %vm2015, %v2697, 0
          %v2753 = vsel %vm2015, %v2698, 0
          %2755 = vmatprep.subr.bf16.mxu0 0
          %2756 = vmatpush1.bf16.msra.mxu0 %v2723
          %2757 = vmatprep.subr.bf16.mxu0 0
          %2758 = vmatpush1.bf16.msra.mxu0 %v2724
          %2759 = vmatprep.subr.bf16.mxu0 0
          %2760 = vmatpush1.bf16.msra.mxu0 %v2725
          %2761 = vmatprep.subr.bf16.mxu0 0
          %2762 = vmatpush1.bf16.msra.mxu0 %v2726
          %2763 = vmatprep.subr.bf16.mxu0 0
          %2764 = vmatpush1.bf16.msra.mxu0 0
          %2765 = vmatprep.subr.bf16.mxu0 0
          %2766 = vmatpush1.bf16.msra.mxu0 0
          %2767 = vmatprep.subr.bf16.mxu0 0
          %2768 = vmatpush1.bf16.msra.mxu0 0
          %2769 = vmatprep.subr.bf16.mxu0 0
          %2770 = vmatpush1.bf16.msra.mxu0 0
          %2771 = vmatprep.subr.bf16.mxu0 0
          %2772 = vmatpush1.bf16.msra.mxu0 0
          %2773 = vmatprep.subr.bf16.mxu0 0
          %2774 = vmatpush1.bf16.msra.mxu0 0
          %2775 = vmatprep.subr.bf16.mxu0 0
          %2776 = vmatpush1.bf16.msra.mxu0 0
          %2777 = vmatprep.subr.bf16.mxu0 0
          %2778 = vmatpush1.bf16.msra.mxu0 0
          %2779 = vmatprep.subr.bf16.mxu0 0
          %2780 = vmatpush1.bf16.msra.mxu0 0
          %2781 = vmatprep.subr.bf16.mxu0 0
          %2782 = vmatpush1.bf16.msra.mxu0 0
          %2783 = vmatprep.subr.bf16.mxu0 0
          %2784 = vmatpush1.bf16.msra.mxu0 0
          %2785 = vmatprep.subr.bf16.mxu0 0
          %2786 = vmatpush1.bf16.msra.mxu0 0
          %2787 = vmatprep.mubr.bf16.mxu0 0
          %2788 = vmatmul.mubr.bf16.gmra.mrb[0].mxu0 %v2732
          %v2789 = vpop.f32.mrb[0].mxu0
          %v2790 = vadd.f32 0.0, %v2789
          %v2791 = vpop.f32.mrb[0].mxu0
          %v2792 = vpop.f32.mrb[0].mxu0
          %v2793 = vadd.f32 0.0, %v2792
          %v2794 = vpop.f32.mrb[0].mxu0
          %2795 = vmatprep.mubr.bf16.mxu0 0
          %2796 = vmatmul.mubr.bf16.gmra.mrb[0].mxu0 %v2735
          %v2797 = vpop.f32.mrb[0].mxu0
          %v2798 = vadd.f32 0.0, %v2797
          %v2799 = vpop.f32.mrb[0].mxu0
          %v2800 = vpop.f32.mrb[0].mxu0
          %v2801 = vadd.f32 0.0, %v2800
          %v2802 = vpop.f32.mrb[0].mxu0
          %2803 = vmatprep.mubr.bf16.mxu0 0
          %2804 = vmatmul.mubr.bf16.gmra.mrb[0].mxu0 %v2738
          %v2805 = vpop.f32.mrb[0].mxu0
          %v2806 = vadd.f32 0.0, %v2805
          %v2807 = vpop.f32.mrb[0].mxu0
          %v2808 = vpop.f32.mrb[0].mxu0
          %v2809 = vadd.f32 0.0, %v2808
          %v2810 = vpop.f32.mrb[0].mxu0
          %2811 = vmatprep.mubr.bf16.mxu0 0
          %2812 = vmatmul.mubr.bf16.gmra.mrb[0].mxu0 %v2741
          %v2813 = vpop.f32.mrb[0].mxu0
          %v2814 = vadd.f32 0.0, %v2813
          %v2815 = vpop.f32.mrb[0].mxu0
          %v2816 = vpop.f32.mrb[0].mxu0
          %v2817 = vadd.f32 0.0, %v2816
          %v2818 = vpop.f32.mrb[0].mxu0
          %2819 = vmatprep.mubr.bf16.mxu0 0
          %2820 = vmatmul.mubr.bf16.gmra.mrb[0].mxu0 %v2744
          %v2821 = vpop.f32.mrb[0].mxu0
          %v2822 = vadd.f32 0.0, %v2821
          %v2823 = vpop.f32.mrb[0].mxu0
          %v2824 = vpop.f32.mrb[0].mxu0
          %v2825 = vadd.f32 0.0, %v2824
          %v2826 = vpop.f32.mrb[0].mxu0
          %2827 = vmatprep.mubr.bf16.mxu0 0
          %2828 = vmatmul.mubr.bf16.gmra.mrb[0].mxu0 %v2747
          %v2829 = vpop.f32.mrb[0].mxu0
          %v2830 = vadd.f32 0.0, %v2829
          %v2831 = vpop.f32.mrb[0].mxu0
          %v2832 = vpop.f32.mrb[0].mxu0
          %v2833 = vadd.f32 0.0, %v2832
          %v2834 = vpop.f32.mrb[0].mxu0
          %2835 = vmatprep.mubr.bf16.mxu0 0
          %2836 = vmatmul.mubr.bf16.gmra.mrb[0].mxu0 %v2750
          %v2837 = vpop.f32.mrb[0].mxu0
          %v2838 = vadd.f32 0.0, %v2837
          %v2839 = vpop.f32.mrb[0].mxu0
          %v2840 = vpop.f32.mrb[0].mxu0
          %v2841 = vadd.f32 0.0, %v2840
          %v2842 = vpop.f32.mrb[0].mxu0
          %2843 = vmatprep.mubr.bf16.mxu0 0
          %2844 = vmatmul.mubr.bf16.gmra.mrb[0].mxu0 %v2753
          %v2845 = vpop.f32.mrb[0].mxu0
          %v2846 = vadd.f32 0.0, %v2845
          %v2847 = vpop.f32.mrb[0].mxu0
          %v2848 = vpop.f32.mrb[0].mxu0
          %v2849 = vadd.f32 0.0, %v2848
          %v2850 = vpop.f32.mrb[0].mxu0
          %2851 = vdwg.mxu0
          %v2852 = vadd.f32 %v2642, %v2790
          %v2853 = vadd.f32 %v2643, %v2793
          %v2854 = vadd.f32 %v2644, %v2798
          %v2855 = vadd.f32 %v2645, %v2801
          %v2856 = vadd.f32 %v2646, %v2806
          %v2857 = vadd.f32 %v2647, %v2809
          %v2858 = vadd.f32 %v2648, %v2814
          %v2859 = vadd.f32 %v2649, %v2817
          %v2860 = vadd.f32 %v2650, %v2822
          %v2861 = vadd.f32 %v2651, %v2825
          %v2862 = vadd.f32 %v2652, %v2830
          %v2863 = vadd.f32 %v2653, %v2833
          %v2864 = vadd.f32 %v2654, %v2838
          %v2865 = vadd.f32 %v2655, %v2841
          %v2866 = vadd.f32 %v2656, %v2846
          %v2867 = vadd.f32 %v2657, %v2849
          %v2868 = vld [vmem:[%s3 + $0x80] sm:$0xf]
          %v2869 = vld [vmem:[%s3 + $0x84] sm:$0xf]
          %v2870 = vld [vmem:[%s3 + $0x88] sm:$0xf]
          %v2871 = vld [vmem:[%s3 + $0x8c] sm:$0xf]
          %v2872 = vld [vmem:[%s3 + $0x90] sm:$0xf]
          %v2873 = vld [vmem:[%s3 + $0x94] sm:$0xf]
          %v2874 = vld [vmem:[%s3 + $0x98] sm:$0xf]
          %v2875 = vld [vmem:[%s3 + $0x9c] sm:$0xf]
          %v2884 = vunpack.c.l.b16 %v2868
          %v2885 = vunpack.c.l.b16 %v2869
          %v2886 = vunpack.c.l.b16 %v2870
          %v2887 = vunpack.c.l.b16 %v2871
          %v2888 = vunpack.c.l.b16 %v2872
          %v2889 = vunpack.c.l.b16 %v2873
          %v2890 = vunpack.c.l.b16 %v2874
          %v2891 = vunpack.c.l.b16 %v2875
          %v2892 = vpack.c.b16 %v2885, %v2884
          %v2893 = vpack.c.b16 %v2887, %v2886
          %v2894 = vpack.c.b16 %v2889, %v2888
          %v2895 = vpack.c.b16 %v2891, %v2890
          %2900 = vmatprep.subr.bf16.mxu0 0
          %2901 = vmatpush1.bf16.msra.mxu0 %v2892
          %2902 = vmatprep.subr.bf16.mxu0 0
          %2903 = vmatpush1.bf16.msra.mxu0 %v2893
          %2904 = vmatprep.subr.bf16.mxu0 0
          %2905 = vmatpush1.bf16.msra.mxu0 %v2894
          %2906 = vmatprep.subr.bf16.mxu0 0
          %2907 = vmatpush1.bf16.msra.mxu0 %v2895
          %2908 = vmatprep.subr.bf16.mxu0 0
          %2909 = vmatpush1.bf16.msra.mxu0 0
          %2910 = vmatprep.subr.bf16.mxu0 0
          %2911 = vmatpush1.bf16.msra.mxu0 0
          %2912 = vmatprep.subr.bf16.mxu0 0
          %2913 = vmatpush1.bf16.msra.mxu0 0
          %2914 = vmatprep.subr.bf16.mxu0 0
          %2915 = vmatpush1.bf16.msra.mxu0 0
          %2916 = vmatprep.subr.bf16.mxu0 0
          %2917 = vmatpush1.bf16.msra.mxu0 0
          %2918 = vmatprep.subr.bf16.mxu0 0
          %2919 = vmatpush1.bf16.msra.mxu0 0
          %2920 = vmatprep.subr.bf16.mxu0 0
          %2921 = vmatpush1.bf16.msra.mxu0 0
          %2922 = vmatprep.subr.bf16.mxu0 0
          %2923 = vmatpush1.bf16.msra.mxu0 0
          %2924 = vmatprep.subr.bf16.mxu0 0
          %2925 = vmatpush1.bf16.msra.mxu0 0
          %2926 = vmatprep.subr.bf16.mxu0 0
          %2927 = vmatpush1.bf16.msra.mxu0 0
          %2928 = vmatprep.subr.bf16.mxu0 0
          %2929 = vmatpush1.bf16.msra.mxu0 0
          %2930 = vmatprep.subr.bf16.mxu0 0
          %2931 = vmatpush1.bf16.msra.mxu0 0
          %2932 = vmatprep.mubr.bf16.mxu0 0
          %2933 = vmatmul.mubr.bf16.gmra.mrb[0].mxu0 %v2331
          %v2934 = vpop.f32.mrb[0].mxu0
          %v2935 = vadd.f32 0.0, %v2934
          %v2936 = vpop.f32.mrb[0].mxu0
          %v2937 = vpop.f32.mrb[0].mxu0
          %v2938 = vadd.f32 0.0, %v2937
          %v2939 = vpop.f32.mrb[0].mxu0
          %2940 = vmatprep.mubr.bf16.mxu0 0
          %2941 = vmatmul.mubr.bf16.gmra.mrb[0].mxu0 %v2334
          %v2942 = vpop.f32.mrb[0].mxu0
          %v2943 = vadd.f32 0.0, %v2942
          %v2944 = vpop.f32.mrb[0].mxu0
          %v2945 = vpop.f32.mrb[0].mxu0
          %v2946 = vadd.f32 0.0, %v2945
          %v2947 = vpop.f32.mrb[0].mxu0
          %2948 = vmatprep.mubr.bf16.mxu0 0
          %2949 = vmatmul.mubr.bf16.gmra.mrb[0].mxu0 %v2337
          %v2950 = vpop.f32.mrb[0].mxu0
          %v2951 = vadd.f32 0.0, %v2950
          %v2952 = vpop.f32.mrb[0].mxu0
          %v2953 = vpop.f32.mrb[0].mxu0
          %v2954 = vadd.f32 0.0, %v2953
          %v2955 = vpop.f32.mrb[0].mxu0
          %2956 = vmatprep.mubr.bf16.mxu0 0
          %2957 = vmatmul.mubr.bf16.gmra.mrb[0].mxu0 %v2340
          %v2958 = vpop.f32.mrb[0].mxu0
          %v2959 = vadd.f32 0.0, %v2958
          %v2960 = vpop.f32.mrb[0].mxu0
          %v2961 = vpop.f32.mrb[0].mxu0
          %v2962 = vadd.f32 0.0, %v2961
          %v2963 = vpop.f32.mrb[0].mxu0
          %2964 = vmatprep.mubr.bf16.mxu0 0
          %2965 = vmatmul.mubr.bf16.gmra.mrb[0].mxu0 %v2343
          %v2966 = vpop.f32.mrb[0].mxu0
          %v2967 = vadd.f32 0.0, %v2966
          %v2968 = vpop.f32.mrb[0].mxu0
          %v2969 = vpop.f32.mrb[0].mxu0
          %v2970 = vadd.f32 0.0, %v2969
          %v2971 = vpop.f32.mrb[0].mxu0
          %2972 = vmatprep.mubr.bf16.mxu0 0
          %2973 = vmatmul.mubr.bf16.gmra.mrb[0].mxu0 %v2346
          %v2974 = vpop.f32.mrb[0].mxu0
          %v2975 = vadd.f32 0.0, %v2974
          %v2976 = vpop.f32.mrb[0].mxu0
          %v2977 = vpop.f32.mrb[0].mxu0
          %v2978 = vadd.f32 0.0, %v2977
          %v2979 = vpop.f32.mrb[0].mxu0
          %2980 = vmatprep.mubr.bf16.mxu0 0
          %2981 = vmatmul.mubr.bf16.gmra.mrb[0].mxu0 %v2349
          %v2982 = vpop.f32.mrb[0].mxu0
          %v2983 = vadd.f32 0.0, %v2982
          %v2984 = vpop.f32.mrb[0].mxu0
          %v2985 = vpop.f32.mrb[0].mxu0
          %v2986 = vadd.f32 0.0, %v2985
          %v2987 = vpop.f32.mrb[0].mxu0
          %2988 = vmatprep.mubr.bf16.mxu0 0
          %2989 = vmatmul.mubr.bf16.gmra.mrb[0].mxu0 %v2328
          %v2990 = vpop.f32.mrb[0].mxu0
          %v2991 = vadd.f32 0.0, %v2990
          %v2992 = vpop.f32.mrb[0].mxu0
          %v2993 = vpop.f32.mrb[0].mxu0
          %v2994 = vadd.f32 0.0, %v2993
          %v2995 = vpop.f32.mrb[0].mxu0
          %2996 = vdwg.mxu0
          %v2997 = vadd.f32 %v2852, %v2935
          %v2998 = vadd.f32 %v2853, %v2938
          %v2999 = vadd.f32 %v2854, %v2943
          %v3000 = vadd.f32 %v2855, %v2946
          %v3001 = vadd.f32 %v2856, %v2951
          %v3002 = vadd.f32 %v2857, %v2954
          %v3003 = vadd.f32 %v2858, %v2959
          %v3004 = vadd.f32 %v2859, %v2962
          %v3005 = vadd.f32 %v2860, %v2967
          %v3006 = vadd.f32 %v2861, %v2970
          %v3007 = vadd.f32 %v2862, %v2975
          %v3008 = vadd.f32 %v2863, %v2978
          %v3009 = vadd.f32 %v2864, %v2983
          %v3010 = vadd.f32 %v2865, %v2986
          %v3011 = vadd.f32 %v2866, %v2991
          %v3012 = vadd.f32 %v2867, %v2994
          %v3013 = vld [vmem:[%s3 + $0xa0] sm:$0xf]
          %v3014 = vld [vmem:[%s3 + $0xa4] sm:$0xf]
          %v3015 = vld [vmem:[%s3 + $0xa8] sm:$0xf]
          %v3016 = vld [vmem:[%s3 + $0xac] sm:$0xf]
          %v3017 = vld [vmem:[%s3 + $0xb0] sm:$0xf]
          %v3018 = vld [vmem:[%s3 + $0xb4] sm:$0xf]
          %v3019 = vld [vmem:[%s3 + $0xb8] sm:$0xf]
          %v3020 = vld [vmem:[%s3 + $0xbc] sm:$0xf]
          %v3029 = vunpack.c.l.b16 %v3013
          %v3030 = vunpack.c.l.b16 %v3014
          %v3031 = vunpack.c.l.b16 %v3015
          %v3032 = vunpack.c.l.b16 %v3016
          %v3033 = vunpack.c.l.b16 %v3017
          %v3034 = vunpack.c.l.b16 %v3018
          %v3035 = vunpack.c.l.b16 %v3019
          %v3036 = vunpack.c.l.b16 %v3020
          %v3037 = vpack.c.b16 %v3030, %v3029
          %v3038 = vpack.c.b16 %v3032, %v3031
          %v3039 = vpack.c.b16 %v3034, %v3033
          %v3040 = vpack.c.b16 %v3036, %v3035
          %3045 = vmatprep.subr.bf16.mxu0 0
          %3046 = vmatpush1.bf16.msra.mxu0 %v3037
          %3047 = vmatprep.subr.bf16.mxu0 0
          %3048 = vmatpush1.bf16.msra.mxu0 %v3038
          %3049 = vmatprep.subr.bf16.mxu0 0
          %3050 = vmatpush1.bf16.msra.mxu0 %v3039
          %3051 = vmatprep.subr.bf16.mxu0 0
          %3052 = vmatpush1.bf16.msra.mxu0 %v3040
          %3053 = vmatprep.subr.bf16.mxu0 0
          %3054 = vmatpush1.bf16.msra.mxu0 0
          %3055 = vmatprep.subr.bf16.mxu0 0
          %3056 = vmatpush1.bf16.msra.mxu0 0
          %3057 = vmatprep.subr.bf16.mxu0 0
          %3058 = vmatpush1.bf16.msra.mxu0 0
          %3059 = vmatprep.subr.bf16.mxu0 0
          %3060 = vmatpush1.bf16.msra.mxu0 0
          %3061 = vmatprep.subr.bf16.mxu0 0
          %3062 = vmatpush1.bf16.msra.mxu0 0
          %3063 = vmatprep.subr.bf16.mxu0 0
          %3064 = vmatpush1.bf16.msra.mxu0 0
          %3065 = vmatprep.subr.bf16.mxu0 0
          %3066 = vmatpush1.bf16.msra.mxu0 0
          %3067 = vmatprep.subr.bf16.mxu0 0
          %3068 = vmatpush1.bf16.msra.mxu0 0
          %3069 = vmatprep.subr.bf16.mxu0 0
          %3070 = vmatpush1.bf16.msra.mxu0 0
          %3071 = vmatprep.subr.bf16.mxu0 0
          %3072 = vmatpush1.bf16.msra.mxu0 0
          %3073 = vmatprep.subr.bf16.mxu0 0
          %3074 = vmatpush1.bf16.msra.mxu0 0
          %3075 = vmatprep.subr.bf16.mxu0 0
          %3076 = vmatpush1.bf16.msra.mxu0 0
          %3077 = vmatprep.mubr.bf16.mxu0 0
          %3078 = vmatmul.mubr.bf16.gmra.mrb[0].mxu0 %v2186
          %v3079 = vpop.f32.mrb[0].mxu0
          %v3080 = vadd.f32 0.0, %v3079
          %v3081 = vpop.f32.mrb[0].mxu0
          %v3082 = vpop.f32.mrb[0].mxu0
          %v3083 = vadd.f32 0.0, %v3082
          %v3084 = vpop.f32.mrb[0].mxu0
          %3085 = vmatprep.mubr.bf16.mxu0 0
          %3086 = vmatmul.mubr.bf16.gmra.mrb[0].mxu0 %v2189
          %v3087 = vpop.f32.mrb[0].mxu0
          %v3088 = vadd.f32 0.0, %v3087
          %v3089 = vpop.f32.mrb[0].mxu0
          %v3090 = vpop.f32.mrb[0].mxu0
          %v3091 = vadd.f32 0.0, %v3090
          %v3092 = vpop.f32.mrb[0].mxu0
          %3093 = vmatprep.mubr.bf16.mxu0 0
          %3094 = vmatmul.mubr.bf16.gmra.mrb[0].mxu0 %v2192
          %v3095 = vpop.f32.mrb[0].mxu0
          %v3096 = vadd.f32 0.0, %v3095
          %v3097 = vpop.f32.mrb[0].mxu0
          %v3098 = vpop.f32.mrb[0].mxu0
          %v3099 = vadd.f32 0.0, %v3098
          %v3100 = vpop.f32.mrb[0].mxu0
          %3101 = vmatprep.mubr.bf16.mxu0 0
          %3102 = vmatmul.mubr.bf16.gmra.mrb[0].mxu0 %v2195
          %v3103 = vpop.f32.mrb[0].mxu0
          %v3104 = vadd.f32 0.0, %v3103
          %v3105 = vpop.f32.mrb[0].mxu0
          %v3106 = vpop.f32.mrb[0].mxu0
          %v3107 = vadd.f32 0.0, %v3106
          %v3108 = vpop.f32.mrb[0].mxu0
          %3109 = vmatprep.mubr.bf16.mxu0 0
          %3110 = vmatmul.mubr.bf16.gmra.mrb[0].mxu0 %v2198
          %v3111 = vpop.f32.mrb[0].mxu0
          %v3112 = vadd.f32 0.0, %v3111
          %v3113 = vpop.f32.mrb[0].mxu0
          %v3114 = vpop.f32.mrb[0].mxu0
          %v3115 = vadd.f32 0.0, %v3114
          %v3116 = vpop.f32.mrb[0].mxu0
          %3117 = vmatprep.mubr.bf16.mxu0 0
          %3118 = vmatmul.mubr.bf16.gmra.mrb[0].mxu0 %v2201
          %v3119 = vpop.f32.mrb[0].mxu0
          %v3120 = vadd.f32 0.0, %v3119
          %v3121 = vpop.f32.mrb[0].mxu0
          %v3122 = vpop.f32.mrb[0].mxu0
          %v3123 = vadd.f32 0.0, %v3122
          %v3124 = vpop.f32.mrb[0].mxu0
          %3125 = vmatprep.mubr.bf16.mxu0 0
          %3126 = vmatmul.mubr.bf16.gmra.mrb[0].mxu0 %v2204
          %v3127 = vpop.f32.mrb[0].mxu0
          %v3128 = vadd.f32 0.0, %v3127
          %v3129 = vpop.f32.mrb[0].mxu0
          %v3130 = vpop.f32.mrb[0].mxu0
          %v3131 = vadd.f32 0.0, %v3130
          %v3132 = vpop.f32.mrb[0].mxu0
          %3133 = vmatprep.mubr.bf16.mxu0 0
          %3134 = vmatmul.mubr.bf16.gmra.mrb[0].mxu0 %v2183
          %v3135 = vpop.f32.mrb[0].mxu0
          %v3136 = vadd.f32 0.0, %v3135
          %v3137 = vpop.f32.mrb[0].mxu0
          %v3138 = vpop.f32.mrb[0].mxu0
          %v3139 = vadd.f32 0.0, %v3138
          %v3140 = vpop.f32.mrb[0].mxu0
          %3141 = vdwg.mxu0
          %v3142 = vadd.f32 %v2997, %v3080
          %v3143 = vadd.f32 %v2998, %v3083
          %v3144 = vadd.f32 %v2999, %v3088
          %v3145 = vadd.f32 %v3000, %v3091
          %v3146 = vadd.f32 %v3001, %v3096
          %v3147 = vadd.f32 %v3002, %v3099
          %v3148 = vadd.f32 %v3003, %v3104
          %v3149 = vadd.f32 %v3004, %v3107
          %v3150 = vadd.f32 %v3005, %v3112
          %v3151 = vadd.f32 %v3006, %v3115
          %v3152 = vadd.f32 %v3007, %v3120
          %v3153 = vadd.f32 %v3008, %v3123
          %v3154 = vadd.f32 %v3009, %v3128
          %v3155 = vadd.f32 %v3010, %v3131
          %v3156 = vadd.f32 %v3011, %v3136
          %v3157 = vadd.f32 %v3012, %v3139
          %v3158 = vld [vmem:[%s3 + $0xc0] sm:$0xf]
          %v3159 = vld [vmem:[%s3 + $0xc4] sm:$0xf]
          %v3160 = vld [vmem:[%s3 + $0xc8] sm:$0xf]
          %v3161 = vld [vmem:[%s3 + $0xcc] sm:$0xf]
          %v3162 = vld [vmem:[%s3 + $0xd0] sm:$0xf]
          %v3163 = vld [vmem:[%s3 + $0xd4] sm:$0xf]
          %v3164 = vld [vmem:[%s3 + $0xd8] sm:$0xf]
          %v3165 = vld [vmem:[%s3 + $0xdc] sm:$0xf]
          %v3174 = vunpack.c.l.b16 %v3158
          %v3175 = vunpack.c.l.b16 %v3159
          %v3176 = vunpack.c.l.b16 %v3160
          %v3177 = vunpack.c.l.b16 %v3161
          %v3178 = vunpack.c.l.b16 %v3162
          %v3179 = vunpack.c.l.b16 %v3163
          %v3180 = vunpack.c.l.b16 %v3164
          %v3181 = vunpack.c.l.b16 %v3165
          %v3182 = vpack.c.b16 %v3175, %v3174
          %v3183 = vpack.c.b16 %v3177, %v3176
          %v3184 = vpack.c.b16 %v3179, %v3178
          %v3185 = vpack.c.b16 %v3181, %v3180
          %3190 = vmatprep.subr.bf16.mxu0 0
          %3191 = vmatpush1.bf16.msra.mxu0 %v3182
          %3192 = vmatprep.subr.bf16.mxu0 0
          %3193 = vmatpush1.bf16.msra.mxu0 %v3183
          %3194 = vmatprep.subr.bf16.mxu0 0
          %3195 = vmatpush1.bf16.msra.mxu0 %v3184
          %3196 = vmatprep.subr.bf16.mxu0 0
          %3197 = vmatpush1.bf16.msra.mxu0 %v3185
          %3198 = vmatprep.subr.bf16.mxu0 0
          %3199 = vmatpush1.bf16.msra.mxu0 0
          %3200 = vmatprep.subr.bf16.mxu0 0
          %3201 = vmatpush1.bf16.msra.mxu0 0
          %3202 = vmatprep.subr.bf16.mxu0 0
          %3203 = vmatpush1.bf16.msra.mxu0 0
          %3204 = vmatprep.subr.bf16.mxu0 0
          %3205 = vmatpush1.bf16.msra.mxu0 0
          %3206 = vmatprep.subr.bf16.mxu0 0
          %3207 = vmatpush1.bf16.msra.mxu0 0
          %3208 = vmatprep.subr.bf16.mxu0 0
          %3209 = vmatpush1.bf16.msra.mxu0 0
          %3210 = vmatprep.subr.bf16.mxu0 0
          %3211 = vmatpush1.bf16.msra.mxu0 0
          %3212 = vmatprep.subr.bf16.mxu0 0
          %3213 = vmatpush1.bf16.msra.mxu0 0
          %3214 = vmatprep.subr.bf16.mxu0 0
          %3215 = vmatpush1.bf16.msra.mxu0 0
          %3216 = vmatprep.subr.bf16.mxu0 0
          %3217 = vmatpush1.bf16.msra.mxu0 0
          %3218 = vmatprep.subr.bf16.mxu0 0
          %3219 = vmatpush1.bf16.msra.mxu0 0
          %3220 = vmatprep.subr.bf16.mxu0 0
          %3221 = vmatpush1.bf16.msra.mxu0 0
          %3222 = vmatprep.mubr.bf16.mxu0 0
          %3223 = vmatmul.mubr.bf16.gmra.mrb[0].mxu0 %v2525
          %v3224 = vpop.f32.mrb[0].mxu0
          %v3225 = vadd.f32 0.0, %v3224
          %v3226 = vpop.f32.mrb[0].mxu0
          %v3227 = vpop.f32.mrb[0].mxu0
          %v3228 = vadd.f32 0.0, %v3227
          %v3229 = vpop.f32.mrb[0].mxu0
          %3230 = vmatprep.mubr.bf16.mxu0 0
          %3231 = vmatmul.mubr.bf16.gmra.mrb[0].mxu0 %v2528
          %v3232 = vpop.f32.mrb[0].mxu0
          %v3233 = vadd.f32 0.0, %v3232
          %v3234 = vpop.f32.mrb[0].mxu0
          %v3235 = vpop.f32.mrb[0].mxu0
          %v3236 = vadd.f32 0.0, %v3235
          %v3237 = vpop.f32.mrb[0].mxu0
          %3238 = vmatprep.mubr.bf16.mxu0 0
          %3239 = vmatmul.mubr.bf16.gmra.mrb[0].mxu0 %v2531
          %v3240 = vpop.f32.mrb[0].mxu0
          %v3241 = vadd.f32 0.0, %v3240
          %v3242 = vpop.f32.mrb[0].mxu0
          %v3243 = vpop.f32.mrb[0].mxu0
          %v3244 = vadd.f32 0.0, %v3243
          %v3245 = vpop.f32.mrb[0].mxu0
          %3246 = vmatprep.mubr.bf16.mxu0 0
          %3247 = vmatmul.mubr.bf16.gmra.mrb[0].mxu0 %v2534
          %v3248 = vpop.f32.mrb[0].mxu0
          %v3249 = vadd.f32 0.0, %v3248
          %v3250 = vpop.f32.mrb[0].mxu0
          %v3251 = vpop.f32.mrb[0].mxu0
          %v3252 = vadd.f32 0.0, %v3251
          %v3253 = vpop.f32.mrb[0].mxu0
          %3254 = vmatprep.mubr.bf16.mxu0 0
          %3255 = vmatmul.mubr.bf16.gmra.mrb[0].mxu0 %v2537
          %v3256 = vpop.f32.mrb[0].mxu0
          %v3257 = vadd.f32 0.0, %v3256
          %v3258 = vpop.f32.mrb[0].mxu0
          %v3259 = vpop.f32.mrb[0].mxu0
          %v3260 = vadd.f32 0.0, %v3259
          %v3261 = vpop.f32.mrb[0].mxu0
          %3262 = vmatprep.mubr.bf16.mxu0 0
          %3263 = vmatmul.mubr.bf16.gmra.mrb[0].mxu0 %v2540
          %v3264 = vpop.f32.mrb[0].mxu0
          %v3265 = vadd.f32 0.0, %v3264
          %v3266 = vpop.f32.mrb[0].mxu0
          %v3267 = vpop.f32.mrb[0].mxu0
          %v3268 = vadd.f32 0.0, %v3267
          %v3269 = vpop.f32.mrb[0].mxu0
          %3270 = vmatprep.mubr.bf16.mxu0 0
          %3271 = vmatmul.mubr.bf16.gmra.mrb[0].mxu0 %v2543
          %v3272 = vpop.f32.mrb[0].mxu0
          %v3273 = vadd.f32 0.0, %v3272
          %v3274 = vpop.f32.mrb[0].mxu0
          %v3275 = vpop.f32.mrb[0].mxu0
          %v3276 = vadd.f32 0.0, %v3275
          %v3277 = vpop.f32.mrb[0].mxu0
          %3278 = vmatprep.mubr.bf16.mxu0 0
          %3279 = vmatmul.mubr.bf16.gmra.mrb[0].mxu0 %v2522
          %v3280 = vpop.f32.mrb[0].mxu0
          %v3281 = vadd.f32 0.0, %v3280
          %v3282 = vpop.f32.mrb[0].mxu0
          %v3283 = vpop.f32.mrb[0].mxu0
          %v3284 = vadd.f32 0.0, %v3283
          %v3285 = vpop.f32.mrb[0].mxu0
          %3286 = vdwg.mxu0
          %v3287 = vadd.f32 %v3142, %v3225
          %v3288 = vadd.f32 %v3143, %v3228
          %v3289 = vadd.f32 %v3144, %v3233
          %v3290 = vadd.f32 %v3145, %v3236
          %v3291 = vadd.f32 %v3146, %v3241
          %v3292 = vadd.f32 %v3147, %v3244
          %v3293 = vadd.f32 %v3148, %v3249
          %v3294 = vadd.f32 %v3149, %v3252
          %v3295 = vadd.f32 %v3150, %v3257
          %v3296 = vadd.f32 %v3151, %v3260
          %v3297 = vadd.f32 %v3152, %v3265
          %v3298 = vadd.f32 %v3153, %v3268
          %v3299 = vadd.f32 %v3154, %v3273
          %v3300 = vadd.f32 %v3155, %v3276
          %v3301 = vadd.f32 %v3156, %v3281
          %v3302 = vadd.f32 %v3157, %v3284
          %v3303 = vld [vmem:[%s3 + $0xe0] sm:$0xf]
          %v3304 = vld [vmem:[%s3 + $0xe4] sm:$0xf]
          %v3305 = vld [vmem:[%s3 + $0xe8] sm:$0xf]
          %v3306 = vld [vmem:[%s3 + $0xec] sm:$0xf]
          %v3307 = vld [vmem:[%s3 + $0xf0] sm:$0xf]
          %v3308 = vld [vmem:[%s3 + $0xf4] sm:$0xf]
          %v3309 = vld [vmem:[%s3 + $0xf8] sm:$0xf]
          %v3310 = vld [vmem:[%s3 + $0xfc] sm:$0xf]
          %v3319 = vunpack.c.l.b16 %v3303
          %v3320 = vunpack.c.l.b16 %v3304
          %v3321 = vunpack.c.l.b16 %v3305
          %v3322 = vunpack.c.l.b16 %v3306
          %v3323 = vunpack.c.l.b16 %v3307
          %v3324 = vunpack.c.l.b16 %v3308
          %v3325 = vunpack.c.l.b16 %v3309
          %v3326 = vunpack.c.l.b16 %v3310
          %v3327 = vpack.c.b16 %v3320, %v3319
          %v3328 = vpack.c.b16 %v3322, %v3321
          %v3329 = vpack.c.b16 %v3324, %v3323
          %v3330 = vpack.c.b16 %v3326, %v3325
          %3335 = vmatprep.subr.bf16.mxu0 0
          %3336 = vmatpush1.bf16.msra.mxu0 %v3327
          %3337 = vmatprep.subr.bf16.mxu0 0
          %3338 = vmatpush1.bf16.msra.mxu0 %v3328
          %3339 = vmatprep.subr.bf16.mxu0 0
          %3340 = vmatpush1.bf16.msra.mxu0 %v3329
          %3341 = vmatprep.subr.bf16.mxu0 0
          %3342 = vmatpush1.bf16.msra.mxu0 %v3330
          %3343 = vmatprep.subr.bf16.mxu0 0
          %3344 = vmatpush1.bf16.msra.mxu0 0
          %3345 = vmatprep.subr.bf16.mxu0 0
          %3346 = vmatpush1.bf16.msra.mxu0 0
          %3347 = vmatprep.subr.bf16.mxu0 0
          %3348 = vmatpush1.bf16.msra.mxu0 0
          %3349 = vmatprep.subr.bf16.mxu0 0
          %3350 = vmatpush1.bf16.msra.mxu0 0
          %3351 = vmatprep.subr.bf16.mxu0 0
          %3352 = vmatpush1.bf16.msra.mxu0 0
          %3353 = vmatprep.subr.bf16.mxu0 0
          %3354 = vmatpush1.bf16.msra.mxu0 0
          %3355 = vmatprep.subr.bf16.mxu0 0
          %3356 = vmatpush1.bf16.msra.mxu0 0
          %3357 = vmatprep.subr.bf16.mxu0 0
          %3358 = vmatpush1.bf16.msra.mxu0 0
          %3359 = vmatprep.subr.bf16.mxu0 0
          %3360 = vmatpush1.bf16.msra.mxu0 0
          %3361 = vmatprep.subr.bf16.mxu0 0
          %3362 = vmatpush1.bf16.msra.mxu0 0
          %3363 = vmatprep.subr.bf16.mxu0 0
          %3364 = vmatpush1.bf16.msra.mxu0 0
          %3365 = vmatprep.subr.bf16.mxu0 0
          %3366 = vmatpush1.bf16.msra.mxu0 0
          %3367 = vmatprep.mubr.bf16.mxu0 0
          %3368 = vmatmul.mubr.bf16.gmra.mrb[0].mxu0 %v2735
          %v3369 = vpop.f32.mrb[0].mxu0
          %v3370 = vadd.f32 0.0, %v3369
          %v3371 = vpop.f32.mrb[0].mxu0
          %v3372 = vpop.f32.mrb[0].mxu0
          %v3373 = vadd.f32 0.0, %v3372
          %v3374 = vpop.f32.mrb[0].mxu0
          %3375 = vmatprep.mubr.bf16.mxu0 0
          %3376 = vmatmul.mubr.bf16.gmra.mrb[0].mxu0 %v2738
          %v3377 = vpop.f32.mrb[0].mxu0
          %v3378 = vadd.f32 0.0, %v3377
          %v3379 = vpop.f32.mrb[0].mxu0
          %v3380 = vpop.f32.mrb[0].mxu0
          %v3381 = vadd.f32 0.0, %v3380
          %v3382 = vpop.f32.mrb[0].mxu0
          %3383 = vmatprep.mubr.bf16.mxu0 0
          %3384 = vmatmul.mubr.bf16.gmra.mrb[0].mxu0 %v2741
          %v3385 = vpop.f32.mrb[0].mxu0
          %v3386 = vadd.f32 0.0, %v3385
          %v3387 = vpop.f32.mrb[0].mxu0
          %v3388 = vpop.f32.mrb[0].mxu0
          %v3389 = vadd.f32 0.0, %v3388
          %v3390 = vpop.f32.mrb[0].mxu0
          %3391 = vmatprep.mubr.bf16.mxu0 0
          %3392 = vmatmul.mubr.bf16.gmra.mrb[0].mxu0 %v2744
          %v3393 = vpop.f32.mrb[0].mxu0
          %v3394 = vadd.f32 0.0, %v3393
          %v3395 = vpop.f32.mrb[0].mxu0
          %v3396 = vpop.f32.mrb[0].mxu0
          %v3397 = vadd.f32 0.0, %v3396
          %v3398 = vpop.f32.mrb[0].mxu0
          %3399 = vmatprep.mubr.bf16.mxu0 0
          %3400 = vmatmul.mubr.bf16.gmra.mrb[0].mxu0 %v2747
          %v3401 = vpop.f32.mrb[0].mxu0
          %v3402 = vadd.f32 0.0, %v3401
          %v3403 = vpop.f32.mrb[0].mxu0
          %v3404 = vpop.f32.mrb[0].mxu0
          %v3405 = vadd.f32 0.0, %v3404
          %v3406 = vpop.f32.mrb[0].mxu0
          %3407 = vmatprep.mubr.bf16.mxu0 0
          %3408 = vmatmul.mubr.bf16.gmra.mrb[0].mxu0 %v2750
          %v3409 = vpop.f32.mrb[0].mxu0
          %v3410 = vadd.f32 0.0, %v3409
          %v3411 = vpop.f32.mrb[0].mxu0
          %v3412 = vpop.f32.mrb[0].mxu0
          %v3413 = vadd.f32 0.0, %v3412
          %v3414 = vpop.f32.mrb[0].mxu0
          %3415 = vmatprep.mubr.bf16.mxu0 0
          %3416 = vmatmul.mubr.bf16.gmra.mrb[0].mxu0 %v2753
          %v3417 = vpop.f32.mrb[0].mxu0
          %v3418 = vadd.f32 0.0, %v3417
          %v3419 = vpop.f32.mrb[0].mxu0
          %v3420 = vpop.f32.mrb[0].mxu0
          %v3421 = vadd.f32 0.0, %v3420
          %v3422 = vpop.f32.mrb[0].mxu0
          %3423 = vmatprep.mubr.bf16.mxu0 0
          %3424 = vmatmul.mubr.bf16.gmra.mrb[0].mxu0 %v2732
          %v3425 = vpop.f32.mrb[0].mxu0
          %v3426 = vadd.f32 0.0, %v3425
          %v3427 = vpop.f32.mrb[0].mxu0
          %v3428 = vpop.f32.mrb[0].mxu0
          %v3429 = vadd.f32 0.0, %v3428
          %v3430 = vpop.f32.mrb[0].mxu0
          %3431 = vdwg.mxu0
          %v3432 = vadd.f32 %v3287, %v3370
          %v3433 = vadd.f32 %v3288, %v3373
          %v3434 = vadd.f32 %v3289, %v3378
          %v3435 = vadd.f32 %v3290, %v3381
          %v3436 = vadd.f32 %v3291, %v3386
          %v3437 = vadd.f32 %v3292, %v3389
          %v3438 = vadd.f32 %v3293, %v3394
          %v3439 = vadd.f32 %v3294, %v3397
          %v3440 = vadd.f32 %v3295, %v3402
          %v3441 = vadd.f32 %v3296, %v3405
          %v3442 = vadd.f32 %v3297, %v3410
          %v3443 = vadd.f32 %v3298, %v3413
          %v3444 = vadd.f32 %v3299, %v3418
          %v3445 = vadd.f32 %v3300, %v3421
          %v3446 = vadd.f32 %v3301, %v3426
          %v3447 = vadd.f32 %v3302, %v3429
          %v3448 = vld [vmem:[%s3 + $0x100] sm:$0xf]
          %v3449 = vld [vmem:[%s3 + $0x104] sm:$0xf]
          %v3450 = vld [vmem:[%s3 + $0x108] sm:$0xf]
          %v3451 = vld [vmem:[%s3 + $0x10c] sm:$0xf]
          %v3452 = vld [vmem:[%s3 + $0x110] sm:$0xf]
          %v3453 = vld [vmem:[%s3 + $0x114] sm:$0xf]
          %v3454 = vld [vmem:[%s3 + $0x118] sm:$0xf]
          %v3455 = vld [vmem:[%s3 + $0x11c] sm:$0xf]
          %v3464 = vunpack.c.l.b16 %v3448
          %v3465 = vunpack.c.l.b16 %v3449
          %v3466 = vunpack.c.l.b16 %v3450
          %v3467 = vunpack.c.l.b16 %v3451
          %v3468 = vunpack.c.l.b16 %v3452
          %v3469 = vunpack.c.l.b16 %v3453
          %v3470 = vunpack.c.l.b16 %v3454
          %v3471 = vunpack.c.l.b16 %v3455
          %v3472 = vpack.c.b16 %v3465, %v3464
          %v3473 = vpack.c.b16 %v3467, %v3466
          %v3474 = vpack.c.b16 %v3469, %v3468
          %v3475 = vpack.c.b16 %v3471, %v3470
          %3480 = vmatprep.subr.bf16.mxu0 0
          %3481 = vmatpush1.bf16.msra.mxu0 %v3472
          %3482 = vmatprep.subr.bf16.mxu0 0
          %3483 = vmatpush1.bf16.msra.mxu0 %v3473
          %3484 = vmatprep.subr.bf16.mxu0 0
          %3485 = vmatpush1.bf16.msra.mxu0 %v3474
          %3486 = vmatprep.subr.bf16.mxu0 0
          %3487 = vmatpush1.bf16.msra.mxu0 %v3475
          %3488 = vmatprep.subr.bf16.mxu0 0
          %3489 = vmatpush1.bf16.msra.mxu0 0
          %3490 = vmatprep.subr.bf16.mxu0 0
          %3491 = vmatpush1.bf16.msra.mxu0 0
          %3492 = vmatprep.subr.bf16.mxu0 0
          %3493 = vmatpush1.bf16.msra.mxu0 0
          %3494 = vmatprep.subr.bf16.mxu0 0
          %3495 = vmatpush1.bf16.msra.mxu0 0
          %3496 = vmatprep.subr.bf16.mxu0 0
          %3497 = vmatpush1.bf16.msra.mxu0 0
          %3498 = vmatprep.subr.bf16.mxu0 0
          %3499 = vmatpush1.bf16.msra.mxu0 0
          %3500 = vmatprep.subr.bf16.mxu0 0
          %3501 = vmatpush1.bf16.msra.mxu0 0
          %3502 = vmatprep.subr.bf16.mxu0 0
          %3503 = vmatpush1.bf16.msra.mxu0 0
          %3504 = vmatprep.subr.bf16.mxu0 0
          %3505 = vmatpush1.bf16.msra.mxu0 0
          %3506 = vmatprep.subr.bf16.mxu0 0
          %3507 = vmatpush1.bf16.msra.mxu0 0
          %3508 = vmatprep.subr.bf16.mxu0 0
          %3509 = vmatpush1.bf16.msra.mxu0 0
          %3510 = vmatprep.subr.bf16.mxu0 0
          %3511 = vmatpush1.bf16.msra.mxu0 0
          %3512 = vmatprep.mubr.bf16.mxu0 0
          %3513 = vmatmul.mubr.bf16.gmra.mrb[0].mxu0 %v2334
          %v3514 = vpop.f32.mrb[0].mxu0
          %v3515 = vadd.f32 0.0, %v3514
          %v3516 = vpop.f32.mrb[0].mxu0
          %v3517 = vpop.f32.mrb[0].mxu0
          %v3518 = vadd.f32 0.0, %v3517
          %v3519 = vpop.f32.mrb[0].mxu0
          %3520 = vmatprep.mubr.bf16.mxu0 0
          %3521 = vmatmul.mubr.bf16.gmra.mrb[0].mxu0 %v2337
          %v3522 = vpop.f32.mrb[0].mxu0
          %v3523 = vadd.f32 0.0, %v3522
          %v3524 = vpop.f32.mrb[0].mxu0
          %v3525 = vpop.f32.mrb[0].mxu0
          %v3526 = vadd.f32 0.0, %v3525
          %v3527 = vpop.f32.mrb[0].mxu0
          %3528 = vmatprep.mubr.bf16.mxu0 0
          %3529 = vmatmul.mubr.bf16.gmra.mrb[0].mxu0 %v2340
          %v3530 = vpop.f32.mrb[0].mxu0
          %v3531 = vadd.f32 0.0, %v3530
          %v3532 = vpop.f32.mrb[0].mxu0
          %v3533 = vpop.f32.mrb[0].mxu0
          %v3534 = vadd.f32 0.0, %v3533
          %v3535 = vpop.f32.mrb[0].mxu0
          %3536 = vmatprep.mubr.bf16.mxu0 0
          %3537 = vmatmul.mubr.bf16.gmra.mrb[0].mxu0 %v2343
          %v3538 = vpop.f32.mrb[0].mxu0
          %v3539 = vadd.f32 0.0, %v3538
          %v3540 = vpop.f32.mrb[0].mxu0
          %v3541 = vpop.f32.mrb[0].mxu0
          %v3542 = vadd.f32 0.0, %v3541
          %v3543 = vpop.f32.mrb[0].mxu0
          %3544 = vmatprep.mubr.bf16.mxu0 0
          %3545 = vmatmul.mubr.bf16.gmra.mrb[0].mxu0 %v2346
          %v3546 = vpop.f32.mrb[0].mxu0
          %v3547 = vadd.f32 0.0, %v3546
          %v3548 = vpop.f32.mrb[0].mxu0
          %v3549 = vpop.f32.mrb[0].mxu0
          %v3550 = vadd.f32 0.0, %v3549
          %v3551 = vpop.f32.mrb[0].mxu0
          %3552 = vmatprep.mubr.bf16.mxu0 0
          %3553 = vmatmul.mubr.bf16.gmra.mrb[0].mxu0 %v2349
          %v3554 = vpop.f32.mrb[0].mxu0
          %v3555 = vadd.f32 0.0, %v3554
          %v3556 = vpop.f32.mrb[0].mxu0
          %v3557 = vpop.f32.mrb[0].mxu0
          %v3558 = vadd.f32 0.0, %v3557
          %v3559 = vpop.f32.mrb[0].mxu0
          %3560 = vmatprep.mubr.bf16.mxu0 0
          %3561 = vmatmul.mubr.bf16.gmra.mrb[0].mxu0 %v2328
          %v3562 = vpop.f32.mrb[0].mxu0
          %v3563 = vadd.f32 0.0, %v3562
          %v3564 = vpop.f32.mrb[0].mxu0
          %v3565 = vpop.f32.mrb[0].mxu0
          %v3566 = vadd.f32 0.0, %v3565
          %v3567 = vpop.f32.mrb[0].mxu0
          %3568 = vmatprep.mubr.bf16.mxu0 0
          %3569 = vmatmul.mubr.bf16.gmra.mrb[0].mxu0 %v2331
          %v3570 = vpop.f32.mrb[0].mxu0
          %v3571 = vadd.f32 0.0, %v3570
          %v3572 = vpop.f32.mrb[0].mxu0
          %v3573 = vpop.f32.mrb[0].mxu0
          %v3574 = vadd.f32 0.0, %v3573
          %v3575 = vpop.f32.mrb[0].mxu0
          %3576 = vdwg.mxu0
          %v3577 = vadd.f32 %v3432, %v3515
          %v3578 = vadd.f32 %v3433, %v3518
          %v3579 = vadd.f32 %v3434, %v3523
          %v3580 = vadd.f32 %v3435, %v3526
          %v3581 = vadd.f32 %v3436, %v3531
          %v3582 = vadd.f32 %v3437, %v3534
          %v3583 = vadd.f32 %v3438, %v3539
          %v3584 = vadd.f32 %v3439, %v3542
          %v3585 = vadd.f32 %v3440, %v3547
          %v3586 = vadd.f32 %v3441, %v3550
          %v3587 = vadd.f32 %v3442, %v3555
          %v3588 = vadd.f32 %v3443, %v3558
          %v3589 = vadd.f32 %v3444, %v3563
          %v3590 = vadd.f32 %v3445, %v3566
          %v3591 = vadd.f32 %v3446, %v3571
          %v3592 = vadd.f32 %v3447, %v3574
          %v3593 = vld [vmem:[%s3 + $0x120] sm:$0xf]
          %v3594 = vld [vmem:[%s3 + $0x124] sm:$0xf]
          %v3595 = vld [vmem:[%s3 + $0x128] sm:$0xf]
          %v3596 = vld [vmem:[%s3 + $0x12c] sm:$0xf]
          %v3597 = vld [vmem:[%s3 + $0x130] sm:$0xf]
          %v3598 = vld [vmem:[%s3 + $0x134] sm:$0xf]
          %v3599 = vld [vmem:[%s3 + $0x138] sm:$0xf]
          %v3600 = vld [vmem:[%s3 + $0x13c] sm:$0xf]
          %v3609 = vunpack.c.l.b16 %v3593
          %v3610 = vunpack.c.l.b16 %v3594
          %v3611 = vunpack.c.l.b16 %v3595
          %v3612 = vunpack.c.l.b16 %v3596
          %v3613 = vunpack.c.l.b16 %v3597
          %v3614 = vunpack.c.l.b16 %v3598
          %v3615 = vunpack.c.l.b16 %v3599
          %v3616 = vunpack.c.l.b16 %v3600
          %v3617 = vpack.c.b16 %v3610, %v3609
          %v3618 = vpack.c.b16 %v3612, %v3611
          %v3619 = vpack.c.b16 %v3614, %v3613
          %v3620 = vpack.c.b16 %v3616, %v3615
          %3625 = vmatprep.subr.bf16.mxu0 0
          %3626 = vmatpush1.bf16.msra.mxu0 %v3617
          %3627 = vmatprep.subr.bf16.mxu0 0
          %3628 = vmatpush1.bf16.msra.mxu0 %v3618
          %3629 = vmatprep.subr.bf16.mxu0 0
          %3630 = vmatpush1.bf16.msra.mxu0 %v3619
          %3631 = vmatprep.subr.bf16.mxu0 0
          %3632 = vmatpush1.bf16.msra.mxu0 %v3620
          %3633 = vmatprep.subr.bf16.mxu0 0
          %3634 = vmatpush1.bf16.msra.mxu0 0
          %3635 = vmatprep.subr.bf16.mxu0 0
          %3636 = vmatpush1.bf16.msra.mxu0 0
          %3637 = vmatprep.subr.bf16.mxu0 0
          %3638 = vmatpush1.bf16.msra.mxu0 0
          %3639 = vmatprep.subr.bf16.mxu0 0
          %3640 = vmatpush1.bf16.msra.mxu0 0
          %3641 = vmatprep.subr.bf16.mxu0 0
          %3642 = vmatpush1.bf16.msra.mxu0 0
          %3643 = vmatprep.subr.bf16.mxu0 0
          %3644 = vmatpush1.bf16.msra.mxu0 0
          %3645 = vmatprep.subr.bf16.mxu0 0
          %3646 = vmatpush1.bf16.msra.mxu0 0
          %3647 = vmatprep.subr.bf16.mxu0 0
          %3648 = vmatpush1.bf16.msra.mxu0 0
          %3649 = vmatprep.subr.bf16.mxu0 0
          %3650 = vmatpush1.bf16.msra.mxu0 0
          %3651 = vmatprep.subr.bf16.mxu0 0
          %3652 = vmatpush1.bf16.msra.mxu0 0
          %3653 = vmatprep.subr.bf16.mxu0 0
          %3654 = vmatpush1.bf16.msra.mxu0 0
          %3655 = vmatprep.subr.bf16.mxu0 0
          %3656 = vmatpush1.bf16.msra.mxu0 0
          %3657 = vmatprep.mubr.bf16.mxu0 0
          %3658 = vmatmul.mubr.bf16.gmra.mrb[0].mxu0 %v2189
          %v3659 = vpop.f32.mrb[0].mxu0
          %v3660 = vadd.f32 0.0, %v3659
          %v3661 = vpop.f32.mrb[0].mxu0
          %v3662 = vpop.f32.mrb[0].mxu0
          %v3663 = vadd.f32 0.0, %v3662
          %v3664 = vpop.f32.mrb[0].mxu0
          %3665 = vmatprep.mubr.bf16.mxu0 0
          %3666 = vmatmul.mubr.bf16.gmra.mrb[0].mxu0 %v2192
          %v3667 = vpop.f32.mrb[0].mxu0
          %v3668 = vadd.f32 0.0, %v3667
          %v3669 = vpop.f32.mrb[0].mxu0
          %v3670 = vpop.f32.mrb[0].mxu0
          %v3671 = vadd.f32 0.0, %v3670
          %v3672 = vpop.f32.mrb[0].mxu0
          %3673 = vmatprep.mubr.bf16.mxu0 0
          %3674 = vmatmul.mubr.bf16.gmra.mrb[0].mxu0 %v2195
          %v3675 = vpop.f32.mrb[0].mxu0
          %v3676 = vadd.f32 0.0, %v3675
          %v3677 = vpop.f32.mrb[0].mxu0
          %v3678 = vpop.f32.mrb[0].mxu0
          %v3679 = vadd.f32 0.0, %v3678
          %v3680 = vpop.f32.mrb[0].mxu0
          %3681 = vmatprep.mubr.bf16.mxu0 0
          %3682 = vmatmul.mubr.bf16.gmra.mrb[0].mxu0 %v2198
          %v3683 = vpop.f32.mrb[0].mxu0
          %v3684 = vadd.f32 0.0, %v3683
          %v3685 = vpop.f32.mrb[0].mxu0
          %v3686 = vpop.f32.mrb[0].mxu0
          %v3687 = vadd.f32 0.0, %v3686
          %v3688 = vpop.f32.mrb[0].mxu0
          %3689 = vmatprep.mubr.bf16.mxu0 0
          %3690 = vmatmul.mubr.bf16.gmra.mrb[0].mxu0 %v2201
          %v3691 = vpop.f32.mrb[0].mxu0
          %v3692 = vadd.f32 0.0, %v3691
          %v3693 = vpop.f32.mrb[0].mxu0
          %v3694 = vpop.f32.mrb[0].mxu0
          %v3695 = vadd.f32 0.0, %v3694
          %v3696 = vpop.f32.mrb[0].mxu0
          %3697 = vmatprep.mubr.bf16.mxu0 0
          %3698 = vmatmul.mubr.bf16.gmra.mrb[0].mxu0 %v2204
          %v3699 = vpop.f32.mrb[0].mxu0
          %v3700 = vadd.f32 0.0, %v3699
          %v3701 = vpop.f32.mrb[0].mxu0
          %v3702 = vpop.f32.mrb[0].mxu0
          %v3703 = vadd.f32 0.0, %v3702
          %v3704 = vpop.f32.mrb[0].mxu0
          %3705 = vmatprep.mubr.bf16.mxu0 0
          %3706 = vmatmul.mubr.bf16.gmra.mrb[0].mxu0 %v2183
          %v3707 = vpop.f32.mrb[0].mxu0
          %v3708 = vadd.f32 0.0, %v3707
          %v3709 = vpop.f32.mrb[0].mxu0
          %v3710 = vpop.f32.mrb[0].mxu0
          %v3711 = vadd.f32 0.0, %v3710
          %v3712 = vpop.f32.mrb[0].mxu0
          %3713 = vmatprep.mubr.bf16.mxu0 0
          %3714 = vmatmul.mubr.bf16.gmra.mrb[0].mxu0 %v2186
          %v3715 = vpop.f32.mrb[0].mxu0
          %v3716 = vadd.f32 0.0, %v3715
          %v3717 = vpop.f32.mrb[0].mxu0
          %v3718 = vpop.f32.mrb[0].mxu0
          %v3719 = vadd.f32 0.0, %v3718
          %v3720 = vpop.f32.mrb[0].mxu0
          %3721 = vdwg.mxu0
          %v3722 = vadd.f32 %v3577, %v3660
          %v3723 = vadd.f32 %v3578, %v3663
          %v3724 = vadd.f32 %v3579, %v3668
          %v3725 = vadd.f32 %v3580, %v3671
          %v3726 = vadd.f32 %v3581, %v3676
          %v3727 = vadd.f32 %v3582, %v3679
          %v3728 = vadd.f32 %v3583, %v3684
          %v3729 = vadd.f32 %v3584, %v3687
          %v3730 = vadd.f32 %v3585, %v3692
          %v3731 = vadd.f32 %v3586, %v3695
          %v3732 = vadd.f32 %v3587, %v3700
          %v3733 = vadd.f32 %v3588, %v3703
          %v3734 = vadd.f32 %v3589, %v3708
          %v3735 = vadd.f32 %v3590, %v3711
          %v3736 = vadd.f32 %v3591, %v3716
          %v3737 = vadd.f32 %v3592, %v3719
          %v3738 = vld [vmem:[%s3 + $0x140] sm:$0xf]
          %v3739 = vld [vmem:[%s3 + $0x144] sm:$0xf]
          %v3740 = vld [vmem:[%s3 + $0x148] sm:$0xf]
          %v3741 = vld [vmem:[%s3 + $0x14c] sm:$0xf]
          %v3742 = vld [vmem:[%s3 + $0x150] sm:$0xf]
          %v3743 = vld [vmem:[%s3 + $0x154] sm:$0xf]
          %v3744 = vld [vmem:[%s3 + $0x158] sm:$0xf]
          %v3745 = vld [vmem:[%s3 + $0x15c] sm:$0xf]
          %v3754 = vunpack.c.l.b16 %v3738
          %v3755 = vunpack.c.l.b16 %v3739
          %v3756 = vunpack.c.l.b16 %v3740
          %v3757 = vunpack.c.l.b16 %v3741
          %v3758 = vunpack.c.l.b16 %v3742
          %v3759 = vunpack.c.l.b16 %v3743
          %v3760 = vunpack.c.l.b16 %v3744
          %v3761 = vunpack.c.l.b16 %v3745
          %v3762 = vpack.c.b16 %v3755, %v3754
          %v3763 = vpack.c.b16 %v3757, %v3756
          %v3764 = vpack.c.b16 %v3759, %v3758
          %v3765 = vpack.c.b16 %v3761, %v3760
          %3770 = vmatprep.subr.bf16.mxu0 0
          %3771 = vmatpush1.bf16.msra.mxu0 %v3762
          %3772 = vmatprep.subr.bf16.mxu0 0
          %3773 = vmatpush1.bf16.msra.mxu0 %v3763
          %3774 = vmatprep.subr.bf16.mxu0 0
          %3775 = vmatpush1.bf16.msra.mxu0 %v3764
          %3776 = vmatprep.subr.bf16.mxu0 0
          %3777 = vmatpush1.bf16.msra.mxu0 %v3765
          %3778 = vmatprep.subr.bf16.mxu0 0
          %3779 = vmatpush1.bf16.msra.mxu0 0
          %3780 = vmatprep.subr.bf16.mxu0 0
          %3781 = vmatpush1.bf16.msra.mxu0 0
          %3782 = vmatprep.subr.bf16.mxu0 0
          %3783 = vmatpush1.bf16.msra.mxu0 0
          %3784 = vmatprep.subr.bf16.mxu0 0
          %3785 = vmatpush1.bf16.msra.mxu0 0
          %3786 = vmatprep.subr.bf16.mxu0 0
          %3787 = vmatpush1.bf16.msra.mxu0 0
          %3788 = vmatprep.subr.bf16.mxu0 0
          %3789 = vmatpush1.bf16.msra.mxu0 0
          %3790 = vmatprep.subr.bf16.mxu0 0
          %3791 = vmatpush1.bf16.msra.mxu0 0
          %3792 = vmatprep.subr.bf16.mxu0 0
          %3793 = vmatpush1.bf16.msra.mxu0 0
          %3794 = vmatprep.subr.bf16.mxu0 0
          %3795 = vmatpush1.bf16.msra.mxu0 0
          %3796 = vmatprep.subr.bf16.mxu0 0
          %3797 = vmatpush1.bf16.msra.mxu0 0
          %3798 = vmatprep.subr.bf16.mxu0 0
          %3799 = vmatpush1.bf16.msra.mxu0 0
          %3800 = vmatprep.subr.bf16.mxu0 0
          %3801 = vmatpush1.bf16.msra.mxu0 0
          %3802 = vmatprep.mubr.bf16.mxu0 0
          %3803 = vmatmul.mubr.bf16.gmra.mrb[0].mxu0 %v2528
          %v3804 = vpop.f32.mrb[0].mxu0
          %v3805 = vadd.f32 0.0, %v3804
          %v3806 = vpop.f32.mrb[0].mxu0
          %v3807 = vpop.f32.mrb[0].mxu0
          %v3808 = vadd.f32 0.0, %v3807
          %v3809 = vpop.f32.mrb[0].mxu0
          %3810 = vmatprep.mubr.bf16.mxu0 0
          %3811 = vmatmul.mubr.bf16.gmra.mrb[0].mxu0 %v2531
          %v3812 = vpop.f32.mrb[0].mxu0
          %v3813 = vadd.f32 0.0, %v3812
          %v3814 = vpop.f32.mrb[0].mxu0
          %v3815 = vpop.f32.mrb[0].mxu0
          %v3816 = vadd.f32 0.0, %v3815
          %v3817 = vpop.f32.mrb[0].mxu0
          %3818 = vmatprep.mubr.bf16.mxu0 0
          %3819 = vmatmul.mubr.bf16.gmra.mrb[0].mxu0 %v2534
          %v3820 = vpop.f32.mrb[0].mxu0
          %v3821 = vadd.f32 0.0, %v3820
          %v3822 = vpop.f32.mrb[0].mxu0
          %v3823 = vpop.f32.mrb[0].mxu0
          %v3824 = vadd.f32 0.0, %v3823
          %v3825 = vpop.f32.mrb[0].mxu0
          %3826 = vmatprep.mubr.bf16.mxu0 0
          %3827 = vmatmul.mubr.bf16.gmra.mrb[0].mxu0 %v2537
          %v3828 = vpop.f32.mrb[0].mxu0
          %v3829 = vadd.f32 0.0, %v3828
          %v3830 = vpop.f32.mrb[0].mxu0
          %v3831 = vpop.f32.mrb[0].mxu0
          %v3832 = vadd.f32 0.0, %v3831
          %v3833 = vpop.f32.mrb[0].mxu0
          %3834 = vmatprep.mubr.bf16.mxu0 0
          %3835 = vmatmul.mubr.bf16.gmra.mrb[0].mxu0 %v2540
          %v3836 = vpop.f32.mrb[0].mxu0
          %v3837 = vadd.f32 0.0, %v3836
          %v3838 = vpop.f32.mrb[0].mxu0
          %v3839 = vpop.f32.mrb[0].mxu0
          %v3840 = vadd.f32 0.0, %v3839
          %v3841 = vpop.f32.mrb[0].mxu0
          %3842 = vmatprep.mubr.bf16.mxu0 0
          %3843 = vmatmul.mubr.bf16.gmra.mrb[0].mxu0 %v2543
          %v3844 = vpop.f32.mrb[0].mxu0
          %v3845 = vadd.f32 0.0, %v3844
          %v3846 = vpop.f32.mrb[0].mxu0
          %v3847 = vpop.f32.mrb[0].mxu0
          %v3848 = vadd.f32 0.0, %v3847
          %v3849 = vpop.f32.mrb[0].mxu0
          %3850 = vmatprep.mubr.bf16.mxu0 0
          %3851 = vmatmul.mubr.bf16.gmra.mrb[0].mxu0 %v2522
          %v3852 = vpop.f32.mrb[0].mxu0
          %v3853 = vadd.f32 0.0, %v3852
          %v3854 = vpop.f32.mrb[0].mxu0
          %v3855 = vpop.f32.mrb[0].mxu0
          %v3856 = vadd.f32 0.0, %v3855
          %v3857 = vpop.f32.mrb[0].mxu0
          %3858 = vmatprep.mubr.bf16.mxu0 0
          %3859 = vmatmul.mubr.bf16.gmra.mrb[0].mxu0 %v2525
          %v3860 = vpop.f32.mrb[0].mxu0
          %v3861 = vadd.f32 0.0, %v3860
          %v3862 = vpop.f32.mrb[0].mxu0
          %v3863 = vpop.f32.mrb[0].mxu0
          %v3864 = vadd.f32 0.0, %v3863
          %v3865 = vpop.f32.mrb[0].mxu0
          %3866 = vdwg.mxu0
          %v3867 = vadd.f32 %v3722, %v3805
          %v3868 = vadd.f32 %v3723, %v3808
          %v3869 = vadd.f32 %v3724, %v3813
          %v3870 = vadd.f32 %v3725, %v3816
          %v3871 = vadd.f32 %v3726, %v3821
          %v3872 = vadd.f32 %v3727, %v3824
          %v3873 = vadd.f32 %v3728, %v3829
          %v3874 = vadd.f32 %v3729, %v3832
          %v3875 = vadd.f32 %v3730, %v3837
          %v3876 = vadd.f32 %v3731, %v3840
          %v3877 = vadd.f32 %v3732, %v3845
          %v3878 = vadd.f32 %v3733, %v3848
          %v3879 = vadd.f32 %v3734, %v3853
          %v3880 = vadd.f32 %v3735, %v3856
          %v3881 = vadd.f32 %v3736, %v3861
          %v3882 = vadd.f32 %v3737, %v3864
          %v3883 = vld [vmem:[%s3 + $0x160] sm:$0xf]
          %v3884 = vld [vmem:[%s3 + $0x164] sm:$0xf]
          %v3885 = vld [vmem:[%s3 + $0x168] sm:$0xf]
          %v3886 = vld [vmem:[%s3 + $0x16c] sm:$0xf]
          %v3887 = vld [vmem:[%s3 + $0x170] sm:$0xf]
          %v3888 = vld [vmem:[%s3 + $0x174] sm:$0xf]
          %v3889 = vld [vmem:[%s3 + $0x178] sm:$0xf]
          %v3890 = vld [vmem:[%s3 + $0x17c] sm:$0xf]
          %v3899 = vunpack.c.l.b16 %v3883
          %v3900 = vunpack.c.l.b16 %v3884
          %v3901 = vunpack.c.l.b16 %v3885
          %v3902 = vunpack.c.l.b16 %v3886
          %v3903 = vunpack.c.l.b16 %v3887
          %v3904 = vunpack.c.l.b16 %v3888
          %v3905 = vunpack.c.l.b16 %v3889
          %v3906 = vunpack.c.l.b16 %v3890
          %v3907 = vpack.c.b16 %v3900, %v3899
          %v3908 = vpack.c.b16 %v3902, %v3901
          %v3909 = vpack.c.b16 %v3904, %v3903
          %v3910 = vpack.c.b16 %v3906, %v3905
          %3915 = vmatprep.subr.bf16.mxu0 0
          %3916 = vmatpush1.bf16.msra.mxu0 %v3907
          %3917 = vmatprep.subr.bf16.mxu0 0
          %3918 = vmatpush1.bf16.msra.mxu0 %v3908
          %3919 = vmatprep.subr.bf16.mxu0 0
          %3920 = vmatpush1.bf16.msra.mxu0 %v3909
          %3921 = vmatprep.subr.bf16.mxu0 0
          %3922 = vmatpush1.bf16.msra.mxu0 %v3910
          %3923 = vmatprep.subr.bf16.mxu0 0
          %3924 = vmatpush1.bf16.msra.mxu0 0
          %3925 = vmatprep.subr.bf16.mxu0 0
          %3926 = vmatpush1.bf16.msra.mxu0 0
          %3927 = vmatprep.subr.bf16.mxu0 0
          %3928 = vmatpush1.bf16.msra.mxu0 0
          %3929 = vmatprep.subr.bf16.mxu0 0
          %3930 = vmatpush1.bf16.msra.mxu0 0
          %3931 = vmatprep.subr.bf16.mxu0 0
          %3932 = vmatpush1.bf16.msra.mxu0 0
          %3933 = vmatprep.subr.bf16.mxu0 0
          %3934 = vmatpush1.bf16.msra.mxu0 0
          %3935 = vmatprep.subr.bf16.mxu0 0
          %3936 = vmatpush1.bf16.msra.mxu0 0
          %3937 = vmatprep.subr.bf16.mxu0 0
          %3938 = vmatpush1.bf16.msra.mxu0 0
          %3939 = vmatprep.subr.bf16.mxu0 0
          %3940 = vmatpush1.bf16.msra.mxu0 0
          %3941 = vmatprep.subr.bf16.mxu0 0
          %3942 = vmatpush1.bf16.msra.mxu0 0
          %3943 = vmatprep.subr.bf16.mxu0 0
          %3944 = vmatpush1.bf16.msra.mxu0 0
          %3945 = vmatprep.subr.bf16.mxu0 0
          %3946 = vmatpush1.bf16.msra.mxu0 0
          %3947 = vmatprep.mubr.bf16.mxu0 0
          %3948 = vmatmul.mubr.bf16.gmra.mrb[0].mxu0 %v2738
          %v3949 = vpop.f32.mrb[0].mxu0
          %v3950 = vadd.f32 0.0, %v3949
          %v3951 = vpop.f32.mrb[0].mxu0
          %v3952 = vpop.f32.mrb[0].mxu0
          %v3953 = vadd.f32 0.0, %v3952
          %v3954 = vpop.f32.mrb[0].mxu0
          %3955 = vmatprep.mubr.bf16.mxu0 0
          %3956 = vmatmul.mubr.bf16.gmra.mrb[0].mxu0 %v2741
          %v3957 = vpop.f32.mrb[0].mxu0
          %v3958 = vadd.f32 0.0, %v3957
          %v3959 = vpop.f32.mrb[0].mxu0
          %v3960 = vpop.f32.mrb[0].mxu0
          %v3961 = vadd.f32 0.0, %v3960
          %v3962 = vpop.f32.mrb[0].mxu0
          %3963 = vmatprep.mubr.bf16.mxu0 0
          %3964 = vmatmul.mubr.bf16.gmra.mrb[0].mxu0 %v2744
          %v3965 = vpop.f32.mrb[0].mxu0
          %v3966 = vadd.f32 0.0, %v3965
          %v3967 = vpop.f32.mrb[0].mxu0
          %v3968 = vpop.f32.mrb[0].mxu0
          %v3969 = vadd.f32 0.0, %v3968
          %v3970 = vpop.f32.mrb[0].mxu0
          %3971 = vmatprep.mubr.bf16.mxu0 0
          %3972 = vmatmul.mubr.bf16.gmra.mrb[0].mxu0 %v2747
          %v3973 = vpop.f32.mrb[0].mxu0
          %v3974 = vadd.f32 0.0, %v3973
          %v3975 = vpop.f32.mrb[0].mxu0
          %v3976 = vpop.f32.mrb[0].mxu0
          %v3977 = vadd.f32 0.0, %v3976
          %v3978 = vpop.f32.mrb[0].mxu0
          %3979 = vmatprep.mubr.bf16.mxu0 0
          %3980 = vmatmul.mubr.bf16.gmra.mrb[0].mxu0 %v2750
          %v3981 = vpop.f32.mrb[0].mxu0
          %v3982 = vadd.f32 0.0, %v3981
          %v3983 = vpop.f32.mrb[0].mxu0
          %v3984 = vpop.f32.mrb[0].mxu0
          %v3985 = vadd.f32 0.0, %v3984
          %v3986 = vpop.f32.mrb[0].mxu0
          %3987 = vmatprep.mubr.bf16.mxu0 0
          %3988 = vmatmul.mubr.bf16.gmra.mrb[0].mxu0 %v2753
          %v3989 = vpop.f32.mrb[0].mxu0
          %v3990 = vadd.f32 0.0, %v3989
          %v3991 = vpop.f32.mrb[0].mxu0
          %v3992 = vpop.f32.mrb[0].mxu0
          %v3993 = vadd.f32 0.0, %v3992
          %v3994 = vpop.f32.mrb[0].mxu0
          %3995 = vmatprep.mubr.bf16.mxu0 0
          %3996 = vmatmul.mubr.bf16.gmra.mrb[0].mxu0 %v2732
          %v3997 = vpop.f32.mrb[0].mxu0
          %v3998 = vadd.f32 0.0, %v3997
          %v3999 = vpop.f32.mrb[0].mxu0
          %v4000 = vpop.f32.mrb[0].mxu0
          %v4001 = vadd.f32 0.0, %v4000
          %v4002 = vpop.f32.mrb[0].mxu0
          %4003 = vmatprep.mubr.bf16.mxu0 0
          %4004 = vmatmul.mubr.bf16.gmra.mrb[0].mxu0 %v2735
          %v4005 = vpop.f32.mrb[0].mxu0
          %v4006 = vadd.f32 0.0, %v4005
          %v4007 = vpop.f32.mrb[0].mxu0
          %v4008 = vpop.f32.mrb[0].mxu0
          %v4009 = vadd.f32 0.0, %v4008
          %v4010 = vpop.f32.mrb[0].mxu0
          %4011 = vdwg.mxu0
          %v4012 = vadd.f32 %v3867, %v3950
          %v4013 = vadd.f32 %v3868, %v3953
          %v4014 = vadd.f32 %v3869, %v3958
          %v4015 = vadd.f32 %v3870, %v3961
          %v4016 = vadd.f32 %v3871, %v3966
          %v4017 = vadd.f32 %v3872, %v3969
          %v4018 = vadd.f32 %v3873, %v3974
          %v4019 = vadd.f32 %v3874, %v3977
          %v4020 = vadd.f32 %v3875, %v3982
          %v4021 = vadd.f32 %v3876, %v3985
          %v4022 = vadd.f32 %v3877, %v3990
          %v4023 = vadd.f32 %v3878, %v3993
          %v4024 = vadd.f32 %v3879, %v3998
          %v4025 = vadd.f32 %v3880, %v4001
          %v4026 = vadd.f32 %v3881, %v4006
          %v4027 = vadd.f32 %v3882, %v4009
          %v4028 = vld [vmem:[%s3 + $0x180] sm:$0xf]
          %v4029 = vld [vmem:[%s3 + $0x184] sm:$0xf]
          %v4030 = vld [vmem:[%s3 + $0x188] sm:$0xf]
          %v4031 = vld [vmem:[%s3 + $0x18c] sm:$0xf]
          %v4032 = vld [vmem:[%s3 + $0x190] sm:$0xf]
          %v4033 = vld [vmem:[%s3 + $0x194] sm:$0xf]
          %v4034 = vld [vmem:[%s3 + $0x198] sm:$0xf]
          %v4035 = vld [vmem:[%s3 + $0x19c] sm:$0xf]
          %v4044 = vunpack.c.l.b16 %v4028
          %v4045 = vunpack.c.l.b16 %v4029
          %v4046 = vunpack.c.l.b16 %v4030
          %v4047 = vunpack.c.l.b16 %v4031
          %v4048 = vunpack.c.l.b16 %v4032
          %v4049 = vunpack.c.l.b16 %v4033
          %v4050 = vunpack.c.l.b16 %v4034
          %v4051 = vunpack.c.l.b16 %v4035
          %v4052 = vpack.c.b16 %v4045, %v4044
          %v4053 = vpack.c.b16 %v4047, %v4046
          %v4054 = vpack.c.b16 %v4049, %v4048
          %v4055 = vpack.c.b16 %v4051, %v4050
          %4060 = vmatprep.subr.bf16.mxu0 0
          %4061 = vmatpush1.bf16.msra.mxu0 %v4052
          %4062 = vmatprep.subr.bf16.mxu0 0
          %4063 = vmatpush1.bf16.msra.mxu0 %v4053
          %4064 = vmatprep.subr.bf16.mxu0 0
          %4065 = vmatpush1.bf16.msra.mxu0 %v4054
          %4066 = vmatprep.subr.bf16.mxu0 0
          %4067 = vmatpush1.bf16.msra.mxu0 %v4055
          %4068 = vmatprep.subr.bf16.mxu0 0
          %4069 = vmatpush1.bf16.msra.mxu0 0
          %4070 = vmatprep.subr.bf16.mxu0 0
          %4071 = vmatpush1.bf16.msra.mxu0 0
          %4072 = vmatprep.subr.bf16.mxu0 0
          %4073 = vmatpush1.bf16.msra.mxu0 0
          %4074 = vmatprep.subr.bf16.mxu0 0
          %4075 = vmatpush1.bf16.msra.mxu0 0
          %4076 = vmatprep.subr.bf16.mxu0 0
          %4077 = vmatpush1.bf16.msra.mxu0 0
          %4078 = vmatprep.subr.bf16.mxu0 0
          %4079 = vmatpush1.bf16.msra.mxu0 0
          %4080 = vmatprep.subr.bf16.mxu0 0
          %4081 = vmatpush1.bf16.msra.mxu0 0
          %4082 = vmatprep.subr.bf16.mxu0 0
          %4083 = vmatpush1.bf16.msra.mxu0 0
          %4084 = vmatprep.subr.bf16.mxu0 0
          %4085 = vmatpush1.bf16.msra.mxu0 0
          %4086 = vmatprep.subr.bf16.mxu0 0
          %4087 = vmatpush1.bf16.msra.mxu0 0
          %4088 = vmatprep.subr.bf16.mxu0 0
          %4089 = vmatpush1.bf16.msra.mxu0 0
          %4090 = vmatprep.subr.bf16.mxu0 0
          %4091 = vmatpush1.bf16.msra.mxu0 0
          %4092 = vmatprep.mubr.bf16.mxu0 0
          %4093 = vmatmul.mubr.bf16.gmra.mrb[0].mxu0 %v2337
          %v4094 = vpop.f32.mrb[0].mxu0
          %v4095 = vadd.f32 0.0, %v4094
          %v4096 = vpop.f32.mrb[0].mxu0
          %v4097 = vpop.f32.mrb[0].mxu0
          %v4098 = vadd.f32 0.0, %v4097
          %v4099 = vpop.f32.mrb[0].mxu0
          %4100 = vmatprep.mubr.bf16.mxu0 0
          %4101 = vmatmul.mubr.bf16.gmra.mrb[0].mxu0 %v2340
          %v4102 = vpop.f32.mrb[0].mxu0
          %v4103 = vadd.f32 0.0, %v4102
          %v4104 = vpop.f32.mrb[0].mxu0
          %v4105 = vpop.f32.mrb[0].mxu0
          %v4106 = vadd.f32 0.0, %v4105
          %v4107 = vpop.f32.mrb[0].mxu0
          %4108 = vmatprep.mubr.bf16.mxu0 0
          %4109 = vmatmul.mubr.bf16.gmra.mrb[0].mxu0 %v2343
          %v4110 = vpop.f32.mrb[0].mxu0
          %v4111 = vadd.f32 0.0, %v4110
          %v4112 = vpop.f32.mrb[0].mxu0
          %v4113 = vpop.f32.mrb[0].mxu0
          %v4114 = vadd.f32 0.0, %v4113
          %v4115 = vpop.f32.mrb[0].mxu0
          %4116 = vmatprep.mubr.bf16.mxu0 0
          %4117 = vmatmul.mubr.bf16.gmra.mrb[0].mxu0 %v2346
          %v4118 = vpop.f32.mrb[0].mxu0
          %v4119 = vadd.f32 0.0, %v4118
          %v4120 = vpop.f32.mrb[0].mxu0
          %v4121 = vpop.f32.mrb[0].mxu0
          %v4122 = vadd.f32 0.0, %v4121
          %v4123 = vpop.f32.mrb[0].mxu0
          %4124 = vmatprep.mubr.bf16.mxu0 0
          %4125 = vmatmul.mubr.bf16.gmra.mrb[0].mxu0 %v2349
          %v4126 = vpop.f32.mrb[0].mxu0
          %v4127 = vadd.f32 0.0, %v4126
          %v4128 = vpop.f32.mrb[0].mxu0
          %v4129 = vpop.f32.mrb[0].mxu0
          %v4130 = vadd.f32 0.0, %v4129
          %v4131 = vpop.f32.mrb[0].mxu0
          %4132 = vmatprep.mubr.bf16.mxu0 0
          %4133 = vmatmul.mubr.bf16.gmra.mrb[0].mxu0 %v2328
          %v4134 = vpop.f32.mrb[0].mxu0
          %v4135 = vadd.f32 0.0, %v4134
          %v4136 = vpop.f32.mrb[0].mxu0
          %v4137 = vpop.f32.mrb[0].mxu0
          %v4138 = vadd.f32 0.0, %v4137
          %v4139 = vpop.f32.mrb[0].mxu0
          %4140 = vmatprep.mubr.bf16.mxu0 0
          %4141 = vmatmul.mubr.bf16.gmra.mrb[0].mxu0 %v2331
          %v4142 = vpop.f32.mrb[0].mxu0
          %v4143 = vadd.f32 0.0, %v4142
          %v4144 = vpop.f32.mrb[0].mxu0
          %v4145 = vpop.f32.mrb[0].mxu0
          %v4146 = vadd.f32 0.0, %v4145
          %v4147 = vpop.f32.mrb[0].mxu0
          %4148 = vmatprep.mubr.bf16.mxu0 0
          %4149 = vmatmul.mubr.bf16.gmra.mrb[0].mxu0 %v2334
          %v4150 = vpop.f32.mrb[0].mxu0
          %v4151 = vadd.f32 0.0, %v4150
          %v4152 = vpop.f32.mrb[0].mxu0
          %v4153 = vpop.f32.mrb[0].mxu0
          %v4154 = vadd.f32 0.0, %v4153
          %v4155 = vpop.f32.mrb[0].mxu0
          %4156 = vdwg.mxu0
          %v4157 = vadd.f32 %v4012, %v4095
          %v4158 = vadd.f32 %v4013, %v4098
          %v4159 = vadd.f32 %v4014, %v4103
          %v4160 = vadd.f32 %v4015, %v4106
          %v4161 = vadd.f32 %v4016, %v4111
          %v4162 = vadd.f32 %v4017, %v4114
          %v4163 = vadd.f32 %v4018, %v4119
          %v4164 = vadd.f32 %v4019, %v4122
          %v4165 = vadd.f32 %v4020, %v4127
          %v4166 = vadd.f32 %v4021, %v4130
          %v4167 = vadd.f32 %v4022, %v4135
          %v4168 = vadd.f32 %v4023, %v4138
          %v4169 = vadd.f32 %v4024, %v4143
          %v4170 = vadd.f32 %v4025, %v4146
          %v4171 = vadd.f32 %v4026, %v4151
          %v4172 = vadd.f32 %v4027, %v4154
          %v4173 = vld [vmem:[%s3 + $0x1a0] sm:$0xf]
          %v4174 = vld [vmem:[%s3 + $0x1a4] sm:$0xf]
          %v4175 = vld [vmem:[%s3 + $0x1a8] sm:$0xf]
          %v4176 = vld [vmem:[%s3 + $0x1ac] sm:$0xf]
          %v4177 = vld [vmem:[%s3 + $0x1b0] sm:$0xf]
          %v4178 = vld [vmem:[%s3 + $0x1b4] sm:$0xf]
          %v4179 = vld [vmem:[%s3 + $0x1b8] sm:$0xf]
          %v4180 = vld [vmem:[%s3 + $0x1bc] sm:$0xf]
          %v4189 = vunpack.c.l.b16 %v4173
          %v4190 = vunpack.c.l.b16 %v4174
          %v4191 = vunpack.c.l.b16 %v4175
          %v4192 = vunpack.c.l.b16 %v4176
          %v4193 = vunpack.c.l.b16 %v4177
          %v4194 = vunpack.c.l.b16 %v4178
          %v4195 = vunpack.c.l.b16 %v4179
          %v4196 = vunpack.c.l.b16 %v4180
          %v4197 = vpack.c.b16 %v4190, %v4189
          %v4198 = vpack.c.b16 %v4192, %v4191
          %v4199 = vpack.c.b16 %v4194, %v4193
          %v4200 = vpack.c.b16 %v4196, %v4195
          %4205 = vmatprep.subr.bf16.mxu0 0
          %4206 = vmatpush1.bf16.msra.mxu0 %v4197
          %4207 = vmatprep.subr.bf16.mxu0 0
          %4208 = vmatpush1.bf16.msra.mxu0 %v4198
          %4209 = vmatprep.subr.bf16.mxu0 0
          %4210 = vmatpush1.bf16.msra.mxu0 %v4199
          %4211 = vmatprep.subr.bf16.mxu0 0
          %4212 = vmatpush1.bf16.msra.mxu0 %v4200
          %4213 = vmatprep.subr.bf16.mxu0 0
          %4214 = vmatpush1.bf16.msra.mxu0 0
          %4215 = vmatprep.subr.bf16.mxu0 0
          %4216 = vmatpush1.bf16.msra.mxu0 0
          %4217 = vmatprep.subr.bf16.mxu0 0
          %4218 = vmatpush1.bf16.msra.mxu0 0
          %4219 = vmatprep.subr.bf16.mxu0 0
          %4220 = vmatpush1.bf16.msra.mxu0 0
          %4221 = vmatprep.subr.bf16.mxu0 0
          %4222 = vmatpush1.bf16.msra.mxu0 0
          %4223 = vmatprep.subr.bf16.mxu0 0
          %4224 = vmatpush1.bf16.msra.mxu0 0
          %4225 = vmatprep.subr.bf16.mxu0 0
          %4226 = vmatpush1.bf16.msra.mxu0 0
          %4227 = vmatprep.subr.bf16.mxu0 0
          %4228 = vmatpush1.bf16.msra.mxu0 0
          %4229 = vmatprep.subr.bf16.mxu0 0
          %4230 = vmatpush1.bf16.msra.mxu0 0
          %4231 = vmatprep.subr.bf16.mxu0 0
          %4232 = vmatpush1.bf16.msra.mxu0 0
          %4233 = vmatprep.subr.bf16.mxu0 0
          %4234 = vmatpush1.bf16.msra.mxu0 0
          %4235 = vmatprep.subr.bf16.mxu0 0
          %4236 = vmatpush1.bf16.msra.mxu0 0
          %4237 = vmatprep.mubr.bf16.mxu0 0
          %4238 = vmatmul.mubr.bf16.gmra.mrb[0].mxu0 %v2192
          %v4239 = vpop.f32.mrb[0].mxu0
          %v4240 = vadd.f32 0.0, %v4239
          %v4241 = vpop.f32.mrb[0].mxu0
          %v4242 = vpop.f32.mrb[0].mxu0
          %v4243 = vadd.f32 0.0, %v4242
          %v4244 = vpop.f32.mrb[0].mxu0
          %4245 = vmatprep.mubr.bf16.mxu0 0
          %4246 = vmatmul.mubr.bf16.gmra.mrb[0].mxu0 %v2195
          %v4247 = vpop.f32.mrb[0].mxu0
          %v4248 = vadd.f32 0.0, %v4247
          %v4249 = vpop.f32.mrb[0].mxu0
          %v4250 = vpop.f32.mrb[0].mxu0
          %v4251 = vadd.f32 0.0, %v4250
          %v4252 = vpop.f32.mrb[0].mxu0
          %4253 = vmatprep.mubr.bf16.mxu0 0
          %4254 = vmatmul.mubr.bf16.gmra.mrb[0].mxu0 %v2198
          %v4255 = vpop.f32.mrb[0].mxu0
          %v4256 = vadd.f32 0.0, %v4255
          %v4257 = vpop.f32.mrb[0].mxu0
          %v4258 = vpop.f32.mrb[0].mxu0
          %v4259 = vadd.f32 0.0, %v4258
          %v4260 = vpop.f32.mrb[0].mxu0
          %4261 = vmatprep.mubr.bf16.mxu0 0
          %4262 = vmatmul.mubr.bf16.gmra.mrb[0].mxu0 %v2201
          %v4263 = vpop.f32.mrb[0].mxu0
          %v4264 = vadd.f32 0.0, %v4263
          %v4265 = vpop.f32.mrb[0].mxu0
          %v4266 = vpop.f32.mrb[0].mxu0
          %v4267 = vadd.f32 0.0, %v4266
          %v4268 = vpop.f32.mrb[0].mxu0
          %4269 = vmatprep.mubr.bf16.mxu0 0
          %4270 = vmatmul.mubr.bf16.gmra.mrb[0].mxu0 %v2204
          %v4271 = vpop.f32.mrb[0].mxu0
          %v4272 = vadd.f32 0.0, %v4271
          %v4273 = vpop.f32.mrb[0].mxu0
          %v4274 = vpop.f32.mrb[0].mxu0
          %v4275 = vadd.f32 0.0, %v4274
          %v4276 = vpop.f32.mrb[0].mxu0
          %4277 = vmatprep.mubr.bf16.mxu0 0
          %4278 = vmatmul.mubr.bf16.gmra.mrb[0].mxu0 %v2183
          %v4279 = vpop.f32.mrb[0].mxu0
          %v4280 = vadd.f32 0.0, %v4279
          %v4281 = vpop.f32.mrb[0].mxu0
          %v4282 = vpop.f32.mrb[0].mxu0
          %v4283 = vadd.f32 0.0, %v4282
          %v4284 = vpop.f32.mrb[0].mxu0
          %4285 = vmatprep.mubr.bf16.mxu0 0
          %4286 = vmatmul.mubr.bf16.gmra.mrb[0].mxu0 %v2186
          %v4287 = vpop.f32.mrb[0].mxu0
          %v4288 = vadd.f32 0.0, %v4287
          %v4289 = vpop.f32.mrb[0].mxu0
          %v4290 = vpop.f32.mrb[0].mxu0
          %v4291 = vadd.f32 0.0, %v4290
          %v4292 = vpop.f32.mrb[0].mxu0
          %4293 = vmatprep.mubr.bf16.mxu0 0
          %4294 = vmatmul.mubr.bf16.gmra.mrb[0].mxu0 %v2189
          %v4295 = vpop.f32.mrb[0].mxu0
          %v4296 = vadd.f32 0.0, %v4295
          %v4297 = vpop.f32.mrb[0].mxu0
          %v4298 = vpop.f32.mrb[0].mxu0
          %v4299 = vadd.f32 0.0, %v4298
          %v4300 = vpop.f32.mrb[0].mxu0
          %4301 = vdwg.mxu0
          %v4302 = vadd.f32 %v4157, %v4240
          %v4303 = vadd.f32 %v4158, %v4243
          %v4304 = vadd.f32 %v4159, %v4248
          %v4305 = vadd.f32 %v4160, %v4251
          %v4306 = vadd.f32 %v4161, %v4256
          %v4307 = vadd.f32 %v4162, %v4259
          %v4308 = vadd.f32 %v4163, %v4264
          %v4309 = vadd.f32 %v4164, %v4267
          %v4310 = vadd.f32 %v4165, %v4272
          %v4311 = vadd.f32 %v4166, %v4275
          %v4312 = vadd.f32 %v4167, %v4280
          %v4313 = vadd.f32 %v4168, %v4283
          %v4314 = vadd.f32 %v4169, %v4288
          %v4315 = vadd.f32 %v4170, %v4291
          %v4316 = vadd.f32 %v4171, %v4296
          %v4317 = vadd.f32 %v4172, %v4299
          %v4318 = vld [vmem:[%s3 + $0x1c0] sm:$0xf]
          %v4319 = vld [vmem:[%s3 + $0x1c4] sm:$0xf]
          %v4320 = vld [vmem:[%s3 + $0x1c8] sm:$0xf]
          %v4321 = vld [vmem:[%s3 + $0x1cc] sm:$0xf]
          %v4322 = vld [vmem:[%s3 + $0x1d0] sm:$0xf]
          %v4323 = vld [vmem:[%s3 + $0x1d4] sm:$0xf]
          %v4324 = vld [vmem:[%s3 + $0x1d8] sm:$0xf]
          %v4325 = vld [vmem:[%s3 + $0x1dc] sm:$0xf]
          %v4334 = vunpack.c.l.b16 %v4318
          %v4335 = vunpack.c.l.b16 %v4319
          %v4336 = vunpack.c.l.b16 %v4320
          %v4337 = vunpack.c.l.b16 %v4321
          %v4338 = vunpack.c.l.b16 %v4322
          %v4339 = vunpack.c.l.b16 %v4323
          %v4340 = vunpack.c.l.b16 %v4324
          %v4341 = vunpack.c.l.b16 %v4325
          %v4342 = vpack.c.b16 %v4335, %v4334
          %v4343 = vpack.c.b16 %v4337, %v4336
          %v4344 = vpack.c.b16 %v4339, %v4338
          %v4345 = vpack.c.b16 %v4341, %v4340
          %4350 = vmatprep.subr.bf16.mxu0 0
          %4351 = vmatpush1.bf16.msra.mxu0 %v4342
          %4352 = vmatprep.subr.bf16.mxu0 0
          %4353 = vmatpush1.bf16.msra.mxu0 %v4343
          %4354 = vmatprep.subr.bf16.mxu0 0
          %4355 = vmatpush1.bf16.msra.mxu0 %v4344
          %4356 = vmatprep.subr.bf16.mxu0 0
          %4357 = vmatpush1.bf16.msra.mxu0 %v4345
          %4358 = vmatprep.subr.bf16.mxu0 0
          %4359 = vmatpush1.bf16.msra.mxu0 0
          %4360 = vmatprep.subr.bf16.mxu0 0
          %4361 = vmatpush1.bf16.msra.mxu0 0
          %4362 = vmatprep.subr.bf16.mxu0 0
          %4363 = vmatpush1.bf16.msra.mxu0 0
          %4364 = vmatprep.subr.bf16.mxu0 0
          %4365 = vmatpush1.bf16.msra.mxu0 0
          %4366 = vmatprep.subr.bf16.mxu0 0
          %4367 = vmatpush1.bf16.msra.mxu0 0
          %4368 = vmatprep.subr.bf16.mxu0 0
          %4369 = vmatpush1.bf16.msra.mxu0 0
          %4370 = vmatprep.subr.bf16.mxu0 0
          %4371 = vmatpush1.bf16.msra.mxu0 0
          %4372 = vmatprep.subr.bf16.mxu0 0
          %4373 = vmatpush1.bf16.msra.mxu0 0
          %4374 = vmatprep.subr.bf16.mxu0 0
          %4375 = vmatpush1.bf16.msra.mxu0 0
          %4376 = vmatprep.subr.bf16.mxu0 0
          %4377 = vmatpush1.bf16.msra.mxu0 0
          %4378 = vmatprep.subr.bf16.mxu0 0
          %4379 = vmatpush1.bf16.msra.mxu0 0
          %4380 = vmatprep.subr.bf16.mxu0 0
          %4381 = vmatpush1.bf16.msra.mxu0 0
          %4382 = vmatprep.mubr.bf16.mxu0 0
          %4383 = vmatmul.mubr.bf16.gmra.mrb[0].mxu0 %v2531
          %v4384 = vpop.f32.mrb[0].mxu0
          %v4385 = vadd.f32 0.0, %v4384
          %v4386 = vpop.f32.mrb[0].mxu0
          %v4387 = vpop.f32.mrb[0].mxu0
          %v4388 = vadd.f32 0.0, %v4387
          %v4389 = vpop.f32.mrb[0].mxu0
          %4390 = vmatprep.mubr.bf16.mxu0 0
          %4391 = vmatmul.mubr.bf16.gmra.mrb[0].mxu0 %v2534
          %v4392 = vpop.f32.mrb[0].mxu0
          %v4393 = vadd.f32 0.0, %v4392
          %v4394 = vpop.f32.mrb[0].mxu0
          %v4395 = vpop.f32.mrb[0].mxu0
          %v4396 = vadd.f32 0.0, %v4395
          %v4397 = vpop.f32.mrb[0].mxu0
          %4398 = vmatprep.mubr.bf16.mxu0 0
          %4399 = vmatmul.mubr.bf16.gmra.mrb[0].mxu0 %v2537
          %v4400 = vpop.f32.mrb[0].mxu0
          %v4401 = vadd.f32 0.0, %v4400
          %v4402 = vpop.f32.mrb[0].mxu0
          %v4403 = vpop.f32.mrb[0].mxu0
          %v4404 = vadd.f32 0.0, %v4403
          %v4405 = vpop.f32.mrb[0].mxu0
          %4406 = vmatprep.mubr.bf16.mxu0 0
          %4407 = vmatmul.mubr.bf16.gmra.mrb[0].mxu0 %v2540
          %v4408 = vpop.f32.mrb[0].mxu0
          %v4409 = vadd.f32 0.0, %v4408
          %v4410 = vpop.f32.mrb[0].mxu0
          %v4411 = vpop.f32.mrb[0].mxu0
          %v4412 = vadd.f32 0.0, %v4411
          %v4413 = vpop.f32.mrb[0].mxu0
          %4414 = vmatprep.mubr.bf16.mxu0 0
          %4415 = vmatmul.mubr.bf16.gmra.mrb[0].mxu0 %v2543
          %v4416 = vpop.f32.mrb[0].mxu0
          %v4417 = vadd.f32 0.0, %v4416
          %v4418 = vpop.f32.mrb[0].mxu0
          %v4419 = vpop.f32.mrb[0].mxu0
          %v4420 = vadd.f32 0.0, %v4419
          %v4421 = vpop.f32.mrb[0].mxu0
          %4422 = vmatprep.mubr.bf16.mxu0 0
          %4423 = vmatmul.mubr.bf16.gmra.mrb[0].mxu0 %v2522
          %v4424 = vpop.f32.mrb[0].mxu0
          %v4425 = vadd.f32 0.0, %v4424
          %v4426 = vpop.f32.mrb[0].mxu0
          %v4427 = vpop.f32.mrb[0].mxu0
          %v4428 = vadd.f32 0.0, %v4427
          %v4429 = vpop.f32.mrb[0].mxu0
          %4430 = vmatprep.mubr.bf16.mxu0 0
          %4431 = vmatmul.mubr.bf16.gmra.mrb[0].mxu0 %v2525
          %v4432 = vpop.f32.mrb[0].mxu0
          %v4433 = vadd.f32 0.0, %v4432
          %v4434 = vpop.f32.mrb[0].mxu0
          %v4435 = vpop.f32.mrb[0].mxu0
          %v4436 = vadd.f32 0.0, %v4435
          %v4437 = vpop.f32.mrb[0].mxu0
          %4438 = vmatprep.mubr.bf16.mxu0 0
          %4439 = vmatmul.mubr.bf16.gmra.mrb[0].mxu0 %v2528
          %v4440 = vpop.f32.mrb[0].mxu0
          %v4441 = vadd.f32 0.0, %v4440
          %v4442 = vpop.f32.mrb[0].mxu0
          %v4443 = vpop.f32.mrb[0].mxu0
          %v4444 = vadd.f32 0.0, %v4443
          %v4445 = vpop.f32.mrb[0].mxu0
          %4446 = vdwg.mxu0
          %v4447 = vadd.f32 %v4302, %v4385
          %v4448 = vadd.f32 %v4303, %v4388
          %v4449 = vadd.f32 %v4304, %v4393
          %v4450 = vadd.f32 %v4305, %v4396
          %v4451 = vadd.f32 %v4306, %v4401
          %v4452 = vadd.f32 %v4307, %v4404
          %v4453 = vadd.f32 %v4308, %v4409
          %v4454 = vadd.f32 %v4309, %v4412
          %v4455 = vadd.f32 %v4310, %v4417
          %v4456 = vadd.f32 %v4311, %v4420
          %v4457 = vadd.f32 %v4312, %v4425
          %v4458 = vadd.f32 %v4313, %v4428
          %v4459 = vadd.f32 %v4314, %v4433
          %v4460 = vadd.f32 %v4315, %v4436
          %v4461 = vadd.f32 %v4316, %v4441
          %v4462 = vadd.f32 %v4317, %v4444
          %v4463 = vld [vmem:[%s3 + $0x1e0] sm:$0xf]
          %v4464 = vld [vmem:[%s3 + $0x1e4] sm:$0xf]
          %v4465 = vld [vmem:[%s3 + $0x1e8] sm:$0xf]
          %v4466 = vld [vmem:[%s3 + $0x1ec] sm:$0xf]
          %v4467 = vld [vmem:[%s3 + $0x1f0] sm:$0xf]
          %v4468 = vld [vmem:[%s3 + $0x1f4] sm:$0xf]
          %v4469 = vld [vmem:[%s3 + $0x1f8] sm:$0xf]
          %v4470 = vld [vmem:[%s3 + $0x1fc] sm:$0xf]
          %v4479 = vunpack.c.l.b16 %v4463
          %v4480 = vunpack.c.l.b16 %v4464
          %v4481 = vunpack.c.l.b16 %v4465
          %v4482 = vunpack.c.l.b16 %v4466
          %v4483 = vunpack.c.l.b16 %v4467
          %v4484 = vunpack.c.l.b16 %v4468
          %v4485 = vunpack.c.l.b16 %v4469
          %v4486 = vunpack.c.l.b16 %v4470
          %v4487 = vpack.c.b16 %v4480, %v4479
          %v4488 = vpack.c.b16 %v4482, %v4481
          %v4489 = vpack.c.b16 %v4484, %v4483
          %v4490 = vpack.c.b16 %v4486, %v4485
          %4495 = vmatprep.subr.bf16.mxu0 0
          %4496 = vmatpush1.bf16.msra.mxu0 %v4487
          %4497 = vmatprep.subr.bf16.mxu0 0
          %4498 = vmatpush1.bf16.msra.mxu0 %v4488
          %4499 = vmatprep.subr.bf16.mxu0 0
          %4500 = vmatpush1.bf16.msra.mxu0 %v4489
          %4501 = vmatprep.subr.bf16.mxu0 0
          %4502 = vmatpush1.bf16.msra.mxu0 %v4490
          %4503 = vmatprep.subr.bf16.mxu0 0
          %4504 = vmatpush1.bf16.msra.mxu0 0
          %4505 = vmatprep.subr.bf16.mxu0 0
          %4506 = vmatpush1.bf16.msra.mxu0 0
          %4507 = vmatprep.subr.bf16.mxu0 0
          %4508 = vmatpush1.bf16.msra.mxu0 0
          %4509 = vmatprep.subr.bf16.mxu0 0
          %4510 = vmatpush1.bf16.msra.mxu0 0
          %4511 = vmatprep.subr.bf16.mxu0 0
          %4512 = vmatpush1.bf16.msra.mxu0 0
          %4513 = vmatprep.subr.bf16.mxu0 0
          %4514 = vmatpush1.bf16.msra.mxu0 0
          %4515 = vmatprep.subr.bf16.mxu0 0
          %4516 = vmatpush1.bf16.msra.mxu0 0
          %4517 = vmatprep.subr.bf16.mxu0 0
          %4518 = vmatpush1.bf16.msra.mxu0 0
          %4519 = vmatprep.subr.bf16.mxu0 0
          %4520 = vmatpush1.bf16.msra.mxu0 0
          %4521 = vmatprep.subr.bf16.mxu0 0
          %4522 = vmatpush1.bf16.msra.mxu0 0
          %4523 = vmatprep.subr.bf16.mxu0 0
          %4524 = vmatpush1.bf16.msra.mxu0 0
          %4525 = vmatprep.subr.bf16.mxu0 0
          %4526 = vmatpush1.bf16.msra.mxu0 0
          %4527 = vmatprep.mubr.bf16.mxu0 0
          %4528 = vmatmul.mubr.bf16.gmra.mrb[0].mxu0 %v2741
          %v4529 = vpop.f32.mrb[0].mxu0
          %v4530 = vadd.f32 0.0, %v4529
          %v4531 = vpop.f32.mrb[0].mxu0
          %v4532 = vpop.f32.mrb[0].mxu0
          %v4533 = vadd.f32 0.0, %v4532
          %v4534 = vpop.f32.mrb[0].mxu0
          %4535 = vmatprep.mubr.bf16.mxu0 0
          %4536 = vmatmul.mubr.bf16.gmra.mrb[0].mxu0 %v2744
          %v4537 = vpop.f32.mrb[0].mxu0
          %v4538 = vadd.f32 0.0, %v4537
          %v4539 = vpop.f32.mrb[0].mxu0
          %v4540 = vpop.f32.mrb[0].mxu0
          %v4541 = vadd.f32 0.0, %v4540
          %v4542 = vpop.f32.mrb[0].mxu0
          %4543 = vmatprep.mubr.bf16.mxu0 0
          %4544 = vmatmul.mubr.bf16.gmra.mrb[0].mxu0 %v2747
          %v4545 = vpop.f32.mrb[0].mxu0
          %v4546 = vadd.f32 0.0, %v4545
          %v4547 = vpop.f32.mrb[0].mxu0
          %v4548 = vpop.f32.mrb[0].mxu0
          %v4549 = vadd.f32 0.0, %v4548
          %v4550 = vpop.f32.mrb[0].mxu0
          %4551 = vmatprep.mubr.bf16.mxu0 0
          %4552 = vmatmul.mubr.bf16.gmra.mrb[0].mxu0 %v2750
          %v4553 = vpop.f32.mrb[0].mxu0
          %v4554 = vadd.f32 0.0, %v4553
          %v4555 = vpop.f32.mrb[0].mxu0
          %v4556 = vpop.f32.mrb[0].mxu0
          %v4557 = vadd.f32 0.0, %v4556
          %v4558 = vpop.f32.mrb[0].mxu0
          %4559 = vmatprep.mubr.bf16.mxu0 0
          %4560 = vmatmul.mubr.bf16.gmra.mrb[0].mxu0 %v2753
          %v4561 = vpop.f32.mrb[0].mxu0
          %v4562 = vadd.f32 0.0, %v4561
          %v4563 = vpop.f32.mrb[0].mxu0
          %v4564 = vpop.f32.mrb[0].mxu0
          %v4565 = vadd.f32 0.0, %v4564
          %v4566 = vpop.f32.mrb[0].mxu0
          %4567 = vmatprep.mubr.bf16.mxu0 0
          %4568 = vmatmul.mubr.bf16.gmra.mrb[0].mxu0 %v2732
          %v4569 = vpop.f32.mrb[0].mxu0
          %v4570 = vadd.f32 0.0, %v4569
          %v4571 = vpop.f32.mrb[0].mxu0
          %v4572 = vpop.f32.mrb[0].mxu0
          %v4573 = vadd.f32 0.0, %v4572
          %v4574 = vpop.f32.mrb[0].mxu0
          %4575 = vmatprep.mubr.bf16.mxu0 0
          %4576 = vmatmul.mubr.bf16.gmra.mrb[0].mxu0 %v2735
          %v4577 = vpop.f32.mrb[0].mxu0
          %v4578 = vadd.f32 0.0, %v4577
          %v4579 = vpop.f32.mrb[0].mxu0
          %v4580 = vpop.f32.mrb[0].mxu0
          %v4581 = vadd.f32 0.0, %v4580
          %v4582 = vpop.f32.mrb[0].mxu0
          %4583 = vmatprep.mubr.bf16.mxu0 0
          %4584 = vmatmul.mubr.bf16.gmra.mrb[0].mxu0 %v2738
          %v4585 = vpop.f32.mrb[0].mxu0
          %v4586 = vadd.f32 0.0, %v4585
          %v4587 = vpop.f32.mrb[0].mxu0
          %v4588 = vpop.f32.mrb[0].mxu0
          %v4589 = vadd.f32 0.0, %v4588
          %v4590 = vpop.f32.mrb[0].mxu0
          %4591 = vdwg.mxu0
          %v4592 = vadd.f32 %v4447, %v4530
          %v4593 = vadd.f32 %v4448, %v4533
          %v4594 = vadd.f32 %v4449, %v4538
          %v4595 = vadd.f32 %v4450, %v4541
          %v4596 = vadd.f32 %v4451, %v4546
          %v4597 = vadd.f32 %v4452, %v4549
          %v4598 = vadd.f32 %v4453, %v4554
          %v4599 = vadd.f32 %v4454, %v4557
          %v4600 = vadd.f32 %v4455, %v4562
          %v4601 = vadd.f32 %v4456, %v4565
          %v4602 = vadd.f32 %v4457, %v4570
          %v4603 = vadd.f32 %v4458, %v4573
          %v4604 = vadd.f32 %v4459, %v4578
          %v4605 = vadd.f32 %v4460, %v4581
          %v4606 = vadd.f32 %v4461, %v4586
          %v4607 = vadd.f32 %v4462, %v4589
          %v4608 = vld [vmem:[%s4] sm:$0x1]
          %v4610 = vlaneseq
          %v4611 = vshrl.u32 %v4610, 7
          %v4612 = vsub.s32 0, %v4611
          %v4613 = vrot.slane %v4608, %v4612
          %v4615 = vadd.f32 %v4592, %v4613
          %v4616 = vadd.f32 %v4593, %v4613
          %v4617 = vadd.f32 %v4594, %v4613
          %v4618 = vadd.f32 %v4595, %v4613
          %v4619 = vadd.f32 %v4596, %v4613
          %v4620 = vadd.f32 %v4597, %v4613
          %v4621 = vadd.f32 %v4598, %v4613
          %v4622 = vadd.f32 %v4599, %v4613
          %v4623 = vadd.f32 %v4600, %v4613
          %v4624 = vadd.f32 %v4601, %v4613
          %v4625 = vadd.f32 %v4602, %v4613
          %v4626 = vadd.f32 %v4603, %v4613
          %v4627 = vadd.f32 %v4604, %v4613
          %v4628 = vadd.f32 %v4605, %v4613
          %v4629 = vadd.f32 %v4606, %v4613
          %v4630 = vadd.f32 %v4607, %v4613
          %v4631 = vmax.f32 %v4615, 0.0
          %v4632 = vmax.f32 %v4616, 0.0
          %v4633 = vmax.f32 %v4617, 0.0
          %v4634 = vmax.f32 %v4618, 0.0
          %v4635 = vmax.f32 %v4619, 0.0
          %v4636 = vmax.f32 %v4620, 0.0
          %v4637 = vmax.f32 %v4621, 0.0
          %v4638 = vmax.f32 %v4622, 0.0
          %v4639 = vmax.f32 %v4623, 0.0
          %v4640 = vmax.f32 %v4624, 0.0
          %v4641 = vmax.f32 %v4625, 0.0
          %v4642 = vmax.f32 %v4626, 0.0
          %v4643 = vmax.f32 %v4627, 0.0
          %v4644 = vmax.f32 %v4628, 0.0
          %v4645 = vmax.f32 %v4629, 0.0
          %v4646 = vmax.f32 %v4630, 0.0
          %v4647 = vld [vmem:[%s5] sm:$0x1]
          %v4649 = vlaneseq
          %v4650 = vshrl.u32 %v4649, 7
          %v4651 = vsub.s32 0, %v4650
          %v4652 = vrot.slane %v4647, %v4651
          %v4654 = vmul.f32 %v4631, %v4652
          %v4655 = vmul.f32 %v4632, %v4652
          %v4656 = vmul.f32 %v4633, %v4652
          %v4657 = vmul.f32 %v4634, %v4652
          %v4658 = vmul.f32 %v4635, %v4652
          %v4659 = vmul.f32 %v4636, %v4652
          %v4660 = vmul.f32 %v4637, %v4652
          %v4661 = vmul.f32 %v4638, %v4652
          %v4662 = vmul.f32 %v4639, %v4652
          %v4663 = vmul.f32 %v4640, %v4652
          %v4664 = vmul.f32 %v4641, %v4652
          %v4665 = vmul.f32 %v4642, %v4652
          %v4666 = vmul.f32 %v4643, %v4652
          %v4667 = vmul.f32 %v4644, %v4652
          %v4668 = vmul.f32 %v4645, %v4652
          %v4669 = vmul.f32 %v4646, %v4652
          %v4670 = vld [vmem:[%s6] sm:$0x1]
          %v4672 = vlaneseq
          %v4673 = vshrl.u32 %v4672, 7
          %v4674 = vsub.s32 0, %v4673
          %v4675 = vrot.slane %v4670, %v4674
          %v4677 = vadd.f32 %v4654, %v4675
          %v4678 = vadd.f32 %v4655, %v4675
          %v4679 = vadd.f32 %v4656, %v4675
          %v4680 = vadd.f32 %v4657, %v4675
          %v4681 = vadd.f32 %v4658, %v4675
          %v4682 = vadd.f32 %v4659, %v4675
          %v4683 = vadd.f32 %v4660, %v4675
          %v4684 = vadd.f32 %v4661, %v4675
          %v4685 = vadd.f32 %v4662, %v4675
          %v4686 = vadd.f32 %v4663, %v4675
          %v4687 = vadd.f32 %v4664, %v4675
          %v4688 = vadd.f32 %v4665, %v4675
          %v4689 = vadd.f32 %v4666, %v4675
          %v4690 = vadd.f32 %v4667, %v4675
          %v4691 = vadd.f32 %v4668, %v4675
          %v4692 = vadd.f32 %v4669, %v4675
          %v4693 = vpack.c.bf16 %v4678, %v4677
          %v4694 = vpack.c.bf16 %v4680, %v4679
          %v4695 = vpack.c.bf16 %v4682, %v4681
          %v4696 = vpack.c.bf16 %v4684, %v4683
          %v4697 = vpack.c.bf16 %v4686, %v4685
          %v4698 = vpack.c.bf16 %v4688, %v4687
          %v4699 = vpack.c.bf16 %v4690, %v4689
          %v4700 = vpack.c.bf16 %v4692, %v4691
          %4701 = vst.msk [vmem:[#allocation3] sm:$0xff] %vm2015, %v4693
          %4702 = vst.msk [vmem:[#allocation3 + $0x8] sm:$0xff] %vm2015, %v4694
          %4703 = vst.msk [vmem:[#allocation3 + $0x10] sm:$0xff] %vm2015, %v4695
          %4704 = vst.msk [vmem:[#allocation3 + $0x18] sm:$0xff] %vm2015, %v4696
          %4705 = vst.msk [vmem:[#allocation3 + $0x20] sm:$0xff] %vm2015, %v4697
          %4706 = vst.msk [vmem:[#allocation3 + $0x28] sm:$0xff] %vm2015, %v4698
          %4707 = vst.msk [vmem:[#allocation3 + $0x30] sm:$0xff] %vm2015, %v4699
          %4708 = vst.msk [vmem:[#allocation3 + $0x38] sm:$0xff] %vm2015, %v4700
          %v4709 = vld [vmem:[#allocation3] sm:$0x1]
          %v4710 = vld [vmem:[%s7] sm:$0xf]
          %v4711 = vld [vmem:[%s7 + $0x4] sm:$0xf]
          %v4712 = vld [vmem:[%s7 + $0x8] sm:$0xf]
          %v4713 = vld [vmem:[%s7 + $0xc] sm:$0xf]
          %v4714 = vld [vmem:[%s7 + $0x10] sm:$0xf]
          %v4715 = vld [vmem:[%s7 + $0x14] sm:$0xf]
          %v4716 = vld [vmem:[%s7 + $0x18] sm:$0xf]
          %v4717 = vld [vmem:[%s7 + $0x1c] sm:$0xf]
          %v4718 = vld [vmem:[#allocation3] sm:$0x4]
          %v4719 = vld [vmem:[%s7 + $0x20] sm:$0xf]
          %v4720 = vld [vmem:[%s7 + $0x24] sm:$0xf]
          %v4721 = vld [vmem:[%s7 + $0x28] sm:$0xf]
          %v4722 = vld [vmem:[%s7 + $0x2c] sm:$0xf]
          %v4723 = vld [vmem:[%s7 + $0x30] sm:$0xf]
          %v4724 = vld [vmem:[%s7 + $0x34] sm:$0xf]
          %v4725 = vld [vmem:[%s7 + $0x38] sm:$0xf]
          %v4726 = vld [vmem:[%s7 + $0x3c] sm:$0xf]
          %v4728 = vrot.slane %v4718, 2
          %v4737 = vunpack.c.l.b16 %v4719
          %v4738 = vunpack.c.l.b16 %v4720
          %v4739 = vunpack.c.l.b16 %v4721
          %v4740 = vunpack.c.l.b16 %v4722
          %v4741 = vunpack.c.l.b16 %v4723
          %v4742 = vunpack.c.l.b16 %v4724
          %v4743 = vunpack.c.l.b16 %v4725
          %v4744 = vunpack.c.l.b16 %v4726
          %v4745 = vpack.c.b16 %v4738, %v4737
          %v4746 = vpack.c.b16 %v4740, %v4739
          %v4747 = vpack.c.b16 %v4742, %v4741
          %v4748 = vpack.c.b16 %v4744, %v4743
          %v4754 = vsel %vm2015, %v4728, 0
          %4756 = vmatprep.subr.bf16.mxu0 0
          %4757 = vmatpush1.bf16.msra.mxu0 %v4745
          %4758 = vmatprep.subr.bf16.mxu0 0
          %4759 = vmatpush1.bf16.msra.mxu0 %v4746
          %4760 = vmatprep.subr.bf16.mxu0 0
          %4761 = vmatpush1.bf16.msra.mxu0 %v4747
          %4762 = vmatprep.subr.bf16.mxu0 0
          %4763 = vmatpush1.bf16.msra.mxu0 %v4748
          %4764 = vmatprep.subr.bf16.mxu0 0
          %4765 = vmatpush1.bf16.msra.mxu0 0
          %4766 = vmatprep.subr.bf16.mxu0 0
          %4767 = vmatpush1.bf16.msra.mxu0 0
          %4768 = vmatprep.subr.bf16.mxu0 0
          %4769 = vmatpush1.bf16.msra.mxu0 0
          %4770 = vmatprep.subr.bf16.mxu0 0
          %4771 = vmatpush1.bf16.msra.mxu0 0
          %4772 = vmatprep.subr.bf16.mxu0 0
          %4773 = vmatpush1.bf16.msra.mxu0 0
          %4774 = vmatprep.subr.bf16.mxu0 0
          %4775 = vmatpush1.bf16.msra.mxu0 0
          %4776 = vmatprep.subr.bf16.mxu0 0
          %4777 = vmatpush1.bf16.msra.mxu0 0
          %4778 = vmatprep.subr.bf16.mxu0 0
          %4779 = vmatpush1.bf16.msra.mxu0 0
          %4780 = vmatprep.subr.bf16.mxu0 0
          %4781 = vmatpush1.bf16.msra.mxu0 0
          %4782 = vmatprep.subr.bf16.mxu0 0
          %4783 = vmatpush1.bf16.msra.mxu0 0
          %4784 = vmatprep.subr.bf16.mxu0 0
          %4785 = vmatpush1.bf16.msra.mxu0 0
          %4786 = vmatprep.subr.bf16.mxu0 0
          %4787 = vmatpush1.bf16.msra.mxu0 0
          %4788 = vmatprep.mubr.bf16.mxu0 0
          %4789 = vmatmul.mubr.bf16.gmra.mrb[0].mxu0 %v4754
          %v4790 = vpop.f32.mrb[0].mxu0
          %v4791 = vadd.f32 0.0, %v4790
          %v4792 = vpop.f32.mrb[0].mxu0
          %v4793 = vpop.f32.mrb[0].mxu0
          %v4794 = vpop.f32.mrb[0].mxu0
          %4795 = vdwg.mxu0
          %v4804 = vunpack.c.l.b16 %v4710
          %v4805 = vunpack.c.l.b16 %v4711
          %v4806 = vunpack.c.l.b16 %v4712
          %v4807 = vunpack.c.l.b16 %v4713
          %v4808 = vunpack.c.l.b16 %v4714
          %v4809 = vunpack.c.l.b16 %v4715
          %v4810 = vunpack.c.l.b16 %v4716
          %v4811 = vunpack.c.l.b16 %v4717
          %v4812 = vpack.c.b16 %v4805, %v4804
          %v4813 = vpack.c.b16 %v4807, %v4806
          %v4814 = vpack.c.b16 %v4809, %v4808
          %v4815 = vpack.c.b16 %v4811, %v4810
          %v4821 = vsel %vm2015, %v4709, 0
          %4823 = vmatprep.subr.bf16.mxu0 0
          %4824 = vmatpush1.bf16.msra.mxu0 %v4812
          %4825 = vmatprep.subr.bf16.mxu0 0
          %4826 = vmatpush1.bf16.msra.mxu0 %v4813
          %4827 = vmatprep.subr.bf16.mxu0 0
          %4828 = vmatpush1.bf16.msra.mxu0 %v4814
          %4829 = vmatprep.subr.bf16.mxu0 0
          %4830 = vmatpush1.bf16.msra.mxu0 %v4815
          %4831 = vmatprep.subr.bf16.mxu0 0
          %4832 = vmatpush1.bf16.msra.mxu0 0
          %4833 = vmatprep.subr.bf16.mxu0 0
          %4834 = vmatpush1.bf16.msra.mxu0 0
          %4835 = vmatprep.subr.bf16.mxu0 0
          %4836 = vmatpush1.bf16.msra.mxu0 0
          %4837 = vmatprep.subr.bf16.mxu0 0
          %4838 = vmatpush1.bf16.msra.mxu0 0
          %4839 = vmatprep.subr.bf16.mxu0 0
          %4840 = vmatpush1.bf16.msra.mxu0 0
          %4841 = vmatprep.subr.bf16.mxu0 0
          %4842 = vmatpush1.bf16.msra.mxu0 0
          %4843 = vmatprep.subr.bf16.mxu0 0
          %4844 = vmatpush1.bf16.msra.mxu0 0
          %4845 = vmatprep.subr.bf16.mxu0 0
          %4846 = vmatpush1.bf16.msra.mxu0 0
          %4847 = vmatprep.subr.bf16.mxu0 0
          %4848 = vmatpush1.bf16.msra.mxu0 0
          %4849 = vmatprep.subr.bf16.mxu0 0
          %4850 = vmatpush1.bf16.msra.mxu0 0
          %4851 = vmatprep.subr.bf16.mxu0 0
          %4852 = vmatpush1.bf16.msra.mxu0 0
          %4853 = vmatprep.subr.bf16.mxu0 0
          %4854 = vmatpush1.bf16.msra.mxu0 0
          %4855 = vmatprep.mubr.bf16.mxu0 0
          %4856 = vmatmul.mubr.bf16.gmra.mrb[0].mxu0 %v4821
          %v4857 = vpop.f32.mrb[0].mxu0
          %v4858 = vadd.f32 %v4791, %v4857
          %v4859 = vpop.f32.mrb[0].mxu0
          %v4860 = vpop.f32.mrb[0].mxu0
          %v4861 = vpop.f32.mrb[0].mxu0
          %4862 = vdwg.mxu0
          %v4863 = vld [vmem:[#allocation3] sm:$0x10]
          %v4864 = vld [vmem:[%s7 + $0x40] sm:$0xf]
          %v4865 = vld [vmem:[%s7 + $0x44] sm:$0xf]
          %v4866 = vld [vmem:[%s7 + $0x48] sm:$0xf]
          %v4867 = vld [vmem:[%s7 + $0x4c] sm:$0xf]
          %v4868 = vld [vmem:[%s7 + $0x50] sm:$0xf]
          %v4869 = vld [vmem:[%s7 + $0x54] sm:$0xf]
          %v4870 = vld [vmem:[%s7 + $0x58] sm:$0xf]
          %v4871 = vld [vmem:[%s7 + $0x5c] sm:$0xf]
          %v4873 = vrot.slane %v4863, 4
          %v4882 = vunpack.c.l.b16 %v4864
          %v4883 = vunpack.c.l.b16 %v4865
          %v4884 = vunpack.c.l.b16 %v4866
          %v4885 = vunpack.c.l.b16 %v4867
          %v4886 = vunpack.c.l.b16 %v4868
          %v4887 = vunpack.c.l.b16 %v4869
          %v4888 = vunpack.c.l.b16 %v4870
          %v4889 = vunpack.c.l.b16 %v4871
          %v4890 = vpack.c.b16 %v4883, %v4882
          %v4891 = vpack.c.b16 %v4885, %v4884
          %v4892 = vpack.c.b16 %v4887, %v4886
          %v4893 = vpack.c.b16 %v4889, %v4888
          %v4899 = vsel %vm2015, %v4873, 0
          %4901 = vmatprep.subr.bf16.mxu0 0
          %4902 = vmatpush1.bf16.msra.mxu0 %v4890
          %4903 = vmatprep.subr.bf16.mxu0 0
          %4904 = vmatpush1.bf16.msra.mxu0 %v4891
          %4905 = vmatprep.subr.bf16.mxu0 0
          %4906 = vmatpush1.bf16.msra.mxu0 %v4892
          %4907 = vmatprep.subr.bf16.mxu0 0
          %4908 = vmatpush1.bf16.msra.mxu0 %v4893
          %4909 = vmatprep.subr.bf16.mxu0 0
          %4910 = vmatpush1.bf16.msra.mxu0 0
          %4911 = vmatprep.subr.bf16.mxu0 0
          %4912 = vmatpush1.bf16.msra.mxu0 0
          %4913 = vmatprep.subr.bf16.mxu0 0
          %4914 = vmatpush1.bf16.msra.mxu0 0
          %4915 = vmatprep.subr.bf16.mxu0 0
          %4916 = vmatpush1.bf16.msra.mxu0 0
          %4917 = vmatprep.subr.bf16.mxu0 0
          %4918 = vmatpush1.bf16.msra.mxu0 0
          %4919 = vmatprep.subr.bf16.mxu0 0
          %4920 = vmatpush1.bf16.msra.mxu0 0
          %4921 = vmatprep.subr.bf16.mxu0 0
          %4922 = vmatpush1.bf16.msra.mxu0 0
          %4923 = vmatprep.subr.bf16.mxu0 0
          %4924 = vmatpush1.bf16.msra.mxu0 0
          %4925 = vmatprep.subr.bf16.mxu0 0
          %4926 = vmatpush1.bf16.msra.mxu0 0
          %4927 = vmatprep.subr.bf16.mxu0 0
          %4928 = vmatpush1.bf16.msra.mxu0 0
          %4929 = vmatprep.subr.bf16.mxu0 0
          %4930 = vmatpush1.bf16.msra.mxu0 0
          %4931 = vmatprep.subr.bf16.mxu0 0
          %4932 = vmatpush1.bf16.msra.mxu0 0
          %4933 = vmatprep.mubr.bf16.mxu0 0
          %4934 = vmatmul.mubr.bf16.gmra.mrb[0].mxu0 %v4899
          %v4935 = vpop.f32.mrb[0].mxu0
          %v4936 = vadd.f32 0.0, %v4935
          %v4937 = vpop.f32.mrb[0].mxu0
          %v4938 = vpop.f32.mrb[0].mxu0
          %v4939 = vpop.f32.mrb[0].mxu0
          %4940 = vdwg.mxu0
          %v4941 = vadd.f32 %v4858, %v4936
          %v4942 = vld [vmem:[#allocation3 + $0x10] sm:$0x1]
          %v4943 = vld [vmem:[%s7 + $0x60] sm:$0xf]
          %v4944 = vld [vmem:[%s7 + $0x64] sm:$0xf]
          %v4945 = vld [vmem:[%s7 + $0x68] sm:$0xf]
          %v4946 = vld [vmem:[%s7 + $0x6c] sm:$0xf]
          %v4947 = vld [vmem:[%s7 + $0x70] sm:$0xf]
          %v4948 = vld [vmem:[%s7 + $0x74] sm:$0xf]
          %v4949 = vld [vmem:[%s7 + $0x78] sm:$0xf]
          %v4950 = vld [vmem:[%s7 + $0x7c] sm:$0xf]
          %v4959 = vunpack.c.l.b16 %v4943
          %v4960 = vunpack.c.l.b16 %v4944
          %v4961 = vunpack.c.l.b16 %v4945
          %v4962 = vunpack.c.l.b16 %v4946
          %v4963 = vunpack.c.l.b16 %v4947
          %v4964 = vunpack.c.l.b16 %v4948
          %v4965 = vunpack.c.l.b16 %v4949
          %v4966 = vunpack.c.l.b16 %v4950
          %v4967 = vpack.c.b16 %v4960, %v4959
          %v4968 = vpack.c.b16 %v4962, %v4961
          %v4969 = vpack.c.b16 %v4964, %v4963
          %v4970 = vpack.c.b16 %v4966, %v4965
          %v4976 = vsel %vm2015, %v4942, 0
          %4978 = vmatprep.subr.bf16.mxu0 0
          %4979 = vmatpush1.bf16.msra.mxu0 %v4967
          %4980 = vmatprep.subr.bf16.mxu0 0
          %4981 = vmatpush1.bf16.msra.mxu0 %v4968
          %4982 = vmatprep.subr.bf16.mxu0 0
          %4983 = vmatpush1.bf16.msra.mxu0 %v4969
          %4984 = vmatprep.subr.bf16.mxu0 0
          %4985 = vmatpush1.bf16.msra.mxu0 %v4970
          %4986 = vmatprep.subr.bf16.mxu0 0
          %4987 = vmatpush1.bf16.msra.mxu0 0
          %4988 = vmatprep.subr.bf16.mxu0 0
          %4989 = vmatpush1.bf16.msra.mxu0 0
          %4990 = vmatprep.subr.bf16.mxu0 0
          %4991 = vmatpush1.bf16.msra.mxu0 0
          %4992 = vmatprep.subr.bf16.mxu0 0
          %4993 = vmatpush1.bf16.msra.mxu0 0
          %4994 = vmatprep.subr.bf16.mxu0 0
          %4995 = vmatpush1.bf16.msra.mxu0 0
          %4996 = vmatprep.subr.bf16.mxu0 0
          %4997 = vmatpush1.bf16.msra.mxu0 0
          %4998 = vmatprep.subr.bf16.mxu0 0
          %4999 = vmatpush1.bf16.msra.mxu0 0
          %5000 = vmatprep.subr.bf16.mxu0 0
          %5001 = vmatpush1.bf16.msra.mxu0 0
          %5002 = vmatprep.subr.bf16.mxu0 0
          %5003 = vmatpush1.bf16.msra.mxu0 0
          %5004 = vmatprep.subr.bf16.mxu0 0
          %5005 = vmatpush1.bf16.msra.mxu0 0
          %5006 = vmatprep.subr.bf16.mxu0 0
          %5007 = vmatpush1.bf16.msra.mxu0 0
          %5008 = vmatprep.subr.bf16.mxu0 0
          %5009 = vmatpush1.bf16.msra.mxu0 0
          %5010 = vmatprep.mubr.bf16.mxu0 0
          %5011 = vmatmul.mubr.bf16.gmra.mrb[0].mxu0 %v4976
          %v5012 = vpop.f32.mrb[0].mxu0
          %v5013 = vadd.f32 0.0, %v5012
          %v5014 = vpop.f32.mrb[0].mxu0
          %v5015 = vpop.f32.mrb[0].mxu0
          %v5016 = vpop.f32.mrb[0].mxu0
          %5017 = vdwg.mxu0
          %v5018 = vadd.f32 %v4941, %v5013
          %v5019 = vld [vmem:[#allocation3 + $0x10] sm:$0x4]
          %v5020 = vld [vmem:[%s7 + $0x80] sm:$0xf]
          %v5021 = vld [vmem:[%s7 + $0x84] sm:$0xf]
          %v5022 = vld [vmem:[%s7 + $0x88] sm:$0xf]
          %v5023 = vld [vmem:[%s7 + $0x8c] sm:$0xf]
          %v5024 = vld [vmem:[%s7 + $0x90] sm:$0xf]
          %v5025 = vld [vmem:[%s7 + $0x94] sm:$0xf]
          %v5026 = vld [vmem:[%s7 + $0x98] sm:$0xf]
          %v5027 = vld [vmem:[%s7 + $0x9c] sm:$0xf]
          %v5029 = vrot.slane %v5019, 2
          %v5038 = vunpack.c.l.b16 %v5020
          %v5039 = vunpack.c.l.b16 %v5021
          %v5040 = vunpack.c.l.b16 %v5022
          %v5041 = vunpack.c.l.b16 %v5023
          %v5042 = vunpack.c.l.b16 %v5024
          %v5043 = vunpack.c.l.b16 %v5025
          %v5044 = vunpack.c.l.b16 %v5026
          %v5045 = vunpack.c.l.b16 %v5027
          %v5046 = vpack.c.b16 %v5039, %v5038
          %v5047 = vpack.c.b16 %v5041, %v5040
          %v5048 = vpack.c.b16 %v5043, %v5042
          %v5049 = vpack.c.b16 %v5045, %v5044
          %v5055 = vsel %vm2015, %v5029, 0
          %5057 = vmatprep.subr.bf16.mxu0 0
          %5058 = vmatpush1.bf16.msra.mxu0 %v5046
          %5059 = vmatprep.subr.bf16.mxu0 0
          %5060 = vmatpush1.bf16.msra.mxu0 %v5047
          %5061 = vmatprep.subr.bf16.mxu0 0
          %5062 = vmatpush1.bf16.msra.mxu0 %v5048
          %5063 = vmatprep.subr.bf16.mxu0 0
          %5064 = vmatpush1.bf16.msra.mxu0 %v5049
          %5065 = vmatprep.subr.bf16.mxu0 0
          %5066 = vmatpush1.bf16.msra.mxu0 0
          %5067 = vmatprep.subr.bf16.mxu0 0
          %5068 = vmatpush1.bf16.msra.mxu0 0
          %5069 = vmatprep.subr.bf16.mxu0 0
          %5070 = vmatpush1.bf16.msra.mxu0 0
          %5071 = vmatprep.subr.bf16.mxu0 0
          %5072 = vmatpush1.bf16.msra.mxu0 0
          %5073 = vmatprep.subr.bf16.mxu0 0
          %5074 = vmatpush1.bf16.msra.mxu0 0
          %5075 = vmatprep.subr.bf16.mxu0 0
          %5076 = vmatpush1.bf16.msra.mxu0 0
          %5077 = vmatprep.subr.bf16.mxu0 0
          %5078 = vmatpush1.bf16.msra.mxu0 0
          %5079 = vmatprep.subr.bf16.mxu0 0
          %5080 = vmatpush1.bf16.msra.mxu0 0
          %5081 = vmatprep.subr.bf16.mxu0 0
          %5082 = vmatpush1.bf16.msra.mxu0 0
          %5083 = vmatprep.subr.bf16.mxu0 0
          %5084 = vmatpush1.bf16.msra.mxu0 0
          %5085 = vmatprep.subr.bf16.mxu0 0
          %5086 = vmatpush1.bf16.msra.mxu0 0
          %5087 = vmatprep.subr.bf16.mxu0 0
          %5088 = vmatpush1.bf16.msra.mxu0 0
          %5089 = vmatprep.mubr.bf16.mxu0 0
          %5090 = vmatmul.mubr.bf16.gmra.mrb[0].mxu0 %v5055
          %v5091 = vpop.f32.mrb[0].mxu0
          %v5092 = vadd.f32 0.0, %v5091
          %v5093 = vpop.f32.mrb[0].mxu0
          %v5094 = vpop.f32.mrb[0].mxu0
          %v5095 = vpop.f32.mrb[0].mxu0
          %5096 = vdwg.mxu0
          %v5097 = vadd.f32 %v5018, %v5092
          %v5098 = vld [vmem:[#allocation3 + $0x10] sm:$0x10]
          %v5099 = vld [vmem:[%s7 + $0xa0] sm:$0xf]
          %v5100 = vld [vmem:[%s7 + $0xa4] sm:$0xf]
          %v5101 = vld [vmem:[%s7 + $0xa8] sm:$0xf]
          %v5102 = vld [vmem:[%s7 + $0xac] sm:$0xf]
          %v5103 = vld [vmem:[%s7 + $0xb0] sm:$0xf]
          %v5104 = vld [vmem:[%s7 + $0xb4] sm:$0xf]
          %v5105 = vld [vmem:[%s7 + $0xb8] sm:$0xf]
          %v5106 = vld [vmem:[%s7 + $0xbc] sm:$0xf]
          %v5108 = vrot.slane %v5098, 4
          %v5117 = vunpack.c.l.b16 %v5099
          %v5118 = vunpack.c.l.b16 %v5100
          %v5119 = vunpack.c.l.b16 %v5101
          %v5120 = vunpack.c.l.b16 %v5102
          %v5121 = vunpack.c.l.b16 %v5103
          %v5122 = vunpack.c.l.b16 %v5104
          %v5123 = vunpack.c.l.b16 %v5105
          %v5124 = vunpack.c.l.b16 %v5106
          %v5125 = vpack.c.b16 %v5118, %v5117
          %v5126 = vpack.c.b16 %v5120, %v5119
          %v5127 = vpack.c.b16 %v5122, %v5121
          %v5128 = vpack.c.b16 %v5124, %v5123
          %v5134 = vsel %vm2015, %v5108, 0
          %5136 = vmatprep.subr.bf16.mxu0 0
          %5137 = vmatpush1.bf16.msra.mxu0 %v5125
          %5138 = vmatprep.subr.bf16.mxu0 0
          %5139 = vmatpush1.bf16.msra.mxu0 %v5126
          %5140 = vmatprep.subr.bf16.mxu0 0
          %5141 = vmatpush1.bf16.msra.mxu0 %v5127
          %5142 = vmatprep.subr.bf16.mxu0 0
          %5143 = vmatpush1.bf16.msra.mxu0 %v5128
          %5144 = vmatprep.subr.bf16.mxu0 0
          %5145 = vmatpush1.bf16.msra.mxu0 0
          %5146 = vmatprep.subr.bf16.mxu0 0
          %5147 = vmatpush1.bf16.msra.mxu0 0
          %5148 = vmatprep.subr.bf16.mxu0 0
          %5149 = vmatpush1.bf16.msra.mxu0 0
          %5150 = vmatprep.subr.bf16.mxu0 0
          %5151 = vmatpush1.bf16.msra.mxu0 0
          %5152 = vmatprep.subr.bf16.mxu0 0
          %5153 = vmatpush1.bf16.msra.mxu0 0
          %5154 = vmatprep.subr.bf16.mxu0 0
          %5155 = vmatpush1.bf16.msra.mxu0 0
          %5156 = vmatprep.subr.bf16.mxu0 0
          %5157 = vmatpush1.bf16.msra.mxu0 0
          %5158 = vmatprep.subr.bf16.mxu0 0
          %5159 = vmatpush1.bf16.msra.mxu0 0
          %5160 = vmatprep.subr.bf16.mxu0 0
          %5161 = vmatpush1.bf16.msra.mxu0 0
          %5162 = vmatprep.subr.bf16.mxu0 0
          %5163 = vmatpush1.bf16.msra.mxu0 0
          %5164 = vmatprep.subr.bf16.mxu0 0
          %5165 = vmatpush1.bf16.msra.mxu0 0
          %5166 = vmatprep.subr.bf16.mxu0 0
          %5167 = vmatpush1.bf16.msra.mxu0 0
          %5168 = vmatprep.mubr.bf16.mxu0 0
          %5169 = vmatmul.mubr.bf16.gmra.mrb[0].mxu0 %v5134
          %v5170 = vpop.f32.mrb[0].mxu0
          %v5171 = vadd.f32 0.0, %v5170
          %v5172 = vpop.f32.mrb[0].mxu0
          %v5173 = vpop.f32.mrb[0].mxu0
          %v5174 = vpop.f32.mrb[0].mxu0
          %5175 = vdwg.mxu0
          %v5176 = vadd.f32 %v5097, %v5171
          %v5177 = vld [vmem:[#allocation3 + $0x20] sm:$0x1]
          %v5178 = vld [vmem:[%s7 + $0xc0] sm:$0xf]
          %v5179 = vld [vmem:[%s7 + $0xc4] sm:$0xf]
          %v5180 = vld [vmem:[%s7 + $0xc8] sm:$0xf]
          %v5181 = vld [vmem:[%s7 + $0xcc] sm:$0xf]
          %v5182 = vld [vmem:[%s7 + $0xd0] sm:$0xf]
          %v5183 = vld [vmem:[%s7 + $0xd4] sm:$0xf]
          %v5184 = vld [vmem:[%s7 + $0xd8] sm:$0xf]
          %v5185 = vld [vmem:[%s7 + $0xdc] sm:$0xf]
          %v5194 = vunpack.c.l.b16 %v5178
          %v5195 = vunpack.c.l.b16 %v5179
          %v5196 = vunpack.c.l.b16 %v5180
          %v5197 = vunpack.c.l.b16 %v5181
          %v5198 = vunpack.c.l.b16 %v5182
          %v5199 = vunpack.c.l.b16 %v5183
          %v5200 = vunpack.c.l.b16 %v5184
          %v5201 = vunpack.c.l.b16 %v5185
          %v5202 = vpack.c.b16 %v5195, %v5194
          %v5203 = vpack.c.b16 %v5197, %v5196
          %v5204 = vpack.c.b16 %v5199, %v5198
          %v5205 = vpack.c.b16 %v5201, %v5200
          %v5211 = vsel %vm2015, %v5177, 0
          %5213 = vmatprep.subr.bf16.mxu0 0
          %5214 = vmatpush1.bf16.msra.mxu0 %v5202
          %5215 = vmatprep.subr.bf16.mxu0 0
          %5216 = vmatpush1.bf16.msra.mxu0 %v5203
          %5217 = vmatprep.subr.bf16.mxu0 0
          %5218 = vmatpush1.bf16.msra.mxu0 %v5204
          %5219 = vmatprep.subr.bf16.mxu0 0
          %5220 = vmatpush1.bf16.msra.mxu0 %v5205
          %5221 = vmatprep.subr.bf16.mxu0 0
          %5222 = vmatpush1.bf16.msra.mxu0 0
          %5223 = vmatprep.subr.bf16.mxu0 0
          %5224 = vmatpush1.bf16.msra.mxu0 0
          %5225 = vmatprep.subr.bf16.mxu0 0
          %5226 = vmatpush1.bf16.msra.mxu0 0
          %5227 = vmatprep.subr.bf16.mxu0 0
          %5228 = vmatpush1.bf16.msra.mxu0 0
          %5229 = vmatprep.subr.bf16.mxu0 0
          %5230 = vmatpush1.bf16.msra.mxu0 0
          %5231 = vmatprep.subr.bf16.mxu0 0
          %5232 = vmatpush1.bf16.msra.mxu0 0
          %5233 = vmatprep.subr.bf16.mxu0 0
          %5234 = vmatpush1.bf16.msra.mxu0 0
          %5235 = vmatprep.subr.bf16.mxu0 0
          %5236 = vmatpush1.bf16.msra.mxu0 0
          %5237 = vmatprep.subr.bf16.mxu0 0
          %5238 = vmatpush1.bf16.msra.mxu0 0
          %5239 = vmatprep.subr.bf16.mxu0 0
          %5240 = vmatpush1.bf16.msra.mxu0 0
          %5241 = vmatprep.subr.bf16.mxu0 0
          %5242 = vmatpush1.bf16.msra.mxu0 0
          %5243 = vmatprep.subr.bf16.mxu0 0
          %5244 = vmatpush1.bf16.msra.mxu0 0
          %5245 = vmatprep.mubr.bf16.mxu0 0
          %5246 = vmatmul.mubr.bf16.gmra.mrb[0].mxu0 %v5211
          %v5247 = vpop.f32.mrb[0].mxu0
          %v5248 = vadd.f32 0.0, %v5247
          %v5249 = vpop.f32.mrb[0].mxu0
          %v5250 = vpop.f32.mrb[0].mxu0
          %v5251 = vpop.f32.mrb[0].mxu0
          %5252 = vdwg.mxu0
          %v5253 = vadd.f32 %v5176, %v5248
          %v5254 = vld [vmem:[#allocation3 + $0x20] sm:$0x4]
          %v5255 = vld [vmem:[%s7 + $0xe0] sm:$0xf]
          %v5256 = vld [vmem:[%s7 + $0xe4] sm:$0xf]
          %v5257 = vld [vmem:[%s7 + $0xe8] sm:$0xf]
          %v5258 = vld [vmem:[%s7 + $0xec] sm:$0xf]
          %v5259 = vld [vmem:[%s7 + $0xf0] sm:$0xf]
          %v5260 = vld [vmem:[%s7 + $0xf4] sm:$0xf]
          %v5261 = vld [vmem:[%s7 + $0xf8] sm:$0xf]
          %v5262 = vld [vmem:[%s7 + $0xfc] sm:$0xf]
          %v5264 = vrot.slane %v5254, 2
          %v5273 = vunpack.c.l.b16 %v5255
          %v5274 = vunpack.c.l.b16 %v5256
          %v5275 = vunpack.c.l.b16 %v5257
          %v5276 = vunpack.c.l.b16 %v5258
          %v5277 = vunpack.c.l.b16 %v5259
          %v5278 = vunpack.c.l.b16 %v5260
          %v5279 = vunpack.c.l.b16 %v5261
          %v5280 = vunpack.c.l.b16 %v5262
          %v5281 = vpack.c.b16 %v5274, %v5273
          %v5282 = vpack.c.b16 %v5276, %v5275
          %v5283 = vpack.c.b16 %v5278, %v5277
          %v5284 = vpack.c.b16 %v5280, %v5279
          %v5290 = vsel %vm2015, %v5264, 0
          %5292 = vmatprep.subr.bf16.mxu0 0
          %5293 = vmatpush1.bf16.msra.mxu0 %v5281
          %5294 = vmatprep.subr.bf16.mxu0 0
          %5295 = vmatpush1.bf16.msra.mxu0 %v5282
          %5296 = vmatprep.subr.bf16.mxu0 0
          %5297 = vmatpush1.bf16.msra.mxu0 %v5283
          %5298 = vmatprep.subr.bf16.mxu0 0
          %5299 = vmatpush1.bf16.msra.mxu0 %v5284
          %5300 = vmatprep.subr.bf16.mxu0 0
          %5301 = vmatpush1.bf16.msra.mxu0 0
          %5302 = vmatprep.subr.bf16.mxu0 0
          %5303 = vmatpush1.bf16.msra.mxu0 0
          %5304 = vmatprep.subr.bf16.mxu0 0
          %5305 = vmatpush1.bf16.msra.mxu0 0
          %5306 = vmatprep.subr.bf16.mxu0 0
          %5307 = vmatpush1.bf16.msra.mxu0 0
          %5308 = vmatprep.subr.bf16.mxu0 0
          %5309 = vmatpush1.bf16.msra.mxu0 0
          %5310 = vmatprep.subr.bf16.mxu0 0
          %5311 = vmatpush1.bf16.msra.mxu0 0
          %5312 = vmatprep.subr.bf16.mxu0 0
          %5313 = vmatpush1.bf16.msra.mxu0 0
          %5314 = vmatprep.subr.bf16.mxu0 0
          %5315 = vmatpush1.bf16.msra.mxu0 0
          %5316 = vmatprep.subr.bf16.mxu0 0
          %5317 = vmatpush1.bf16.msra.mxu0 0
          %5318 = vmatprep.subr.bf16.mxu0 0
          %5319 = vmatpush1.bf16.msra.mxu0 0
          %5320 = vmatprep.subr.bf16.mxu0 0
          %5321 = vmatpush1.bf16.msra.mxu0 0
          %5322 = vmatprep.subr.bf16.mxu0 0
          %5323 = vmatpush1.bf16.msra.mxu0 0
          %5324 = vmatprep.mubr.bf16.mxu0 0
          %5325 = vmatmul.mubr.bf16.gmra.mrb[0].mxu0 %v5290
          %v5326 = vpop.f32.mrb[0].mxu0
          %v5327 = vadd.f32 0.0, %v5326
          %v5328 = vpop.f32.mrb[0].mxu0
          %v5329 = vpop.f32.mrb[0].mxu0
          %v5330 = vpop.f32.mrb[0].mxu0
          %5331 = vdwg.mxu0
          %v5332 = vadd.f32 %v5253, %v5327
          %v5333 = vld [vmem:[#allocation3 + $0x20] sm:$0x10]
          %v5334 = vld [vmem:[%s7 + $0x100] sm:$0xf]
          %v5335 = vld [vmem:[%s7 + $0x104] sm:$0xf]
          %v5336 = vld [vmem:[%s7 + $0x108] sm:$0xf]
          %v5337 = vld [vmem:[%s7 + $0x10c] sm:$0xf]
          %v5338 = vld [vmem:[%s7 + $0x110] sm:$0xf]
          %v5339 = vld [vmem:[%s7 + $0x114] sm:$0xf]
          %v5340 = vld [vmem:[%s7 + $0x118] sm:$0xf]
          %v5341 = vld [vmem:[%s7 + $0x11c] sm:$0xf]
          %v5343 = vrot.slane %v5333, 4
          %v5352 = vunpack.c.l.b16 %v5334
          %v5353 = vunpack.c.l.b16 %v5335
          %v5354 = vunpack.c.l.b16 %v5336
          %v5355 = vunpack.c.l.b16 %v5337
          %v5356 = vunpack.c.l.b16 %v5338
          %v5357 = vunpack.c.l.b16 %v5339
          %v5358 = vunpack.c.l.b16 %v5340
          %v5359 = vunpack.c.l.b16 %v5341
          %v5360 = vpack.c.b16 %v5353, %v5352
          %v5361 = vpack.c.b16 %v5355, %v5354
          %v5362 = vpack.c.b16 %v5357, %v5356
          %v5363 = vpack.c.b16 %v5359, %v5358
          %v5369 = vsel %vm2015, %v5343, 0
          %5371 = vmatprep.subr.bf16.mxu0 0
          %5372 = vmatpush1.bf16.msra.mxu0 %v5360
          %5373 = vmatprep.subr.bf16.mxu0 0
          %5374 = vmatpush1.bf16.msra.mxu0 %v5361
          %5375 = vmatprep.subr.bf16.mxu0 0
          %5376 = vmatpush1.bf16.msra.mxu0 %v5362
          %5377 = vmatprep.subr.bf16.mxu0 0
          %5378 = vmatpush1.bf16.msra.mxu0 %v5363
          %5379 = vmatprep.subr.bf16.mxu0 0
          %5380 = vmatpush1.bf16.msra.mxu0 0
          %5381 = vmatprep.subr.bf16.mxu0 0
          %5382 = vmatpush1.bf16.msra.mxu0 0
          %5383 = vmatprep.subr.bf16.mxu0 0
          %5384 = vmatpush1.bf16.msra.mxu0 0
          %5385 = vmatprep.subr.bf16.mxu0 0
          %5386 = vmatpush1.bf16.msra.mxu0 0
          %5387 = vmatprep.subr.bf16.mxu0 0
          %5388 = vmatpush1.bf16.msra.mxu0 0
          %5389 = vmatprep.subr.bf16.mxu0 0
          %5390 = vmatpush1.bf16.msra.mxu0 0
          %5391 = vmatprep.subr.bf16.mxu0 0
          %5392 = vmatpush1.bf16.msra.mxu0 0
          %5393 = vmatprep.subr.bf16.mxu0 0
          %5394 = vmatpush1.bf16.msra.mxu0 0
          %5395 = vmatprep.subr.bf16.mxu0 0
          %5396 = vmatpush1.bf16.msra.mxu0 0
          %5397 = vmatprep.subr.bf16.mxu0 0
          %5398 = vmatpush1.bf16.msra.mxu0 0
          %5399 = vmatprep.subr.bf16.mxu0 0
          %5400 = vmatpush1.bf16.msra.mxu0 0
          %5401 = vmatprep.subr.bf16.mxu0 0
          %5402 = vmatpush1.bf16.msra.mxu0 0
          %5403 = vmatprep.mubr.bf16.mxu0 0
          %5404 = vmatmul.mubr.bf16.gmra.mrb[0].mxu0 %v5369
          %v5405 = vpop.f32.mrb[0].mxu0
          %v5406 = vadd.f32 0.0, %v5405
          %v5407 = vpop.f32.mrb[0].mxu0
          %v5408 = vpop.f32.mrb[0].mxu0
          %v5409 = vpop.f32.mrb[0].mxu0
          %5410 = vdwg.mxu0
          %v5411 = vadd.f32 %v5332, %v5406
          %v5412 = vld [vmem:[%s8] sm:$0x1]
          %v5414 = vlaneseq
          %v5415 = vshrl.u32 %v5414, 7
          %v5416 = vsub.s32 0, %v5415
          %v5417 = vrot.slane %v5412, %v5416
          %v5419 = vadd.f32 %v5411, %v5417
          %v5420 = vmax.f32 %v5419, 0.0
          %v5421 = vld [vmem:[%s9] sm:$0x3]
          %v5422 = vld [vmem:[%s10] sm:$0xff]
          %v5423 = vld [vmem:[%s11] sm:$0x1]
          %v5425 = vlaneseq
          %v5426 = vshrl.u32 %v5425, 7
          %v5427 = vsub.s32 0, %v5426
          %v5428 = vrot.slane %v5423, %v5427
          %vm5430 = vcmask 64512
          %v5432 = vsel %vm5430, %v5421, 0
          %5434 = vmatprep.subr.mxu0 0.0
          %5435 = vmatpush1.msra.mxu0 %v5422
          %5436 = vmatprep.subr.mxu0 0.0
          %5437 = vmatpush1.msra.mxu0 0.0
          %5438 = vmatprep.subr.mxu0 0.0
          %5439 = vmatpush1.msra.mxu0 0.0
          %5440 = vmatprep.subr.mxu0 0.0
          %5441 = vmatpush1.msra.mxu0 0.0
          %5442 = vmatprep.subr.mxu0 0.0
          %5443 = vmatpush1.msra.mxu0 0.0
          %5444 = vmatprep.subr.mxu0 0.0
          %5445 = vmatpush1.msra.mxu0 0.0
          %5446 = vmatprep.subr.mxu0 0.0
          %5447 = vmatpush1.msra.mxu0 0.0
          %5448 = vmatprep.subr.mxu0 0.0
          %5449 = vmatpush1.msra.mxu0 0.0
          %5450 = vmatprep.subr.mxu0 0.0
          %5451 = vmatpush1.msra.mxu0 0.0
          %5452 = vmatprep.subr.mxu0 0.0
          %5453 = vmatpush1.msra.mxu0 0.0
          %5454 = vmatprep.subr.mxu0 0.0
          %5455 = vmatpush1.msra.mxu0 0.0
          %5456 = vmatprep.subr.mxu0 0.0
          %5457 = vmatpush1.msra.mxu0 0.0
          %5458 = vmatprep.subr.mxu0 0.0
          %5459 = vmatpush1.msra.mxu0 0.0
          %5460 = vmatprep.subr.mxu0 0.0
          %5461 = vmatpush1.msra.mxu0 0.0
          %5462 = vmatprep.subr.mxu0 0.0
          %5463 = vmatpush1.msra.mxu0 0.0
          %5464 = vmatprep.subr.mxu0 0.0
          %5465 = vmatpush1.msra.mxu0 0.0
          %5466 = vmatprep.subr.mxu0 0.0
          %5467 = vmatpush1.msra.mxu0 0.0
          %5468 = vmatprep.subr.mxu0 0.0
          %5469 = vmatpush1.msra.mxu0 0.0
          %5470 = vmatprep.subr.mxu0 0.0
          %5471 = vmatpush1.msra.mxu0 0.0
          %5472 = vmatprep.subr.mxu0 0.0
          %5473 = vmatpush1.msra.mxu0 0.0
          %5474 = vmatprep.subr.mxu0 0.0
          %5475 = vmatpush1.msra.mxu0 0.0
          %5476 = vmatprep.subr.mxu0 0.0
          %5477 = vmatpush1.msra.mxu0 0.0
          %5478 = vmatprep.subr.mxu0 0.0
          %5479 = vmatpush1.msra.mxu0 0.0
          %5480 = vmatprep.subr.mxu0 0.0
          %5481 = vmatpush1.msra.mxu0 0.0
          %5482 = vmatprep.subr.mxu0 0.0
          %5483 = vmatpush1.msra.mxu0 0.0
          %5484 = vmatprep.subr.mxu0 0.0
          %5485 = vmatpush1.msra.mxu0 0.0
          %5486 = vmatprep.subr.mxu0 0.0
          %5487 = vmatpush1.msra.mxu0 0.0
          %5488 = vmatprep.subr.mxu0 0.0
          %5489 = vmatpush1.msra.mxu0 0.0
          %5490 = vmatprep.subr.mxu0 0.0
          %5491 = vmatpush1.msra.mxu0 0.0
          %5492 = vmatprep.subr.mxu0 0.0
          %5493 = vmatpush1.msra.mxu0 0.0
          %5494 = vmatprep.subr.mxu0 0.0
          %5495 = vmatpush1.msra.mxu0 0.0
          %5496 = vmatprep.subr.mxu0 0.0
          %5497 = vmatpush1.msra.mxu0 0.0
          %5498 = vmatprep.mubr.f32.mxu0 0.0
          %5499 = vmatmul.mubr.f32.gmra.mrb[0].mxu0 %v5432
          %v5500 = vpop.f32.mrb[0].mxu0
          %v5501 = vadd.f32 %v5428, %v5500
          %v5502 = vpop.f32.mrb[0].mxu0
          %5503 = vdwg.mxu0
          %v5504 = vxor.u32 %v5501, 2147483648
          %v5505 = vmul.f32 %v5504, 1.442695
          %v5506 = vpow.pop %v5505
          %v5507 = vadd.f32 %v5506, 1.0
          %v5508 = vrcp.pop %v5507
          %v5509 = vmul.f32 1.0, %v5508
          %v5510 = vadd.f32 %v5420, %v5509
          %v5511 = vld [vmem:[%s12] sm:$0xff]
          %v5512 = vld [vmem:[%s12 + $0x8] sm:$0xff]
          %v5513 = vld [vmem:[%s12 + $0x10] sm:$0xff]
          %v5514 = vld [vmem:[%s12 + $0x18] sm:$0xff]
          %v5515 = vld [vmem:[%s12 + $0x20] sm:$0xff]
          %v5516 = vld [vmem:[%s12 + $0x28] sm:$0xff]
          %v5517 = vld [vmem:[%s12 + $0x30] sm:$0xff]
          %v5518 = vld [vmem:[%s12 + $0x38] sm:$0xff]
          %v5519 = vld [vmem:[%s13] sm:$0x1]
          %v5521 = vlaneseq
          %v5522 = vshrl.u32 %v5521, 7
          %v5523 = vsub.s32 0, %v5522
          %v5524 = vrot.slane %v5519, %v5523
          %v5527 = vsel %vm2015, %v5510, 0
          %5529 = vmatprep.subr.mxu0 0.0
          %5530 = vmatpush1.msra.mxu0 %v5511
          %5531 = vmatprep.subr.mxu0 0.0
          %5532 = vmatpush1.msra.mxu0 %v5512
          %5533 = vmatprep.subr.mxu0 0.0
          %5534 = vmatpush1.msra.mxu0 %v5513
          %5535 = vmatprep.subr.mxu0 0.0
          %5536 = vmatpush1.msra.mxu0 %v5514
          %5537 = vmatprep.subr.mxu0 0.0
          %5538 = vmatpush1.msra.mxu0 %v5515
          %5539 = vmatprep.subr.mxu0 0.0
          %5540 = vmatpush1.msra.mxu0 %v5516
          %5541 = vmatprep.subr.mxu0 0.0
          %5542 = vmatpush1.msra.mxu0 %v5517
          %5543 = vmatprep.subr.mxu0 0.0
          %5544 = vmatpush1.msra.mxu0 %v5518
          %5545 = vmatprep.subr.mxu0 0.0
          %5546 = vmatpush1.msra.mxu0 0.0
          %5547 = vmatprep.subr.mxu0 0.0
          %5548 = vmatpush1.msra.mxu0 0.0
          %5549 = vmatprep.subr.mxu0 0.0
          %5550 = vmatpush1.msra.mxu0 0.0
          %5551 = vmatprep.subr.mxu0 0.0
          %5552 = vmatpush1.msra.mxu0 0.0
          %5553 = vmatprep.subr.mxu0 0.0
          %5554 = vmatpush1.msra.mxu0 0.0
          %5555 = vmatprep.subr.mxu0 0.0
          %5556 = vmatpush1.msra.mxu0 0.0
          %5557 = vmatprep.subr.mxu0 0.0
          %5558 = vmatpush1.msra.mxu0 0.0
          %5559 = vmatprep.subr.mxu0 0.0
          %5560 = vmatpush1.msra.mxu0 0.0
          %5561 = vmatprep.subr.mxu0 0.0
          %5562 = vmatpush1.msra.mxu0 0.0
          %5563 = vmatprep.subr.mxu0 0.0
          %5564 = vmatpush1.msra.mxu0 0.0
          %5565 = vmatprep.subr.mxu0 0.0
          %5566 = vmatpush1.msra.mxu0 0.0
          %5567 = vmatprep.subr.mxu0 0.0
          %5568 = vmatpush1.msra.mxu0 0.0
          %5569 = vmatprep.subr.mxu0 0.0
          %5570 = vmatpush1.msra.mxu0 0.0
          %5571 = vmatprep.subr.mxu0 0.0
          %5572 = vmatpush1.msra.mxu0 0.0
          %5573 = vmatprep.subr.mxu0 0.0
          %5574 = vmatpush1.msra.mxu0 0.0
          %5575 = vmatprep.subr.mxu0 0.0
          %5576 = vmatpush1.msra.mxu0 0.0
          %5577 = vmatprep.subr.mxu0 0.0
          %5578 = vmatpush1.msra.mxu0 0.0
          %5579 = vmatprep.subr.mxu0 0.0
          %5580 = vmatpush1.msra.mxu0 0.0
          %5581 = vmatprep.subr.mxu0 0.0
          %5582 = vmatpush1.msra.mxu0 0.0
          %5583 = vmatprep.subr.mxu0 0.0
          %5584 = vmatpush1.msra.mxu0 0.0
          %5585 = vmatprep.subr.mxu0 0.0
          %5586 = vmatpush1.msra.mxu0 0.0
          %5587 = vmatprep.subr.mxu0 0.0
          %5588 = vmatpush1.msra.mxu0 0.0
          %5589 = vmatprep.subr.mxu0 0.0
          %5590 = vmatpush1.msra.mxu0 0.0
          %5591 = vmatprep.subr.mxu0 0.0
          %5592 = vmatpush1.msra.mxu0 0.0
          %5593 = vmatprep.mubr.f32.mxu0 0.0
          %5594 = vmatmul.mubr.f32.gmra.mrb[0].mxu0 %v5527
          %v5595 = vpop.f32.mrb[0].mxu0
          %v5596 = vadd.f32 %v5524, %v5595
          %v5597 = vpop.f32.mrb[0].mxu0
          %5598 = vdwg.mxu0
          %v5599 = vmax.f32 %v5596, 0.0
          %v5600 = vld [vmem:[%s14] sm:$0xff]
          %v5601 = vld [vmem:[%s14 + $0x8] sm:$0xff]
          %v5602 = vld [vmem:[%s14 + $0x10] sm:$0xff]
          %v5603 = vld [vmem:[%s14 + $0x18] sm:$0xff]
          %v5604 = vld [vmem:[%s15] sm:$0x1]
          %v5606 = vlaneseq
          %v5607 = vshrl.u32 %v5606, 7
          %v5608 = vsub.s32 0, %v5607
          %v5609 = vrot.slane %v5604, %v5608
          %vm5611 = vcmask 261120
          %v5613 = vsel %vm5611, %v5599, 0
          %5615 = vmatprep.subr.mxu0 0.0
          %5616 = vmatpush1.msra.mxu0 %v5600
          %5617 = vmatprep.subr.mxu0 0.0
          %5618 = vmatpush1.msra.mxu0 %v5601
          %5619 = vmatprep.subr.mxu0 0.0
          %5620 = vmatpush1.msra.mxu0 %v5602
          %5621 = vmatprep.subr.mxu0 0.0
          %5622 = vmatpush1.msra.mxu0 %v5603
          %5623 = vmatprep.subr.mxu0 0.0
          %5624 = vmatpush1.msra.mxu0 0.0
          %5625 = vmatprep.subr.mxu0 0.0
          %5626 = vmatpush1.msra.mxu0 0.0
          %5627 = vmatprep.subr.mxu0 0.0
          %5628 = vmatpush1.msra.mxu0 0.0
          %5629 = vmatprep.subr.mxu0 0.0
          %5630 = vmatpush1.msra.mxu0 0.0
          %5631 = vmatprep.subr.mxu0 0.0
          %5632 = vmatpush1.msra.mxu0 0.0
          %5633 = vmatprep.subr.mxu0 0.0
          %5634 = vmatpush1.msra.mxu0 0.0
          %5635 = vmatprep.subr.mxu0 0.0
          %5636 = vmatpush1.msra.mxu0 0.0
          %5637 = vmatprep.subr.mxu0 0.0
          %5638 = vmatpush1.msra.mxu0 0.0
          %5639 = vmatprep.subr.mxu0 0.0
          %5640 = vmatpush1.msra.mxu0 0.0
          %5641 = vmatprep.subr.mxu0 0.0
          %5642 = vmatpush1.msra.mxu0 0.0
          %5643 = vmatprep.subr.mxu0 0.0
          %5644 = vmatpush1.msra.mxu0 0.0
          %5645 = vmatprep.subr.mxu0 0.0
          %5646 = vmatpush1.msra.mxu0 0.0
          %5647 = vmatprep.subr.mxu0 0.0
          %5648 = vmatpush1.msra.mxu0 0.0
          %5649 = vmatprep.subr.mxu0 0.0
          %5650 = vmatpush1.msra.mxu0 0.0
          %5651 = vmatprep.subr.mxu0 0.0
          %5652 = vmatpush1.msra.mxu0 0.0
          %5653 = vmatprep.subr.mxu0 0.0
          %5654 = vmatpush1.msra.mxu0 0.0
          %5655 = vmatprep.subr.mxu0 0.0
          %5656 = vmatpush1.msra.mxu0 0.0
          %5657 = vmatprep.subr.mxu0 0.0
          %5658 = vmatpush1.msra.mxu0 0.0
          %5659 = vmatprep.subr.mxu0 0.0
          %5660 = vmatpush1.msra.mxu0 0.0
          %5661 = vmatprep.subr.mxu0 0.0
          %5662 = vmatpush1.msra.mxu0 0.0
          %5663 = vmatprep.subr.mxu0 0.0
          %5664 = vmatpush1.msra.mxu0 0.0
          %5665 = vmatprep.subr.mxu0 0.0
          %5666 = vmatpush1.msra.mxu0 0.0
          %5667 = vmatprep.subr.mxu0 0.0
          %5668 = vmatpush1.msra.mxu0 0.0
          %5669 = vmatprep.subr.mxu0 0.0
          %5670 = vmatpush1.msra.mxu0 0.0
          %5671 = vmatprep.subr.mxu0 0.0
          %5672 = vmatpush1.msra.mxu0 0.0
          %5673 = vmatprep.subr.mxu0 0.0
          %5674 = vmatpush1.msra.mxu0 0.0
          %5675 = vmatprep.subr.mxu0 0.0
          %5676 = vmatpush1.msra.mxu0 0.0
          %5677 = vmatprep.subr.mxu0 0.0
          %5678 = vmatpush1.msra.mxu0 0.0
          %5679 = vmatprep.mubr.f32.mxu0 0.0
          %5680 = vmatmul.mubr.f32.gmra.mrb[0].mxu0 %v5613
          %v5681 = vpop.f32.mrb[0].mxu0
          %v5682 = vadd.f32 %v5609, %v5681
          %v5683 = vpop.f32.mrb[0].mxu0
          %5684 = vdwg.mxu0
          %vm5685 = vcmask 33792
          %5686 = vst.msk [vmem:[#allocation5] sm:$0x3] %vm5685, %v5682
        $region115: #{pacman_forward.1} parent=102 // pred_fallthru
          _
        // Predicated region
        $region116: #{pacman_forward.1} parent=102 // pred_check
          %p5687 = pneg %p387
        $region117: #{pacman_forward.1} parent=102 // pred_check_branch
          %5689 = sbr.rel (%p5687) target = $region119
        $region118: #{pacman_forward.1} parent=102 // pred_region
          %s5691 = ssub.s32 32, 32
          %5692 = vsyncadd [#allocation6], %s5691
          %s5694 = sshll.u32 [#allocation5], 4
          %s5695 = int_to_ptr.vmem [resolvable:$true] %s5694
          %5697 = dma.vmem_to_hbm [thread:$0]  %s5695, 32, %s16, [#allocation6]
        $region119: #{pacman_forward.1} parent=102 // pred_fallthru
          _
        // Predicated region
        $region120: #{pacman_forward.1} parent=102 // pred_check
          %p5698 = pneg %p387
        $region121: #{pacman_forward.1} parent=102 // pred_check_branch
          %5700 = sbr.rel (%p5698) target = $region123
        $region122: #{pacman_forward.1} parent=102 // pred_region
          %5701 = dma.done [#allocation6], 32
        $region123: #{pacman_forward.1} parent=102 // pred_fallthru
          _
      $region103: #{pacman_forward.1} parent=5 // pred_fallthru
        _
      %p5702 = scmp.le.s32.totalorder 2, %s23
      // Predicated region
      $region124: #{pacman_forward.1} parent=5 // pred_check
        %p5703 = pneg %p5702
      $region125: #{pacman_forward.1} parent=5 // pred_check_branch
        %5705 = sbr.rel (%p5703) target = $region127
      $region126: #{pacman_forward.1} parent=5 // pred_region
        %s5706 = ssub.s32 %s23, 2
      $region127: #{pacman_forward.1} parent=5 // pred_fallthru
        _
    $region6: #{pacman_forward.1} parent=1 // loop_footer
      %s27 = sadd.s32 1, %s23
    $region7: #{pacman_forward.1} parent=1 // loop_footer_branch
      %22 = sbr.rel target = $region3
    $region8: #{pacman_forward.1} parent=1 // loop_exit
      _
    %5707 = vsyncpa [#allocation6], 1
    %s5708 = scalar_lea.sflag [#allocation6], 1
    %5709 = vsyncpa %s5708, 1

</llo_original>
